<compile_context>
chip_gen: v7x
topology: tpu7x:2x2x1
jax: 0.10.0
libtpu: 0.0.40
codegen_flags: <defaults>
</compile_context>

<pallas_src>
import functools

import jax
import jax.numpy as jnp
from jax import lax
from jax.experimental import pallas as pl
from jax.experimental.pallas import tpu as pltpu

EPS = 1e-5


def fused_kernel(x_ref, res_ref, w1_ref, gb1_ref, w2_ref, gb2_ref, out_ref,
                 *, m_true):
    # Shapes (channel-major, pixel axis padded to a multiple of 128):
    #   x_ref:   (C1, Mp)  bf16  full input pixels (resident across grid)
    #   res_ref: (tc, Mp)  bf16  residual slice for this C2 tile
    #   w1_ref:  (tc, C1)  bf16  conv2d39 weight tile
    #   gb1_ref: (tc, 2)   f32   BN1 [gamma | beta] tile
    #   w2_ref:  (C1, tc)  bf16  conv2d40 weight tile
    #   gb2_ref: (C1, 2)   f32   BN2 [gamma | beta]
    #   out_ref: (C1, Mp)  f32   output; doubles as the conv2 accumulator
    k = pl.program_id(0)
    nk = pl.num_programs(0)
    m_pad = x_ref.shape[1]
    inv_m = 1.0 / m_true

    # Valid-pixel mask over the (padded) lane axis.
    mask = lax.broadcasted_iota(jnp.int32, (1, m_pad), 1) < m_true

    # conv2d39 (1x1) as a bf16 MXU matmul with f32 accumulation.  Padded lanes
    # of x are zero, so padded lanes of h are exactly zero.
    h = jnp.dot(w1_ref[...], x_ref[...],
                preferred_element_type=jnp.float32)            # (tc, Mp) f32

    # batchnorm2d39: training-mode batch stats (biased var), two-pass, f32.
    g1 = gb1_ref[:, 0:1]
    b1 = gb1_ref[:, 1:2]
    mean1 = jnp.sum(h, axis=1, keepdims=True) * inv_m          # pads contribute 0
    d1 = jnp.where(mask, h - mean1, 0.0)
    var1 = jnp.sum(d1 * d1, axis=1, keepdims=True) * inv_m
    scale1 = lax.rsqrt(var1 + EPS) * g1
    shift1 = b1 - mean1 * scale1
    hn = h * scale1 + shift1                                   # f32

    # residual add + ReLU in f32, zero the padded lanes (so they cannot leak
    # into the second matmul / BN2 stats), then bf16 for the second MXU pass.
    y = hn + res_ref[...].astype(jnp.float32)
    y = jnp.where(mask, jnp.maximum(y, 0.0), 0.0).astype(jnp.bfloat16)

    # conv2d40 (1x1): accumulate partial products over the C2 tiles directly
    # into the resident output block (no separate VMEM scratch).
    @pl.when(k == 0)
    def _():
        out_ref[...] = jnp.zeros_like(out_ref)

    out_ref[...] += jnp.dot(w2_ref[...], y,
                            preferred_element_type=jnp.float32)  # (C1, Mp)

    # batchnorm2d40 on the fully accumulated result (last step only).
    @pl.when(k == nk - 1)
    def _():
        z = out_ref[...]
        g2 = gb2_ref[:, 0:1]
        b2 = gb2_ref[:, 1:2]
        mean2 = jnp.sum(z, axis=1, keepdims=True) * inv_m
        d2 = jnp.where(mask, z - mean2, 0.0)
        var2 = jnp.sum(d2 * d2, axis=1, keepdims=True) * inv_m
        scale2 = lax.rsqrt(var2 + EPS) * g2
        shift2 = b2 - mean2 * scale2
        out_ref[...] = z * scale2 + shift2


def prepare_params(params):
    """One-time parameter prep (outside the traced forward): conv weights
    (Cout, Cin, 1, 1) -> (Cout, Cin) cast to bf16; BN gamma/beta merged into
    channel-major (C, 2) f32 columns."""
    c2, c1 = params["w1"].shape[:2]
    return {
        "w1": params["w1"].reshape(c2, c1).astype(jnp.bfloat16),    # (C2, C1)
        "w2": params["w2"].reshape(c1, c2).astype(jnp.bfloat16),    # (C1, C2)
        "gb1": jnp.stack([params["g1"], params["b1"]], axis=1).astype(jnp.float32),  # (C2, 2)
        "gb2": jnp.stack([params["g2"], params["b2"]], axis=1).astype(jnp.float32),  # (C1, 2)
    }


def _to_channel_major(x, m_pad):
    """(N, C, H, W) -> (C, m_pad), zero-padded pixels. Free reshape for N==1."""
    n, c, h, w = x.shape
    m = n * h * w
    if n == 1:
        xf = x.reshape(c, m)
    else:
        xf = jnp.transpose(x.reshape(n, c, h * w), (1, 0, 2)).reshape(c, m)
    if m_pad > m:
        xf = jnp.pad(xf, ((0, 0), (0, m_pad - m)))
    return xf


def _from_channel_major(x, n, h, w):
    """(C, N*H*W) -> (N, C, H, W). Free (pure reshape) for N == 1."""
    c = x.shape[0]
    if n == 1:
        return x.reshape(1, c, h, w)
    return jnp.transpose(x.reshape(c, n, h, w), (1, 0, 2, 3))


@functools.partial(jax.jit, static_argnames=("tile_c2",))
def forward(x126, x120, prep, tile_c2=512):
    """x126: (N, 256, H, W), x120: (N, 1024, H, W) -> (N, 256, H, W)."""
    n, c1, h, w = x126.shape
    c2 = x120.shape[1]
    m = n * h * w
    m_pad = max(128, -(-m // 128) * 128)      # lane-dense pixel axis (196->256)

    tc = tile_c2 if (c2 % tile_c2 == 0) else c2
    grid = (c2 // tc,)

    xf = _to_channel_major(x126, m_pad).astype(jnp.bfloat16)   # (C1, Mp)
    rf = _to_channel_major(x120, m_pad).astype(jnp.bfloat16)   # (C2, Mp)

    kernel = functools.partial(fused_kernel, m_true=m)

    out_flat = pl.pallas_call(
        kernel,
        out_shape=jax.ShapeDtypeStruct((c1, m_pad), jnp.float32),
        grid_spec=pltpu.PrefetchScalarGridSpec(
            num_scalar_prefetch=0,
            grid=grid,
            in_specs=[
                pl.BlockSpec((c1, m_pad), lambda k: (0, 0)),   # x   (resident)
                pl.BlockSpec((tc, m_pad), lambda k: (k, 0)),   # residual tile
                pl.BlockSpec((tc, c1), lambda k: (k, 0)),      # w1 tile
                pl.BlockSpec((tc, 2), lambda k: (k, 0)),       # BN1 gamma|beta tile
                pl.BlockSpec((c1, tc), lambda k: (0, k)),      # w2 tile
                pl.BlockSpec((c1, 2), lambda k: (0, 0)),       # BN2 gamma|beta
            ],
            out_specs=pl.BlockSpec((c1, m_pad), lambda k: (0, 0)),
        ),
        compiler_params=pltpu.CompilerParams(
            dimension_semantics=("arbitrary",)),   # C2 axis is a reduction
    )(xf, rf, prep["w1"], prep["gb1"], prep["w2"], prep["gb2"])

    return _from_channel_major(out_flat[:, :m], n, h, w)


def reference(x126, x120, params, use_bf16):
    """Pure-JAX reference of the same forward pass."""
    n, c1, h, w = x126.shape
    c2 = x120.shape[1]
    w1 = params["w1"].reshape(c2, c1)
    w2 = params["w2"].reshape(c1, c2)
    x = x126.reshape(n, c1, h * w).astype(jnp.float32)
    r = x120.reshape(n, c2, h * w).astype(jnp.float32)
    if use_bf16:
        # Match the kernel's precision: bf16 MXU operands / bf16 residual
        # stream, f32 accumulation and BN math.
        r = r.astype(jnp.bfloat16).astype(jnp.float32)

    def mm(a, b):
        if use_bf16:
            a = a.astype(jnp.bfloat16)
            b = b.astype(jnp.bfloat16)
        return jnp.einsum("oc,nci->noi", a, b,
                          preferred_element_type=jnp.float32)

    hh = mm(w1, x)
    m1 = hh.mean(axis=(0, 2), keepdims=True)
    v1 = ((hh - m1) ** 2).mean(axis=(0, 2), keepdims=True)
    hh = ((hh - m1) / jnp.sqrt(v1 + EPS) * params["g1"][None, :, None]
          + params["b1"][None, :, None])
    y = jnp.maximum(hh + r, 0.0)
    z = mm(w2, y)
    m2 = z.mean(axis=(0, 2), keepdims=True)
    v2 = ((z - m2) ** 2).mean(axis=(0, 2), keepdims=True)
    z = ((z - m2) / jnp.sqrt(v2 + EPS) * params["g2"][None, :, None]
         + params["b2"][None, :, None])
    return z.reshape(n, c1, h, w)


if __name__ == "__main__":
    key = jax.random.PRNGKey(0)
    k1, k2, k3, k4, k5, k6, k7, k8 = jax.random.split(key, 8)

    N, H, W = 1, 14, 14
    C1, C2 = 256, 1024   # conv2d39: C1 -> C2, conv2d40: C2 -> C1

    x126 = jax.random.normal(k1, (N, C1, H, W), dtype=jnp.float32)
    x120 = jax.random.normal(k2, (N, C2, H, W), dtype=jnp.float32)

    params = {
        "w1": jax.random.normal(k3, (C2, C1, 1, 1), dtype=jnp.float32) * 0.05,
        "w2": jax.random.normal(k4, (C1, C2, 1, 1), dtype=jnp.float32) * 0.05,
        "g1": 1.0 + 0.1 * jax.random.normal(k5, (C2,), dtype=jnp.float32),
        "b1": 0.1 * jax.random.normal(k6, (C2,), dtype=jnp.float32),
        "g2": 1.0 + 0.1 * jax.random.normal(k7, (C1,), dtype=jnp.float32),
        "b2": 0.1 * jax.random.normal(k8, (C1,), dtype=jnp.float32),
    }

    prep = prepare_params(params)            # one-time weight reshape + bf16 cast
    out = forward(x126, x120, prep)
    out = jax.block_until_ready(out)

    assert out.shape == (N, C1, H, W)

    # Precision-matched reference (bf16 matmul operands + bf16 residual,
    # f32 accumulate/BN).
    ref_bf16 = reference(x126, x120, params, use_bf16=True)
    assert jnp.allclose(out, ref_bf16, atol=2e-2, rtol=2e-2)

    # Full-f32 reference of the module semantics (looser tol: bf16 MXU inputs).
    ref_f32 = reference(x126, x120, params, use_bf16=False)
    assert jnp.allclose(out, ref_f32, atol=5e-2, rtol=5e-2)

    print("KERNEL_OK")
</pallas_src>

<mosaic_0001>
module attributes {stable_mosaic.version = 11 : i64} {
  func.func @fused_kernel(%arg0: i32, %arg1: memref<256x256xbf16, #tpu.memory_space<vmem>>, %arg2: memref<512x256xbf16, #tpu.memory_space<vmem>>, %arg3: memref<512x256xbf16, #tpu.memory_space<vmem>>, %arg4: memref<512x2xf32, #tpu.memory_space<vmem>>, %arg5: memref<256x512xbf16, #tpu.memory_space<vmem>>, %arg6: memref<256x2xf32, #tpu.memory_space<vmem>>, %arg7: memref<256x256xf32, #tpu.memory_space<vmem>>) attributes {dimension_semantics = [#tpu.dimension_semantics<arbitrary>], iteration_bounds = array<i64: 2>, scalar_prefetch = 0 : i64, scratch_operands = 0 : i64, tpu.core_type = #tpu.core_type<tc>, window_params = [{pipeline_mode = #tpu.pipeline_mode<synchronous>, transform_indices = @transform_0, window_bounds = array<i64: 256, 256>}, {transform_indices = @transform_1, window_bounds = array<i64: 512, 256>}, {transform_indices = @transform_2, window_bounds = array<i64: 512, 256>}, {transform_indices = @transform_3, window_bounds = array<i64: 512, 2>}, {transform_indices = @transform_4, window_bounds = array<i64: 256, 512>}, {pipeline_mode = #tpu.pipeline_mode<synchronous>, transform_indices = @transform_5, window_bounds = array<i64: 256, 2>}, {pipeline_mode = #tpu.pipeline_mode<synchronous>, transform_indices = @transform_6, window_bounds = array<i64: 256, 256>}]} {
    %0 = tpu.iota {dimensions = array<i32: 1>} : vector<1x256xi32>
    %c196_i32 = arith.constant 196 : i32
    %1 = vector.broadcast %c196_i32 : i32 to vector<1x256xi32>
    %2 = arith.cmpi slt, %0, %1 : vector<1x256xi32>
    %c0 = arith.constant 0 : index
    %c0_0 = arith.constant 0 : index
    %3 = vector.load %arg3[%c0, %c0_0] : memref<512x256xbf16, #tpu.memory_space<vmem>>, vector<512x256xbf16>
    %c0_1 = arith.constant 0 : index
    %c0_2 = arith.constant 0 : index
    %4 = vector.load %arg1[%c0_1, %c0_2] : memref<256x256xbf16, #tpu.memory_space<vmem>>, vector<256x256xbf16>
    %cst = arith.constant dense<0.000000e+00> : vector<512x256xf32>
    %5 = tpu.matmul %3, %4, %cst {dimension_numbers = #tpu.dot_dimension_numbers<[1], [0], [0], [1], [0, 0, 1, 1], [], []>} : vector<512x256xbf16>, vector<256x256xbf16>, vector<512x256xf32> -> vector<512x256xf32>
    %c0_3 = arith.constant 0 : index
    %c0_4 = arith.constant 0 : index
    %6 = vector.load %arg4[%c0_3, %c0_4] : memref<512x2xf32, #tpu.memory_space<vmem>>, vector<512x1xf32>
    %c0_5 = arith.constant 0 : index
    %c1 = arith.constant 1 : index
    %7 = vector.load %arg4[%c0_5, %c1] : memref<512x2xf32, #tpu.memory_space<vmem>>, vector<512x1xf32>
    %cst_6 = arith.constant dense<0.000000e+00> : vector<512xf32>
    %8 = vector.multi_reduction <add>, %5, %cst_6 [1] : vector<512x256xf32> to vector<512xf32>
    %9 = vector.shape_cast %8 : vector<512xf32> to vector<512x1xf32>
    %cst_7 = arith.constant 0.00510204071 : f32
    %10 = vector.broadcast %cst_7 : f32 to vector<512x1xf32>
    %11 = arith.mulf %9, %10 : vector<512x1xf32>
    %12 = vector.broadcast %11 : vector<512x1xf32> to vector<512x256xf32>
    %13 = arith.subf %5, %12 : vector<512x256xf32>
    %cst_8 = arith.constant 0.000000e+00 : f32
    %14 = vector.shape_cast %2 : vector<1x256xi1> to vector<1x256xi1>
    %15 = vector.broadcast %14 : vector<1x256xi1> to vector<512x256xi1>
    %16 = vector.broadcast %cst_8 : f32 to vector<512x256xf32>
    %17 = arith.select %15, %13, %16 : vector<512x256xi1>, vector<512x256xf32>
    %18 = arith.mulf %17, %17 : vector<512x256xf32>
    %cst_9 = arith.constant dense<0.000000e+00> : vector<512xf32>
    %19 = vector.multi_reduction <add>, %18, %cst_9 [1] : vector<512x256xf32> to vector<512xf32>
    %20 = vector.shape_cast %19 : vector<512xf32> to vector<512x1xf32>
    %cst_10 = arith.constant 0.00510204071 : f32
    %21 = vector.broadcast %cst_10 : f32 to vector<512x1xf32>
    %22 = arith.mulf %20, %21 : vector<512x1xf32>
    %cst_11 = arith.constant 9.99999974E-6 : f32
    %23 = vector.broadcast %cst_11 : f32 to vector<512x1xf32>
    %24 = arith.addf %22, %23 : vector<512x1xf32>
    %25 = math.rsqrt %24 : vector<512x1xf32>
    %26 = arith.mulf %25, %6 : vector<512x1xf32>
    %27 = arith.mulf %11, %26 : vector<512x1xf32>
    %28 = arith.subf %7, %27 : vector<512x1xf32>
    %29 = vector.broadcast %26 : vector<512x1xf32> to vector<512x256xf32>
    %30 = arith.mulf %5, %29 : vector<512x256xf32>
    %31 = vector.broadcast %28 : vector<512x1xf32> to vector<512x256xf32>
    %32 = arith.addf %30, %31 : vector<512x256xf32>
    %c0_12 = arith.constant 0 : index
    %c0_13 = arith.constant 0 : index
    %33 = vector.load %arg2[%c0_12, %c0_13] : memref<512x256xbf16, #tpu.memory_space<vmem>>, vector<512x256xbf16>
    %34 = arith.extf %33 : vector<512x256xbf16> to vector<512x256xf32>
    %35 = arith.addf %32, %34 : vector<512x256xf32>
    %cst_14 = arith.constant 0.000000e+00 : f32
    %36 = vector.broadcast %cst_14 : f32 to vector<512x256xf32>
    %37 = arith.maximumf %35, %36 : vector<512x256xf32>
    %cst_15 = arith.constant 0.000000e+00 : f32
    %38 = vector.shape_cast %2 : vector<1x256xi1> to vector<1x256xi1>
    %39 = vector.broadcast %38 : vector<1x256xi1> to vector<512x256xi1>
    %40 = vector.broadcast %cst_15 : f32 to vector<512x256xf32>
    %41 = arith.select %39, %37, %40 : vector<512x256xi1>, vector<512x256xf32>
    %42 = arith.truncf %41 : vector<512x256xf32> to vector<512x256xbf16>
    %c0_i32 = arith.constant 0 : i32
    %43 = arith.cmpi eq, %arg0, %c0_i32 : i32
    %44 = arith.extui %43 : i1 to i32
    %c0_i32_16 = arith.constant 0 : i32
    %45 = arith.cmpi ne, %44, %c0_i32_16 : i32
    scf.if %45 {
      %cst_25 = arith.constant 0.000000e+00 : f32
      %54 = vector.broadcast %cst_25 : f32 to vector<256x256xf32>
      %c0_26 = arith.constant 0 : index
      %c0_27 = arith.constant 0 : index
      %55 = vector.load %arg7[%c0_26, %c0_27] : memref<256x256xf32, #tpu.memory_space<vmem>>, vector<256x256xf32>
      tpu.vector_store %arg7[%c0_26, %c0_27], %54 {strides = array<i32>} : memref<256x256xf32, #tpu.memory_space<vmem>>, vector<256x256xf32>,
    } else {
    }
    %c0_17 = arith.constant 0 : index
    %c0_18 = arith.constant 0 : index
    %46 = vector.load %arg7[%c0_17, %c0_18] : memref<256x256xf32, #tpu.memory_space<vmem>>, vector<256x256xf32>
    %c0_19 = arith.constant 0 : index
    %c0_20 = arith.constant 0 : index
    %47 = vector.load %arg5[%c0_19, %c0_20] : memref<256x512xbf16, #tpu.memory_space<vmem>>, vector<256x512xbf16>
    %cst_21 = arith.constant dense<0.000000e+00> : vector<256x256xf32>
    %48 = tpu.matmul %47, %42, %cst_21 {dimension_numbers = #tpu.dot_dimension_numbers<[1], [0], [0], [1], [0, 0, 1, 1], [], []>} : vector<256x512xbf16>, vector<512x256xbf16>, vector<256x256xf32> -> vector<256x256xf32>
    %49 = arith.addf %46, %48 : vector<256x256xf32>
    %c0_22 = arith.constant 0 : index
    %c0_23 = arith.constant 0 : index
    %50 = vector.load %arg7[%c0_22, %c0_23] : memref<256x256xf32, #tpu.memory_space<vmem>>, vector<256x256xf32>
    tpu.vector_store %arg7[%c0_22, %c0_23], %49 {strides = array<i32>} : memref<256x256xf32, #tpu.memory_space<vmem>>, vector<256x256xf32>,
    %c1_i32 = arith.constant 1 : i32
    %51 = arith.cmpi eq, %arg0, %c1_i32 : i32
    %52 = arith.extui %51 : i1 to i32
    %c0_i32_24 = arith.constant 0 : i32
    %53 = arith.cmpi ne, %52, %c0_i32_24 : i32
    scf.if %53 {
      %c0_25 = arith.constant 0 : index
      %c0_26 = arith.constant 0 : index
      %54 = vector.load %arg7[%c0_25, %c0_26] : memref<256x256xf32, #tpu.memory_space<vmem>>, vector<256x256xf32>
      %c0_27 = arith.constant 0 : index
      %c0_28 = arith.constant 0 : index
      %55 = vector.load %arg6[%c0_27, %c0_28] : memref<256x2xf32, #tpu.memory_space<vmem>>, vector<256x1xf32>
      %c0_29 = arith.constant 0 : index
      %c1_30 = arith.constant 1 : index
      %56 = vector.load %arg6[%c0_29, %c1_30] : memref<256x2xf32, #tpu.memory_space<vmem>>, vector<256x1xf32>
      %cst_31 = arith.constant dense<0.000000e+00> : vector<256xf32>
      %57 = vector.multi_reduction <add>, %54, %cst_31 [1] : vector<256x256xf32> to vector<256xf32>
      %58 = vector.shape_cast %57 : vector<256xf32> to vector<256x1xf32>
      %cst_32 = arith.constant 0.00510204071 : f32
      %59 = vector.broadcast %cst_32 : f32 to vector<256x1xf32>
      %60 = arith.mulf %58, %59 : vector<256x1xf32>
      %61 = vector.broadcast %60 : vector<256x1xf32> to vector<256x256xf32>
      %62 = arith.subf %54, %61 : vector<256x256xf32>
      %cst_33 = arith.constant 0.000000e+00 : f32
      %63 = vector.shape_cast %2 : vector<1x256xi1> to vector<1x256xi1>
      %64 = vector.broadcast %63 : vector<1x256xi1> to vector<256x256xi1>
      %65 = vector.broadcast %cst_33 : f32 to vector<256x256xf32>
      %66 = arith.select %64, %62, %65 : vector<256x256xi1>, vector<256x256xf32>
      %67 = arith.mulf %66, %66 : vector<256x256xf32>
      %cst_34 = arith.constant dense<0.000000e+00> : vector<256xf32>
      %68 = vector.multi_reduction <add>, %67, %cst_34 [1] : vector<256x256xf32> to vector<256xf32>
      %69 = vector.shape_cast %68 : vector<256xf32> to vector<256x1xf32>
      %cst_35 = arith.constant 0.00510204071 : f32
      %70 = vector.broadcast %cst_35 : f32 to vector<256x1xf32>
      %71 = arith.mulf %69, %70 : vector<256x1xf32>
      %cst_36 = arith.constant 9.99999974E-6 : f32
      %72 = vector.broadcast %cst_36 : f32 to vector<256x1xf32>
      %73 = arith.addf %71, %72 : vector<256x1xf32>
      %74 = math.rsqrt %73 : vector<256x1xf32>
      %75 = arith.mulf %74, %55 : vector<256x1xf32>
      %76 = arith.mulf %60, %75 : vector<256x1xf32>
      %77 = arith.subf %56, %76 : vector<256x1xf32>
      %78 = vector.broadcast %75 : vector<256x1xf32> to vector<256x256xf32>
      %79 = arith.mulf %54, %78 : vector<256x256xf32>
      %80 = vector.broadcast %77 : vector<256x1xf32> to vector<256x256xf32>
      %81 = arith.addf %79, %80 : vector<256x256xf32>
      %c0_37 = arith.constant 0 : index
      %c0_38 = arith.constant 0 : index
      %82 = vector.load %arg7[%c0_37, %c0_38] : memref<256x256xf32, #tpu.memory_space<vmem>>, vector<256x256xf32>
      tpu.vector_store %arg7[%c0_37, %c0_38], %81 {strides = array<i32>} : memref<256x256xf32, #tpu.memory_space<vmem>>, vector<256x256xf32>,
    } else {
    }
    return
  }
  func.func @transform_0(%arg0: i32) -> (i32, i32) {
    %c0_i32 = arith.constant 0 : i32
    %c0_i32_0 = arith.constant 0 : i32
    %c0_i32_1 = arith.constant 0 : i32
    return %c0_i32, %c0_i32_0 : i32, i32
  }
  func.func @transform_1(%arg0: i32) -> (i32, i32) {
    %c0_i32 = arith.constant 0 : i32
    %c0_i32_0 = arith.constant 0 : i32
    return %arg0, %c0_i32 : i32, i32
  }
  func.func @transform_2(%arg0: i32) -> (i32, i32) {
    %c0_i32 = arith.constant 0 : i32
    %c0_i32_0 = arith.constant 0 : i32
    return %arg0, %c0_i32 : i32, i32
  }
  func.func @transform_3(%arg0: i32) -> (i32, i32) {
    %c0_i32 = arith.constant 0 : i32
    %c0_i32_0 = arith.constant 0 : i32
    return %arg0, %c0_i32 : i32, i32
  }
  func.func @transform_4(%arg0: i32) -> (i32, i32) {
    %c0_i32 = arith.constant 0 : i32
    %c0_i32_0 = arith.constant 0 : i32
    return %c0_i32, %arg0 : i32, i32
  }
  func.func @transform_5(%arg0: i32) -> (i32, i32) {
    %c0_i32 = arith.constant 0 : i32
    %c0_i32_0 = arith.constant 0 : i32
    %c0_i32_1 = arith.constant 0 : i32
    return %c0_i32, %c0_i32_0 : i32, i32
  }
  func.func @transform_6(%arg0: i32) -> (i32, i32) {
    %c0_i32 = arith.constant 0 : i32
    %c0_i32_0 = arith.constant 0 : i32
    %c0_i32_1 = arith.constant 0 : i32
    return %c0_i32, %c0_i32_0 : i32, i32
  }
}

</mosaic_0001>

<llo_original>
// kernel: forward.1
$region0: #{forward.1}
  #allocation0 [shape = 'u32[]', space=smem, size = 0x4, offset = 0x4, fixed_abs, tag = 'smem constant byte address 0x4 - core index']
  #allocation1 [shape = 'u32[144,128]{1,0:T(1,128)}', space=vmem, size = 0x12000, scoped, tag = 'internal scratch']
  %s0 = inlined_call_operand.vmem [shape: bf16[256,256], index: 0, kind: input, shape index: {}]
  %s1 = inlined_call_operand.vmem [shape: bf16[1024,256], index: 1, kind: input, shape index: {}]
  %s2 = inlined_call_operand.vmem [shape: bf16[1024,256], index: 2, kind: input, shape index: {}]
  %s3 = inlined_call_operand.vmem [shape: f32[1024,2], index: 3, kind: input, shape index: {}]
  %s4 = inlined_call_operand.vmem [shape: bf16[256,1024], index: 4, kind: input, shape index: {}]
  %s5 = inlined_call_operand.vmem [shape: f32[256,2], index: 5, kind: input, shape index: {}]
  %s6 = inlined_call_operand.vmem [shape: f32[256,256], index: 6, kind: output, shape index: {}]
  %s7 = sld [smem:[#allocation0]]
  $region88: #{forward.1} parent=0
    _
  %s9 = ssub.s32 1, %s7
  %s10 = scalar_select 0, %s9, %s7
  $region1: #{forward.1} parent=0
    #allocation2 [shape = 'u8[524288]{0}', space=vmem, size = 0x80000, scoped, tag = 'input window, operand 4']
    loop: start=0, step=1, limit=4
    $region2: #{forward.1} parent=1 // loop_pre_header
      _
    $region3: #{forward.1} parent=1 // loop_header
      %s12 = sphi 0, %s16
      %p13 = scmp.ge.s32.totalorder %s12, 4
      %s20 = sphi 0, %s20
      %s22 = sphi 0, %s20
      %s23 = sphi 0, %s22
      %s37 = sphi 0, %s23
      %s43 = sphi 0, %s45
      %s46 = sphi 0, %s43
      %s47 = sphi 0, %s46
      %s63 = sphi 0, %s47
      %s69 = sphi 0, %s71
      %s72 = sphi 0, %s69
      %s73 = sphi 0, %s72
      %s89 = sphi 0, %s73
      %s95 = sphi 0, %s97
      %s98 = sphi 0, %s95
      %s99 = sphi 0, %s98
      %s115 = sphi 0, %s99
      %s121 = sphi 0, %s123
      %s124 = sphi 0, %s121
      %s125 = sphi 0, %s124
      %s141 = sphi 0, %s125
      %s145 = sphi 0, %s145
      %s147 = sphi 0, %s145
      %s148 = sphi 0, %s147
      %s162 = sphi 0, %s148
      %s166 = sphi 0, %s166
      %s168 = sphi 0, %s166
      %s169 = sphi 0, %s168
      %s183 = sphi 0, %s169
    $region4: #{forward.1} parent=1 // loop_header_branch
      %15 = sbr.rel (%p13) target = $region8
    $region5: #{forward.1} parent=1 // loop_body
      %s17 = ssub.s32 %s12, 1
      %s18 = ssub.s32 %s12, 2
      %s19 = sadd.s32 %s12, 1
      %s21 = sadd.s32 %s20, 1
      %p24 = scmp.eq.s32.totalorder %s12, 1
      %p25 = scmp.ne.s32.totalorder %s20, %s22
      %p26 = scmp.eq.s32.totalorder %s12, 0
      %p27 = por %p25, %p26
      %p28 = scmp.ne.s32.totalorder %s20, %s22
      %p29 = scmp.eq.s32.totalorder %s17, 1
      %p30 = por %p28, %p29
      %p31 = scmp.ne.s32.totalorder %s22, %s23
      %p32 = scmp.eq.s32.totalorder %s17, 0
      %p33 = por %p31, %p32
      %p34 = scmp.ne.s32.totalorder %s22, %s23
      %p35 = scmp.eq.s32.totalorder %s18, 1
      %p36 = por %p34, %p35
      %p38 = scmp.ne.s32.totalorder %s23, %s37
      %p39 = scmp.eq.s32.totalorder %s18, 0
      %p40 = por %p38, %p39
      %s41 = ssub.s32 %s12, %s19
      %p42 = scmp.eq.s32.totalorder %s41, 0
      %s44 = sadd.s32 %s43, 1
      %s45 = scalar_select %p42, %s43, %s44
      %p48 = pneg %p42
      %p49 = scmp.eq.s32.totalorder %s12, 1
      %p50 = por %p48, %p49
      %p51 = scmp.ne.s32.totalorder %s43, %s46
      %p52 = scmp.eq.s32.totalorder %s12, 0
      %p53 = por %p51, %p52
      %p54 = scmp.ne.s32.totalorder %s43, %s46
      %p55 = scmp.eq.s32.totalorder %s17, 1
      %p56 = por %p54, %p55
      %p57 = scmp.ne.s32.totalorder %s46, %s47
      %p58 = scmp.eq.s32.totalorder %s17, 0
      %p59 = por %p57, %p58
      %p60 = scmp.ne.s32.totalorder %s46, %s47
      %p61 = scmp.eq.s32.totalorder %s18, 1
      %p62 = por %p60, %p61
      %p64 = scmp.ne.s32.totalorder %s47, %s63
      %p65 = scmp.eq.s32.totalorder %s18, 0
      %p66 = por %p64, %p65
      %s67 = ssub.s32 %s12, %s19
      %p68 = scmp.eq.s32.totalorder %s67, 0
      %s70 = sadd.s32 %s69, 1
      %s71 = scalar_select %p68, %s69, %s70
      %p74 = pneg %p68
      %p75 = scmp.eq.s32.totalorder %s12, 1
      %p76 = por %p74, %p75
      %p77 = scmp.ne.s32.totalorder %s69, %s72
      %p78 = scmp.eq.s32.totalorder %s12, 0
      %p79 = por %p77, %p78
      %p80 = scmp.ne.s32.totalorder %s69, %s72
      %p81 = scmp.eq.s32.totalorder %s17, 1
      %p82 = por %p80, %p81
      %p83 = scmp.ne.s32.totalorder %s72, %s73
      %p84 = scmp.eq.s32.totalorder %s17, 0
      %p85 = por %p83, %p84
      %p86 = scmp.ne.s32.totalorder %s72, %s73
      %p87 = scmp.eq.s32.totalorder %s18, 1
      %p88 = por %p86, %p87
      %p90 = scmp.ne.s32.totalorder %s73, %s89
      %p91 = scmp.eq.s32.totalorder %s18, 0
      %p92 = por %p90, %p91
      %s93 = ssub.s32 %s12, %s19
      %p94 = scmp.eq.s32.totalorder %s93, 0
      %s96 = sadd.s32 %s95, 1
      %s97 = scalar_select %p94, %s95, %s96
      %p100 = pneg %p94
      %p101 = scmp.eq.s32.totalorder %s12, 1
      %p102 = por %p100, %p101
      %p103 = scmp.ne.s32.totalorder %s95, %s98
      %p104 = scmp.eq.s32.totalorder %s12, 0
      %p105 = por %p103, %p104
      %p106 = scmp.ne.s32.totalorder %s95, %s98
      %p107 = scmp.eq.s32.totalorder %s17, 1
      %p108 = por %p106, %p107
      %p109 = scmp.ne.s32.totalorder %s98, %s99
      %p110 = scmp.eq.s32.totalorder %s17, 0
      %p111 = por %p109, %p110
      %p112 = scmp.ne.s32.totalorder %s98, %s99
      %p113 = scmp.eq.s32.totalorder %s18, 1
      %p114 = por %p112, %p113
      %p116 = scmp.ne.s32.totalorder %s99, %s115
      %p117 = scmp.eq.s32.totalorder %s18, 0
      %p118 = por %p116, %p117
      %s119 = ssub.s32 %s12, %s19
      %p120 = scmp.eq.s32.totalorder %s119, 0
      %s122 = sadd.s32 %s121, 1
      %s123 = scalar_select %p120, %s121, %s122
      %p126 = pneg %p120
      %p127 = scmp.eq.s32.totalorder %s12, 1
      %p128 = por %p126, %p127
      %p129 = scmp.ne.s32.totalorder %s121, %s124
      %p130 = scmp.eq.s32.totalorder %s12, 0
      %p131 = por %p129, %p130
      %p132 = scmp.ne.s32.totalorder %s121, %s124
      %p133 = scmp.eq.s32.totalorder %s17, 1
      %p134 = por %p132, %p133
      %p135 = scmp.ne.s32.totalorder %s124, %s125
      %p136 = scmp.eq.s32.totalorder %s17, 0
      %p137 = por %p135, %p136
      %p138 = scmp.ne.s32.totalorder %s124, %s125
      %p139 = scmp.eq.s32.totalorder %s18, 1
      %p140 = por %p138, %p139
      %p142 = scmp.ne.s32.totalorder %s125, %s141
      %p143 = scmp.eq.s32.totalorder %s18, 0
      %p144 = por %p142, %p143
      %s146 = sadd.s32 %s145, 1
      %p149 = scmp.eq.s32.totalorder %s12, 1
      %p150 = scmp.ne.s32.totalorder %s145, %s147
      %p151 = scmp.eq.s32.totalorder %s12, 0
      %p152 = por %p150, %p151
      %p153 = scmp.ne.s32.totalorder %s145, %s147
      %p154 = scmp.eq.s32.totalorder %s17, 1
      %p155 = por %p153, %p154
      %p156 = scmp.ne.s32.totalorder %s147, %s148
      %p157 = scmp.eq.s32.totalorder %s17, 0
      %p158 = por %p156, %p157
      %p159 = scmp.ne.s32.totalorder %s147, %s148
      %p160 = scmp.eq.s32.totalorder %s18, 1
      %p161 = por %p159, %p160
      %p163 = scmp.ne.s32.totalorder %s148, %s162
      %p164 = scmp.eq.s32.totalorder %s18, 0
      %p165 = por %p163, %p164
      %s167 = sadd.s32 %s166, 1
      %p170 = scmp.eq.s32.totalorder %s12, 1
      %p171 = scmp.ne.s32.totalorder %s166, %s168
      %p172 = scmp.eq.s32.totalorder %s12, 0
      %p173 = por %p171, %p172
      %p174 = scmp.ne.s32.totalorder %s166, %s168
      %p175 = scmp.eq.s32.totalorder %s17, 1
      %p176 = por %p174, %p175
      %p177 = scmp.ne.s32.totalorder %s168, %s169
      %p178 = scmp.eq.s32.totalorder %s17, 0
      %p179 = por %p177, %p178
      %p180 = scmp.ne.s32.totalorder %s168, %s169
      %p181 = scmp.eq.s32.totalorder %s18, 1
      %p182 = por %p180, %p181
      %p184 = scmp.ne.s32.totalorder %s169, %s183
      %p185 = scmp.eq.s32.totalorder %s18, 0
      %p186 = por %p184, %p185
      %p187 = scmp.le.s32.totalorder 1, %s12
      %p188 = scmp.lt.s32.totalorder %s12, 3
      %p189 = pnand %p187, %p188
      %p190 = pneg %p189
      // Predicated region
      $region9: #{forward.1} parent=5 // pred_check
        _
      $region10: #{forward.1} parent=5 // pred_check_branch
        %192 = sbr.rel (%p189) target = $region12
      $region11: #{forward.1} parent=5 // pred_region
        %s193 = ssub.s32 %s12, 1
        // Predicated region
        $region13: #{forward.1} parent=11 // pred_check
          %p194 = pneg %p33
        $region14: #{forward.1} parent=11 // pred_check_branch
          %196 = sbr.rel (%p194) target = $region16
        $region15: #{forward.1} parent=11 // pred_region
          _
        $region16: #{forward.1} parent=11 // pred_fallthru
          _
        // Predicated region
        $region17: #{forward.1} parent=11 // pred_check
          %p197 = pneg %p158
        $region18: #{forward.1} parent=11 // pred_check_branch
          %199 = sbr.rel (%p197) target = $region20
        $region19: #{forward.1} parent=11 // pred_region
          _
        $region20: #{forward.1} parent=11 // pred_fallthru
          _
      $region12: #{forward.1} parent=5 // pred_fallthru
        _
      %p200 = scmp.lt.s32.totalorder %s12, 2
      // Predicated region
      $region21: #{forward.1} parent=5 // pred_check
        %p201 = pneg %p200
      $region22: #{forward.1} parent=5 // pred_check_branch
        %203 = sbr.rel (%p201) target = $region24
      $region23: #{forward.1} parent=5 // pred_region
        // Predicated region
        $region25: #{forward.1} parent=23 // pred_check
          %p204 = pneg %p53
        $region26: #{forward.1} parent=23 // pred_check_branch
          %206 = sbr.rel (%p204) target = $region28
        $region27: #{forward.1} parent=23 // pred_region
          %s207 = smul.u32 64, %s12
          %p208 = scmp.lt.s32.totalorder %s207, 127
          %s209 = scalar_select %p208, %s207, 127
          %s210 = smul.addr %s209, 2
          %s211 = smul.addr %s210, 4
          %s212 = scalar_lea.vmem %s1, %s211
          %s213 = smul.u32 64, %s12
        $region28: #{forward.1} parent=23 // pred_fallthru
          _
        // Predicated region
        $region29: #{forward.1} parent=23 // pred_check
          %p214 = pneg %p79
        $region30: #{forward.1} parent=23 // pred_check_branch
          %216 = sbr.rel (%p214) target = $region32
        $region31: #{forward.1} parent=23 // pred_region
          %s217 = smul.u32 64, %s12
          %p218 = scmp.lt.s32.totalorder %s217, 127
          %s219 = scalar_select %p218, %s217, 127
          %s220 = smul.addr %s219, 2
          %s221 = smul.addr %s220, 4
          %s222 = scalar_lea.vmem %s2, %s221
          %s223 = smul.u32 64, %s12
        $region32: #{forward.1} parent=23 // pred_fallthru
          _
        // Predicated region
        $region33: #{forward.1} parent=23 // pred_check
          %p224 = pneg %p105
        $region34: #{forward.1} parent=23 // pred_check_branch
          %226 = sbr.rel (%p224) target = $region36
        $region35: #{forward.1} parent=23 // pred_region
          %s227 = smul.u32 64, %s12
          %p228 = scmp.lt.s32.totalorder %s227, 127
          %s229 = scalar_select %p228, %s227, 127
          %s230 = smul.addr %s229, 8
          %s231 = scalar_lea.vmem %s3, %s230
          %s232 = smul.u32 64, %s12
        $region36: #{forward.1} parent=23 // pred_fallthru
          _
        // Predicated region
        $region37: #{forward.1} parent=23 // pred_check
          %p233 = pneg %p131
        $region38: #{forward.1} parent=23 // pred_check_branch
          %235 = sbr.rel (%p233) target = $region40
        $region39: #{forward.1} parent=23 // pred_region
          %s236 = sand.u32 %s121, 1
          %s237 = sand.u32 %s121, 1
          %s238 = smul.addr %s237, 512
          %s239 = scalar_lea.vmem [#allocation2], %s238
          %s240 = smul.u32 4, %s12
          %s241 = smul.addr %s240, 4
          %s242 = scalar_lea.vmem %s4, %s241
          // Predicated region
          $region41: #{forward.1} parent=39 // pred_check
            _
          $region42: #{forward.1} parent=39 // pred_check_branch
            %244 = sbr.rel (0) target = $region44
          $region43: #{forward.1} parent=39 // pred_region
            // Predicated region
            $region45: #{forward.1} parent=43 // pred_check
              _
            $region46: #{forward.1} parent=43 // pred_check_branch
              %246 = sbr.rel (0) target = $region48
            $region47: #{forward.1} parent=43 // pred_region
              loop: start=0, step=1, limit=1
              $region49: #{forward.1} parent=47 // loop_pre_header
                _
              $region50: #{forward.1} parent=47 // loop_header
                %s248 = sphi 0, %s252
                %p249 = scmp.ge.s32.totalorder %s248, 1
                %s253 = sphi %s242, %s242
                %s254 = sphi %s239, %s239
              $region51: #{forward.1} parent=47 // loop_header_branch
                %251 = sbr.rel (%p249) target = $region55
              $region52: #{forward.1} parent=47 // loop_body
                %v255 = vld [vmem:[%s253] sm:$0xff]
                %256 = vst [vmem:[%s254] sm:$0xff] %v255
                %v257 = vld [vmem:[%s253 + $0x8] sm:$0xff]
                %258 = vst [vmem:[%s254 + $0x8] sm:$0xff] %v257
                %v259 = vld [vmem:[%s253 + $0x20] sm:$0xff]
                %260 = vst [vmem:[%s254 + $0x10] sm:$0xff] %v259
                %v261 = vld [vmem:[%s253 + $0x28] sm:$0xff]
                %262 = vst [vmem:[%s254 + $0x18] sm:$0xff] %v261
                %v263 = vld [vmem:[%s253 + $0x40] sm:$0xff]
                %264 = vst [vmem:[%s254 + $0x20] sm:$0xff] %v263
                %v265 = vld [vmem:[%s253 + $0x48] sm:$0xff]
                %266 = vst [vmem:[%s254 + $0x28] sm:$0xff] %v265
                %v267 = vld [vmem:[%s253 + $0x60] sm:$0xff]
                %268 = vst [vmem:[%s254 + $0x30] sm:$0xff] %v267
                %v269 = vld [vmem:[%s253 + $0x68] sm:$0xff]
                %270 = vst [vmem:[%s254 + $0x38] sm:$0xff] %v269
                %v271 = vld [vmem:[%s253 + $0x80] sm:$0xff]
                %272 = vst [vmem:[%s254 + $0x40] sm:$0xff] %v271
                %v273 = vld [vmem:[%s253 + $0x88] sm:$0xff]
                %274 = vst [vmem:[%s254 + $0x48] sm:$0xff] %v273
                %v275 = vld [vmem:[%s253 + $0xa0] sm:$0xff]
                %276 = vst [vmem:[%s254 + $0x50] sm:$0xff] %v275
                %v277 = vld [vmem:[%s253 + $0xa8] sm:$0xff]
                %278 = vst [vmem:[%s254 + $0x58] sm:$0xff] %v277
                %v279 = vld [vmem:[%s253 + $0xc0] sm:$0xff]
                %280 = vst [vmem:[%s254 + $0x60] sm:$0xff] %v279
                %v281 = vld [vmem:[%s253 + $0xc8] sm:$0xff]
                %282 = vst [vmem:[%s254 + $0x68] sm:$0xff] %v281
                %v283 = vld [vmem:[%s253 + $0xe0] sm:$0xff]
                %284 = vst [vmem:[%s254 + $0x70] sm:$0xff] %v283
                %v285 = vld [vmem:[%s253 + $0xe8] sm:$0xff]
                %286 = vst [vmem:[%s254 + $0x78] sm:$0xff] %v285
                %v287 = vld [vmem:[%s253 + $0x100] sm:$0xff]
                %288 = vst [vmem:[%s254 + $0x80] sm:$0xff] %v287
                %v289 = vld [vmem:[%s253 + $0x108] sm:$0xff]
                %290 = vst [vmem:[%s254 + $0x88] sm:$0xff] %v289
                %v291 = vld [vmem:[%s253 + $0x120] sm:$0xff]
                %292 = vst [vmem:[%s254 + $0x90] sm:$0xff] %v291
                %v293 = vld [vmem:[%s253 + $0x128] sm:$0xff]
                %294 = vst [vmem:[%s254 + $0x98] sm:$0xff] %v293
                %v295 = vld [vmem:[%s253 + $0x140] sm:$0xff]
                %296 = vst [vmem:[%s254 + $0xa0] sm:$0xff] %v295
                %v297 = vld [vmem:[%s253 + $0x148] sm:$0xff]
                %298 = vst [vmem:[%s254 + $0xa8] sm:$0xff] %v297
                %v299 = vld [vmem:[%s253 + $0x160] sm:$0xff]
                %300 = vst [vmem:[%s254 + $0xb0] sm:$0xff] %v299
                %v301 = vld [vmem:[%s253 + $0x168] sm:$0xff]
                %302 = vst [vmem:[%s254 + $0xb8] sm:$0xff] %v301
                %v303 = vld [vmem:[%s253 + $0x180] sm:$0xff]
                %304 = vst [vmem:[%s254 + $0xc0] sm:$0xff] %v303
                %v305 = vld [vmem:[%s253 + $0x188] sm:$0xff]
                %306 = vst [vmem:[%s254 + $0xc8] sm:$0xff] %v305
                %v307 = vld [vmem:[%s253 + $0x1a0] sm:$0xff]
                %308 = vst [vmem:[%s254 + $0xd0] sm:$0xff] %v307
                %v309 = vld [vmem:[%s253 + $0x1a8] sm:$0xff]
                %310 = vst [vmem:[%s254 + $0xd8] sm:$0xff] %v309
                %v311 = vld [vmem:[%s253 + $0x1c0] sm:$0xff]
                %312 = vst [vmem:[%s254 + $0xe0] sm:$0xff] %v311
                %v313 = vld [vmem:[%s253 + $0x1c8] sm:$0xff]
                %314 = vst [vmem:[%s254 + $0xe8] sm:$0xff] %v313
                %v315 = vld [vmem:[%s253 + $0x1e0] sm:$0xff]
                %316 = vst [vmem:[%s254 + $0xf0] sm:$0xff] %v315
                %v317 = vld [vmem:[%s253 + $0x1e8] sm:$0xff]
                %318 = vst [vmem:[%s254 + $0xf8] sm:$0xff] %v317
                %v319 = vld [vmem:[%s253 + $0x200] sm:$0xff]
                %320 = vst [vmem:[%s254 + $0x100] sm:$0xff] %v319
                %v321 = vld [vmem:[%s253 + $0x208] sm:$0xff]
                %322 = vst [vmem:[%s254 + $0x108] sm:$0xff] %v321
                %v323 = vld [vmem:[%s253 + $0x220] sm:$0xff]
                %324 = vst [vmem:[%s254 + $0x110] sm:$0xff] %v323
                %v325 = vld [vmem:[%s253 + $0x228] sm:$0xff]
                %326 = vst [vmem:[%s254 + $0x118] sm:$0xff] %v325
                %v327 = vld [vmem:[%s253 + $0x240] sm:$0xff]
                %328 = vst [vmem:[%s254 + $0x120] sm:$0xff] %v327
                %v329 = vld [vmem:[%s253 + $0x248] sm:$0xff]
                %330 = vst [vmem:[%s254 + $0x128] sm:$0xff] %v329
                %v331 = vld [vmem:[%s253 + $0x260] sm:$0xff]
                %332 = vst [vmem:[%s254 + $0x130] sm:$0xff] %v331
                %v333 = vld [vmem:[%s253 + $0x268] sm:$0xff]
                %334 = vst [vmem:[%s254 + $0x138] sm:$0xff] %v333
                %v335 = vld [vmem:[%s253 + $0x280] sm:$0xff]
                %336 = vst [vmem:[%s254 + $0x140] sm:$0xff] %v335
                %v337 = vld [vmem:[%s253 + $0x288] sm:$0xff]
                %338 = vst [vmem:[%s254 + $0x148] sm:$0xff] %v337
                %v339 = vld [vmem:[%s253 + $0x2a0] sm:$0xff]
                %340 = vst [vmem:[%s254 + $0x150] sm:$0xff] %v339
                %v341 = vld [vmem:[%s253 + $0x2a8] sm:$0xff]
                %342 = vst [vmem:[%s254 + $0x158] sm:$0xff] %v341
                %v343 = vld [vmem:[%s253 + $0x2c0] sm:$0xff]
                %344 = vst [vmem:[%s254 + $0x160] sm:$0xff] %v343
                %v345 = vld [vmem:[%s253 + $0x2c8] sm:$0xff]
                %346 = vst [vmem:[%s254 + $0x168] sm:$0xff] %v345
                %v347 = vld [vmem:[%s253 + $0x2e0] sm:$0xff]
                %348 = vst [vmem:[%s254 + $0x170] sm:$0xff] %v347
                %v349 = vld [vmem:[%s253 + $0x2e8] sm:$0xff]
                %350 = vst [vmem:[%s254 + $0x178] sm:$0xff] %v349
                %v351 = vld [vmem:[%s253 + $0x300] sm:$0xff]
                %352 = vst [vmem:[%s254 + $0x180] sm:$0xff] %v351
                %v353 = vld [vmem:[%s253 + $0x308] sm:$0xff]
                %354 = vst [vmem:[%s254 + $0x188] sm:$0xff] %v353
                %v355 = vld [vmem:[%s253 + $0x320] sm:$0xff]
                %356 = vst [vmem:[%s254 + $0x190] sm:$0xff] %v355
                %v357 = vld [vmem:[%s253 + $0x328] sm:$0xff]
                %358 = vst [vmem:[%s254 + $0x198] sm:$0xff] %v357
                %v359 = vld [vmem:[%s253 + $0x340] sm:$0xff]
                %360 = vst [vmem:[%s254 + $0x1a0] sm:$0xff] %v359
                %v361 = vld [vmem:[%s253 + $0x348] sm:$0xff]
                %362 = vst [vmem:[%s254 + $0x1a8] sm:$0xff] %v361
                %v363 = vld [vmem:[%s253 + $0x360] sm:$0xff]
                %364 = vst [vmem:[%s254 + $0x1b0] sm:$0xff] %v363
                %v365 = vld [vmem:[%s253 + $0x368] sm:$0xff]
                %366 = vst [vmem:[%s254 + $0x1b8] sm:$0xff] %v365
                %v367 = vld [vmem:[%s253 + $0x380] sm:$0xff]
                %368 = vst [vmem:[%s254 + $0x1c0] sm:$0xff] %v367
                %v369 = vld [vmem:[%s253 + $0x388] sm:$0xff]
                %370 = vst [vmem:[%s254 + $0x1c8] sm:$0xff] %v369
                %v371 = vld [vmem:[%s253 + $0x3a0] sm:$0xff]
                %372 = vst [vmem:[%s254 + $0x1d0] sm:$0xff] %v371
                %v373 = vld [vmem:[%s253 + $0x3a8] sm:$0xff]
                %374 = vst [vmem:[%s254 + $0x1d8] sm:$0xff] %v373
                %v375 = vld [vmem:[%s253 + $0x3c0] sm:$0xff]
                %376 = vst [vmem:[%s254 + $0x1e0] sm:$0xff] %v375
                %v377 = vld [vmem:[%s253 + $0x3c8] sm:$0xff]
                %378 = vst [vmem:[%s254 + $0x1e8] sm:$0xff] %v377
                %v379 = vld [vmem:[%s253 + $0x3e0] sm:$0xff]
                %380 = vst [vmem:[%s254 + $0x1f0] sm:$0xff] %v379
                %v381 = vld [vmem:[%s253 + $0x3e8] sm:$0xff]
                %382 = vst [vmem:[%s254 + $0x1f8] sm:$0xff] %v381
              $region53: #{forward.1} parent=47 // loop_footer
                %s252 = sadd.s32 1, %s248
              $region54: #{forward.1} parent=47 // loop_footer_branch
                %247 = sbr.rel target = $region50
              $region55: #{forward.1} parent=47 // loop_exit
                _
            $region48: #{forward.1} parent=43 // pred_fallthru
              _
            // Predicated region
            $region56: #{forward.1} parent=43 // pred_check
              _
            $region57: #{forward.1} parent=43 // pred_check_branch
              %384 = sbr.rel target = $region59
            $region58: #{forward.1} parent=43 // pred_region
              _
            $region59: #{forward.1} parent=43 // pred_fallthru
              _
          $region44: #{forward.1} parent=39 // pred_fallthru
            _
          %385 = vnop
        $region40: #{forward.1} parent=23 // pred_fallthru
          _
      $region24: #{forward.1} parent=5 // pred_fallthru
        _
      %p386 = scmp.le.s32.totalorder 1, %s12
      %p387 = scmp.lt.s32.totalorder %s12, 3
      %p388 = pnand %p386, %p387
      %p389 = pneg %p388
      // Predicated region
      $region60: #{forward.1} parent=5 // pred_check
        _
      $region61: #{forward.1} parent=5 // pred_check_branch
        %391 = sbr.rel (%p388) target = $region63
      $region62: #{forward.1} parent=5 // pred_region
        %s392 = ssub.s32 %s12, 1
        %s393 = sand.u32 %s124, 1
        %s394 = sand.u32 %s124, 1
        %s395 = smul.addr %s394, 512
        %s396 = scalar_lea.vmem [#allocation2], %s395
        // Predicated region
        $region64: #{forward.1} parent=62 // pred_check
          %p397 = pneg %p137
        $region65: #{forward.1} parent=62 // pred_check_branch
          %399 = sbr.rel (%p397) target = $region67
        $region66: #{forward.1} parent=62 // pred_region
          _
        $region67: #{forward.1} parent=62 // pred_fallthru
          _
        %p400 = pneg %p33
        %p401 = pneg %p30
        %s402 = smul.u32 64, %s17
        %p403 = scmp.lt.s32.totalorder %s402, 127
        %s404 = scalar_select %p403, %s402, 127
        %s405 = smul.addr %s404, 2
        %s406 = smul.addr %s405, 4
        %s407 = scalar_lea.vmem %s1, %s406
        %p408 = pneg %p59
        %p409 = pneg %p56
        %s410 = smul.u32 64, %s17
        %p411 = scmp.lt.s32.totalorder %s410, 127
        %s412 = scalar_select %p411, %s410, 127
        %s413 = smul.addr %s412, 2
        %s414 = smul.addr %s413, 4
        %s415 = scalar_lea.vmem %s2, %s414
        %p416 = pneg %p85
        %p417 = pneg %p82
        %s418 = smul.u32 64, %s17
        %p419 = scmp.lt.s32.totalorder %s418, 127
        %s420 = scalar_select %p419, %s418, 127
        %s421 = smul.addr %s420, 8
        %s422 = scalar_lea.vmem %s3, %s421
        %p423 = pneg %p111
        %p424 = pneg %p108
        %s425 = sand.u32 %s124, 1
        %s426 = sand.u32 %s124, 1
        %s427 = smul.addr %s426, 512
        %s428 = scalar_lea.vmem [#allocation2], %s427
        %p429 = pneg %p137
        %p430 = pneg %p134
        %p431 = pneg %p158
        %p432 = pneg %p155
        %p433 = pneg %p179
        %p434 = pneg %p176
        %s435 = smul.u32 64, %s17
        %p436 = scmp.lt.s32.totalorder %s435, 127
        %s437 = scalar_select %p436, %s435, 127
        %s438 = smul.addr %s437, 2
        %s439 = smul.addr %s438, 4
        %s440 = scalar_lea.vmem %s1, %s439
        %s441 = smul.u32 64, %s17
        %s442 = smul.u32 64, %s17
        %p443 = scmp.lt.s32.totalorder %s442, 127
        %s444 = scalar_select %p443, %s442, 127
        %s445 = smul.addr %s444, 2
        %s446 = smul.addr %s445, 4
        %s447 = scalar_lea.vmem %s2, %s446
        %s448 = smul.u32 64, %s17
        %s449 = smul.u32 64, %s17
        %p450 = scmp.lt.s32.totalorder %s449, 127
        %s451 = scalar_select %p450, %s449, 127
        %s452 = smul.addr %s451, 8
        %s453 = scalar_lea.vmem %s3, %s452
        %s454 = smul.u32 64, %s17
        %s455 = smul.u32 4, %s17
        %v456 = vlaneseq
        %v457 = vand.u32 %v456, 127
        %v458 = vadd.s32 %v457, 128
        %vm459 = vcmp.lt.s32.totalorder %v457, 196
        %vm460 = vcmp.lt.s32.totalorder %v458, 196
        %v461 = vld [vmem:[%s447] sm:$0xff]
        %v462 = vld [vmem:[%s447 + $0x8] sm:$0xff]
        %v463 = vld [vmem:[%s447 + $0x10] sm:$0xff]
        %v464 = vld [vmem:[%s447 + $0x18] sm:$0xff]
        %v465 = vld [vmem:[%s447 + $0x20] sm:$0xff]
        %v466 = vld [vmem:[%s447 + $0x28] sm:$0xff]
        %v467 = vld [vmem:[%s447 + $0x30] sm:$0xff]
        %v468 = vld [vmem:[%s447 + $0x38] sm:$0xff]
        %v469 = vld [vmem:[%s447 + $0x40] sm:$0xff]
        %v470 = vld [vmem:[%s447 + $0x48] sm:$0xff]
        %v471 = vld [vmem:[%s447 + $0x50] sm:$0xff]
        %v472 = vld [vmem:[%s447 + $0x58] sm:$0xff]
        %v473 = vld [vmem:[%s447 + $0x60] sm:$0xff]
        %v474 = vld [vmem:[%s447 + $0x68] sm:$0xff]
        %v475 = vld [vmem:[%s447 + $0x70] sm:$0xff]
        %v476 = vld [vmem:[%s447 + $0x78] sm:$0xff]
        %v477 = vld [vmem:[%s447 + $0x80] sm:$0xff]
        %v478 = vld [vmem:[%s447 + $0x88] sm:$0xff]
        %v479 = vld [vmem:[%s447 + $0x90] sm:$0xff]
        %v480 = vld [vmem:[%s447 + $0x98] sm:$0xff]
        %v481 = vld [vmem:[%s447 + $0xa0] sm:$0xff]
        %v482 = vld [vmem:[%s447 + $0xa8] sm:$0xff]
        %v483 = vld [vmem:[%s447 + $0xb0] sm:$0xff]
        %v484 = vld [vmem:[%s447 + $0xb8] sm:$0xff]
        %v485 = vld [vmem:[%s447 + $0xc0] sm:$0xff]
        %v486 = vld [vmem:[%s447 + $0xc8] sm:$0xff]
        %v487 = vld [vmem:[%s447 + $0xd0] sm:$0xff]
        %v488 = vld [vmem:[%s447 + $0xd8] sm:$0xff]
        %v489 = vld [vmem:[%s447 + $0xe0] sm:$0xff]
        %v490 = vld [vmem:[%s447 + $0xe8] sm:$0xff]
        %v491 = vld [vmem:[%s447 + $0xf0] sm:$0xff]
        %v492 = vld [vmem:[%s447 + $0xf8] sm:$0xff]
        %v493 = vld [vmem:[%s447 + $0x100] sm:$0xff]
        %v494 = vld [vmem:[%s447 + $0x108] sm:$0xff]
        %v495 = vld [vmem:[%s447 + $0x110] sm:$0xff]
        %v496 = vld [vmem:[%s447 + $0x118] sm:$0xff]
        %v497 = vld [vmem:[%s447 + $0x120] sm:$0xff]
        %v498 = vld [vmem:[%s447 + $0x128] sm:$0xff]
        %v499 = vld [vmem:[%s447 + $0x130] sm:$0xff]
        %v500 = vld [vmem:[%s447 + $0x138] sm:$0xff]
        %v501 = vld [vmem:[%s447 + $0x140] sm:$0xff]
        %v502 = vld [vmem:[%s447 + $0x148] sm:$0xff]
        %v503 = vld [vmem:[%s447 + $0x150] sm:$0xff]
        %v504 = vld [vmem:[%s447 + $0x158] sm:$0xff]
        %v505 = vld [vmem:[%s447 + $0x160] sm:$0xff]
        %v506 = vld [vmem:[%s447 + $0x168] sm:$0xff]
        %v507 = vld [vmem:[%s447 + $0x170] sm:$0xff]
        %v508 = vld [vmem:[%s447 + $0x178] sm:$0xff]
        %v509 = vld [vmem:[%s447 + $0x180] sm:$0xff]
        %v510 = vld [vmem:[%s447 + $0x188] sm:$0xff]
        %v511 = vld [vmem:[%s447 + $0x190] sm:$0xff]
        %v512 = vld [vmem:[%s447 + $0x198] sm:$0xff]
        %v513 = vld [vmem:[%s447 + $0x1a0] sm:$0xff]
        %v514 = vld [vmem:[%s447 + $0x1a8] sm:$0xff]
        %v515 = vld [vmem:[%s447 + $0x1b0] sm:$0xff]
        %v516 = vld [vmem:[%s447 + $0x1b8] sm:$0xff]
        %v517 = vld [vmem:[%s447 + $0x1c0] sm:$0xff]
        %v518 = vld [vmem:[%s447 + $0x1c8] sm:$0xff]
        %v519 = vld [vmem:[%s447 + $0x1d0] sm:$0xff]
        %v520 = vld [vmem:[%s447 + $0x1d8] sm:$0xff]
        %v521 = vld [vmem:[%s447 + $0x1e0] sm:$0xff]
        %v522 = vld [vmem:[%s447 + $0x1e8] sm:$0xff]
        %v523 = vld [vmem:[%s447 + $0x1f0] sm:$0xff]
        %v524 = vld [vmem:[%s447 + $0x1f8] sm:$0xff]
        %v525 = vld [vmem:[%s0] sm:$0xff]
        %v526 = vld [vmem:[%s0 + $0x8] sm:$0xff]
        %v527 = vld [vmem:[%s0 + $0x10] sm:$0xff]
        %v528 = vld [vmem:[%s0 + $0x18] sm:$0xff]
        %v529 = vld [vmem:[%s0 + $0x20] sm:$0xff]
        %v530 = vld [vmem:[%s0 + $0x28] sm:$0xff]
        %v531 = vld [vmem:[%s0 + $0x30] sm:$0xff]
        %v532 = vld [vmem:[%s0 + $0x38] sm:$0xff]
        %v533 = vld [vmem:[%s0 + $0x40] sm:$0xff]
        %v534 = vld [vmem:[%s0 + $0x48] sm:$0xff]
        %v535 = vld [vmem:[%s0 + $0x50] sm:$0xff]
        %v536 = vld [vmem:[%s0 + $0x58] sm:$0xff]
        %v537 = vld [vmem:[%s0 + $0x60] sm:$0xff]
        %v538 = vld [vmem:[%s0 + $0x68] sm:$0xff]
        %v539 = vld [vmem:[%s0 + $0x70] sm:$0xff]
        %v540 = vld [vmem:[%s0 + $0x78] sm:$0xff]
        %v541 = vld [vmem:[%s0 + $0x80] sm:$0xff]
        %v542 = vld [vmem:[%s0 + $0x88] sm:$0xff]
        %v543 = vld [vmem:[%s0 + $0x90] sm:$0xff]
        %v544 = vld [vmem:[%s0 + $0x98] sm:$0xff]
        %v545 = vld [vmem:[%s0 + $0xa0] sm:$0xff]
        %v546 = vld [vmem:[%s0 + $0xa8] sm:$0xff]
        %v547 = vld [vmem:[%s0 + $0xb0] sm:$0xff]
        %v548 = vld [vmem:[%s0 + $0xb8] sm:$0xff]
        %v549 = vld [vmem:[%s0 + $0xc0] sm:$0xff]
        %v550 = vld [vmem:[%s0 + $0xc8] sm:$0xff]
        %v551 = vld [vmem:[%s0 + $0xd0] sm:$0xff]
        %v552 = vld [vmem:[%s0 + $0xd8] sm:$0xff]
        %v553 = vld [vmem:[%s0 + $0xe0] sm:$0xff]
        %v554 = vld [vmem:[%s0 + $0xe8] sm:$0xff]
        %v555 = vld [vmem:[%s0 + $0xf0] sm:$0xff]
        %v556 = vld [vmem:[%s0 + $0xf8] sm:$0xff]
        %v621 = vunpack.c.l.b16 %v461
        %v622 = vunpack.c.h.b16 %v461
        %v623 = vunpack.c.l.b16 %v462
        %v624 = vunpack.c.h.b16 %v462
        %v625 = vunpack.c.l.b16 %v463
        %v626 = vunpack.c.h.b16 %v463
        %v627 = vunpack.c.l.b16 %v464
        %v628 = vunpack.c.h.b16 %v464
        %v629 = vunpack.c.l.b16 %v465
        %v630 = vunpack.c.h.b16 %v465
        %v631 = vunpack.c.l.b16 %v466
        %v632 = vunpack.c.h.b16 %v466
        %v633 = vunpack.c.l.b16 %v467
        %v634 = vunpack.c.h.b16 %v467
        %v635 = vunpack.c.l.b16 %v468
        %v636 = vunpack.c.h.b16 %v468
        %v637 = vunpack.c.l.b16 %v469
        %v638 = vunpack.c.h.b16 %v469
        %v639 = vunpack.c.l.b16 %v470
        %v640 = vunpack.c.h.b16 %v470
        %v641 = vunpack.c.l.b16 %v471
        %v642 = vunpack.c.h.b16 %v471
        %v643 = vunpack.c.l.b16 %v472
        %v644 = vunpack.c.h.b16 %v472
        %v645 = vunpack.c.l.b16 %v473
        %v646 = vunpack.c.h.b16 %v473
        %v647 = vunpack.c.l.b16 %v474
        %v648 = vunpack.c.h.b16 %v474
        %v649 = vunpack.c.l.b16 %v475
        %v650 = vunpack.c.h.b16 %v475
        %v651 = vunpack.c.l.b16 %v476
        %v652 = vunpack.c.h.b16 %v476
        %v653 = vunpack.c.l.b16 %v477
        %v654 = vunpack.c.h.b16 %v477
        %v655 = vunpack.c.l.b16 %v478
        %v656 = vunpack.c.h.b16 %v478
        %v657 = vunpack.c.l.b16 %v479
        %v658 = vunpack.c.h.b16 %v479
        %v659 = vunpack.c.l.b16 %v480
        %v660 = vunpack.c.h.b16 %v480
        %v661 = vunpack.c.l.b16 %v481
        %v662 = vunpack.c.h.b16 %v481
        %v663 = vunpack.c.l.b16 %v482
        %v664 = vunpack.c.h.b16 %v482
        %v665 = vunpack.c.l.b16 %v483
        %v666 = vunpack.c.h.b16 %v483
        %v667 = vunpack.c.l.b16 %v484
        %v668 = vunpack.c.h.b16 %v484
        %v669 = vunpack.c.l.b16 %v485
        %v670 = vunpack.c.h.b16 %v485
        %v671 = vunpack.c.l.b16 %v486
        %v672 = vunpack.c.h.b16 %v486
        %v673 = vunpack.c.l.b16 %v487
        %v674 = vunpack.c.h.b16 %v487
        %v675 = vunpack.c.l.b16 %v488
        %v676 = vunpack.c.h.b16 %v488
        %v677 = vunpack.c.l.b16 %v489
        %v678 = vunpack.c.h.b16 %v489
        %v679 = vunpack.c.l.b16 %v490
        %v680 = vunpack.c.h.b16 %v490
        %v681 = vunpack.c.l.b16 %v491
        %v682 = vunpack.c.h.b16 %v491
        %v683 = vunpack.c.l.b16 %v492
        %v684 = vunpack.c.h.b16 %v492
        %v685 = vunpack.c.l.b16 %v493
        %v686 = vunpack.c.h.b16 %v493
        %v687 = vunpack.c.l.b16 %v494
        %v688 = vunpack.c.h.b16 %v494
        %v689 = vunpack.c.l.b16 %v495
        %v690 = vunpack.c.h.b16 %v495
        %v691 = vunpack.c.l.b16 %v496
        %v692 = vunpack.c.h.b16 %v496
        %v693 = vunpack.c.l.b16 %v497
        %v694 = vunpack.c.h.b16 %v497
        %v695 = vunpack.c.l.b16 %v498
        %v696 = vunpack.c.h.b16 %v498
        %v697 = vunpack.c.l.b16 %v499
        %v698 = vunpack.c.h.b16 %v499
        %v699 = vunpack.c.l.b16 %v500
        %v700 = vunpack.c.h.b16 %v500
        %v701 = vunpack.c.l.b16 %v501
        %v702 = vunpack.c.h.b16 %v501
        %v703 = vunpack.c.l.b16 %v502
        %v704 = vunpack.c.h.b16 %v502
        %v705 = vunpack.c.l.b16 %v503
        %v706 = vunpack.c.h.b16 %v503
        %v707 = vunpack.c.l.b16 %v504
        %v708 = vunpack.c.h.b16 %v504
        %v709 = vunpack.c.l.b16 %v505
        %v710 = vunpack.c.h.b16 %v505
        %v711 = vunpack.c.l.b16 %v506
        %v712 = vunpack.c.h.b16 %v506
        %v713 = vunpack.c.l.b16 %v507
        %v714 = vunpack.c.h.b16 %v507
        %v715 = vunpack.c.l.b16 %v508
        %v716 = vunpack.c.h.b16 %v508
        %v717 = vunpack.c.l.b16 %v509
        %v718 = vunpack.c.h.b16 %v509
        %v719 = vunpack.c.l.b16 %v510
        %v720 = vunpack.c.h.b16 %v510
        %v721 = vunpack.c.l.b16 %v511
        %v722 = vunpack.c.h.b16 %v511
        %v723 = vunpack.c.l.b16 %v512
        %v724 = vunpack.c.h.b16 %v512
        %v725 = vunpack.c.l.b16 %v513
        %v726 = vunpack.c.h.b16 %v513
        %v727 = vunpack.c.l.b16 %v514
        %v728 = vunpack.c.h.b16 %v514
        %v729 = vunpack.c.l.b16 %v515
        %v730 = vunpack.c.h.b16 %v515
        %v731 = vunpack.c.l.b16 %v516
        %v732 = vunpack.c.h.b16 %v516
        %v733 = vunpack.c.l.b16 %v517
        %v734 = vunpack.c.h.b16 %v517
        %v735 = vunpack.c.l.b16 %v518
        %v736 = vunpack.c.h.b16 %v518
        %v737 = vunpack.c.l.b16 %v519
        %v738 = vunpack.c.h.b16 %v519
        %v739 = vunpack.c.l.b16 %v520
        %v740 = vunpack.c.h.b16 %v520
        %v741 = vunpack.c.l.b16 %v521
        %v742 = vunpack.c.h.b16 %v521
        %v743 = vunpack.c.l.b16 %v522
        %v744 = vunpack.c.h.b16 %v522
        %v745 = vunpack.c.l.b16 %v523
        %v746 = vunpack.c.h.b16 %v523
        %v747 = vunpack.c.l.b16 %v524
        %v748 = vunpack.c.h.b16 %v524
        %v749 = vpack.c.b16 %v623, %v621
        %v750 = vpack.c.b16 %v624, %v622
        %v751 = vpack.c.b16 %v627, %v625
        %v752 = vpack.c.b16 %v628, %v626
        %v753 = vpack.c.b16 %v631, %v629
        %v754 = vpack.c.b16 %v632, %v630
        %v755 = vpack.c.b16 %v635, %v633
        %v756 = vpack.c.b16 %v636, %v634
        %v757 = vpack.c.b16 %v639, %v637
        %v758 = vpack.c.b16 %v640, %v638
        %v759 = vpack.c.b16 %v643, %v641
        %v760 = vpack.c.b16 %v644, %v642
        %v761 = vpack.c.b16 %v647, %v645
        %v762 = vpack.c.b16 %v648, %v646
        %v763 = vpack.c.b16 %v651, %v649
        %v764 = vpack.c.b16 %v652, %v650
        %v765 = vpack.c.b16 %v655, %v653
        %v766 = vpack.c.b16 %v656, %v654
        %v767 = vpack.c.b16 %v659, %v657
        %v768 = vpack.c.b16 %v660, %v658
        %v769 = vpack.c.b16 %v663, %v661
        %v770 = vpack.c.b16 %v664, %v662
        %v771 = vpack.c.b16 %v667, %v665
        %v772 = vpack.c.b16 %v668, %v666
        %v773 = vpack.c.b16 %v671, %v669
        %v774 = vpack.c.b16 %v672, %v670
        %v775 = vpack.c.b16 %v675, %v673
        %v776 = vpack.c.b16 %v676, %v674
        %v777 = vpack.c.b16 %v679, %v677
        %v778 = vpack.c.b16 %v680, %v678
        %v779 = vpack.c.b16 %v683, %v681
        %v780 = vpack.c.b16 %v684, %v682
        %v781 = vpack.c.b16 %v687, %v685
        %v782 = vpack.c.b16 %v688, %v686
        %v783 = vpack.c.b16 %v691, %v689
        %v784 = vpack.c.b16 %v692, %v690
        %v785 = vpack.c.b16 %v695, %v693
        %v786 = vpack.c.b16 %v696, %v694
        %v787 = vpack.c.b16 %v699, %v697
        %v788 = vpack.c.b16 %v700, %v698
        %v789 = vpack.c.b16 %v703, %v701
        %v790 = vpack.c.b16 %v704, %v702
        %v791 = vpack.c.b16 %v707, %v705
        %v792 = vpack.c.b16 %v708, %v706
        %v793 = vpack.c.b16 %v711, %v709
        %v794 = vpack.c.b16 %v712, %v710
        %v795 = vpack.c.b16 %v715, %v713
        %v796 = vpack.c.b16 %v716, %v714
        %v797 = vpack.c.b16 %v719, %v717
        %v798 = vpack.c.b16 %v720, %v718
        %v799 = vpack.c.b16 %v723, %v721
        %v800 = vpack.c.b16 %v724, %v722
        %v801 = vpack.c.b16 %v727, %v725
        %v802 = vpack.c.b16 %v728, %v726
        %v803 = vpack.c.b16 %v731, %v729
        %v804 = vpack.c.b16 %v732, %v730
        %v805 = vpack.c.b16 %v735, %v733
        %v806 = vpack.c.b16 %v736, %v734
        %v807 = vpack.c.b16 %v739, %v737
        %v808 = vpack.c.b16 %v740, %v738
        %v809 = vpack.c.b16 %v743, %v741
        %v810 = vpack.c.b16 %v744, %v742
        %v811 = vpack.c.b16 %v747, %v745
        %v812 = vpack.c.b16 %v748, %v746
        %v909 = vunpack.c.l.b16 %v525
        %v910 = vunpack.c.h.b16 %v525
        %v911 = vunpack.c.l.b16 %v526
        %v912 = vunpack.c.h.b16 %v526
        %v913 = vunpack.c.l.b16 %v527
        %v914 = vunpack.c.h.b16 %v527
        %v915 = vunpack.c.l.b16 %v528
        %v916 = vunpack.c.h.b16 %v528
        %v917 = vunpack.c.l.b16 %v529
        %v918 = vunpack.c.h.b16 %v529
        %v919 = vunpack.c.l.b16 %v530
        %v920 = vunpack.c.h.b16 %v530
        %v921 = vunpack.c.l.b16 %v531
        %v922 = vunpack.c.h.b16 %v531
        %v923 = vunpack.c.l.b16 %v532
        %v924 = vunpack.c.h.b16 %v532
        %v925 = vunpack.c.l.b16 %v533
        %v926 = vunpack.c.h.b16 %v533
        %v927 = vunpack.c.l.b16 %v534
        %v928 = vunpack.c.h.b16 %v534
        %v929 = vunpack.c.l.b16 %v535
        %v930 = vunpack.c.h.b16 %v535
        %v931 = vunpack.c.l.b16 %v536
        %v932 = vunpack.c.h.b16 %v536
        %v933 = vunpack.c.l.b16 %v537
        %v934 = vunpack.c.h.b16 %v537
        %v935 = vunpack.c.l.b16 %v538
        %v936 = vunpack.c.h.b16 %v538
        %v937 = vunpack.c.l.b16 %v539
        %v938 = vunpack.c.h.b16 %v539
        %v939 = vunpack.c.l.b16 %v540
        %v940 = vunpack.c.h.b16 %v540
        %v941 = vunpack.c.l.b16 %v541
        %v942 = vunpack.c.h.b16 %v541
        %v943 = vunpack.c.l.b16 %v542
        %v944 = vunpack.c.h.b16 %v542
        %v945 = vunpack.c.l.b16 %v543
        %v946 = vunpack.c.h.b16 %v543
        %v947 = vunpack.c.l.b16 %v544
        %v948 = vunpack.c.h.b16 %v544
        %v949 = vunpack.c.l.b16 %v545
        %v950 = vunpack.c.h.b16 %v545
        %v951 = vunpack.c.l.b16 %v546
        %v952 = vunpack.c.h.b16 %v546
        %v953 = vunpack.c.l.b16 %v547
        %v954 = vunpack.c.h.b16 %v547
        %v955 = vunpack.c.l.b16 %v548
        %v956 = vunpack.c.h.b16 %v548
        %v957 = vunpack.c.l.b16 %v549
        %v958 = vunpack.c.h.b16 %v549
        %v959 = vunpack.c.l.b16 %v550
        %v960 = vunpack.c.h.b16 %v550
        %v961 = vunpack.c.l.b16 %v551
        %v962 = vunpack.c.h.b16 %v551
        %v963 = vunpack.c.l.b16 %v552
        %v964 = vunpack.c.h.b16 %v552
        %v965 = vunpack.c.l.b16 %v553
        %v966 = vunpack.c.h.b16 %v553
        %v967 = vunpack.c.l.b16 %v554
        %v968 = vunpack.c.h.b16 %v554
        %v969 = vunpack.c.l.b16 %v555
        %v970 = vunpack.c.h.b16 %v555
        %v971 = vunpack.c.l.b16 %v556
        %v972 = vunpack.c.h.b16 %v556
        %v973 = vpack.c.b16 %v911, %v909
        %v974 = vpack.c.b16 %v912, %v910
        %v975 = vpack.c.b16 %v915, %v913
        %v976 = vpack.c.b16 %v916, %v914
        %v977 = vpack.c.b16 %v919, %v917
        %v978 = vpack.c.b16 %v920, %v918
        %v979 = vpack.c.b16 %v923, %v921
        %v980 = vpack.c.b16 %v924, %v922
        %v981 = vpack.c.b16 %v927, %v925
        %v982 = vpack.c.b16 %v928, %v926
        %v983 = vpack.c.b16 %v931, %v929
        %v984 = vpack.c.b16 %v932, %v930
        %v985 = vpack.c.b16 %v935, %v933
        %v986 = vpack.c.b16 %v936, %v934
        %v987 = vpack.c.b16 %v939, %v937
        %v988 = vpack.c.b16 %v940, %v938
        %v989 = vpack.c.b16 %v943, %v941
        %v990 = vpack.c.b16 %v944, %v942
        %v991 = vpack.c.b16 %v947, %v945
        %v992 = vpack.c.b16 %v948, %v946
        %v993 = vpack.c.b16 %v951, %v949
        %v994 = vpack.c.b16 %v952, %v950
        %v995 = vpack.c.b16 %v955, %v953
        %v996 = vpack.c.b16 %v956, %v954
        %v997 = vpack.c.b16 %v959, %v957
        %v998 = vpack.c.b16 %v960, %v958
        %v999 = vpack.c.b16 %v963, %v961
        %v1000 = vpack.c.b16 %v964, %v962
        %v1001 = vpack.c.b16 %v967, %v965
        %v1002 = vpack.c.b16 %v968, %v966
        %v1003 = vpack.c.b16 %v971, %v969
        %v1004 = vpack.c.b16 %v972, %v970
        %1037 = vmatprep.subr.bf16.mxu0 %v974
        %1038 = vmatpush1.bf16.msra.mxu0 %v973
        %1039 = vmatprep.subr.bf16.mxu0 %v976
        %1040 = vmatpush1.bf16.msra.mxu0 %v975
        %1041 = vmatprep.subr.bf16.mxu0 %v978
        %1042 = vmatpush1.bf16.msra.mxu0 %v977
        %1043 = vmatprep.subr.bf16.mxu0 %v980
        %1044 = vmatpush1.bf16.msra.mxu0 %v979
        %1045 = vmatprep.subr.bf16.mxu0 %v982
        %1046 = vmatpush1.bf16.msra.mxu0 %v981
        %1047 = vmatprep.subr.bf16.mxu0 %v984
        %1048 = vmatpush1.bf16.msra.mxu0 %v983
        %1049 = vmatprep.subr.bf16.mxu0 %v986
        %1050 = vmatpush1.bf16.msra.mxu0 %v985
        %1051 = vmatprep.subr.bf16.mxu0 %v988
        %1052 = vmatpush1.bf16.msra.mxu0 %v987
        %1053 = vmatprep.subr.bf16.mxu0 %v990
        %1054 = vmatpush1.bf16.msra.mxu0 %v989
        %1055 = vmatprep.subr.bf16.mxu0 %v992
        %1056 = vmatpush1.bf16.msra.mxu0 %v991
        %1057 = vmatprep.subr.bf16.mxu0 %v994
        %1058 = vmatpush1.bf16.msra.mxu0 %v993
        %1059 = vmatprep.subr.bf16.mxu0 %v996
        %1060 = vmatpush1.bf16.msra.mxu0 %v995
        %1061 = vmatprep.subr.bf16.mxu0 %v998
        %1062 = vmatpush1.bf16.msra.mxu0 %v997
        %1063 = vmatprep.subr.bf16.mxu0 %v1000
        %1064 = vmatpush1.bf16.msra.mxu0 %v999
        %1065 = vmatprep.subr.bf16.mxu0 %v1002
        %1066 = vmatpush1.bf16.msra.mxu0 %v1001
        %1067 = vmatprep.subr.bf16.mxu0 %v1004
        %1068 = vmatpush1.bf16.msra.mxu0 %v1003
        %1069 = vmatprep.mubr.bf16.mxu0 %v750
        %1070 = vmatmul.mubr.bf16.gmra.mrb[0].mxu0 %v749
        %v1071 = vpop.f32.mrb[0].mxu0
        %v1072 = vadd.f32 0.0, %v1071
        %v1073 = vpop.f32.mrb[0].mxu0
        %v1074 = vadd.f32 0.0, %v1073
        %v1075 = vpop.f32.mrb[0].mxu0
        %v1076 = vadd.f32 0.0, %v1075
        %v1077 = vpop.f32.mrb[0].mxu0
        %v1078 = vadd.f32 0.0, %v1077
        %1079 = vmatprep.mubr.bf16.mxu0 %v752
        %1080 = vmatmul.mubr.bf16.gmra.mrb[0].mxu0 %v751
        %v1081 = vpop.f32.mrb[0].mxu0
        %v1082 = vadd.f32 0.0, %v1081
        %v1083 = vpop.f32.mrb[0].mxu0
        %v1084 = vadd.f32 0.0, %v1083
        %v1085 = vpop.f32.mrb[0].mxu0
        %v1086 = vadd.f32 0.0, %v1085
        %v1087 = vpop.f32.mrb[0].mxu0
        %v1088 = vadd.f32 0.0, %v1087
        %1089 = vmatprep.mubr.bf16.mxu0 %v754
        %1090 = vmatmul.mubr.bf16.gmra.mrb[0].mxu0 %v753
        %v1091 = vpop.f32.mrb[0].mxu0
        %v1092 = vadd.f32 0.0, %v1091
        %v1093 = vpop.f32.mrb[0].mxu0
        %v1094 = vadd.f32 0.0, %v1093
        %v1095 = vpop.f32.mrb[0].mxu0
        %v1096 = vadd.f32 0.0, %v1095
        %v1097 = vpop.f32.mrb[0].mxu0
        %v1098 = vadd.f32 0.0, %v1097
        %1099 = vmatprep.mubr.bf16.mxu0 %v756
        %1100 = vmatmul.mubr.bf16.gmra.mrb[0].mxu0 %v755
        %v1101 = vpop.f32.mrb[0].mxu0
        %v1102 = vadd.f32 0.0, %v1101
        %v1103 = vpop.f32.mrb[0].mxu0
        %v1104 = vadd.f32 0.0, %v1103
        %v1105 = vpop.f32.mrb[0].mxu0
        %v1106 = vadd.f32 0.0, %v1105
        %v1107 = vpop.f32.mrb[0].mxu0
        %v1108 = vadd.f32 0.0, %v1107
        %1109 = vmatprep.mubr.bf16.mxu0 %v758
        %1110 = vmatmul.mubr.bf16.gmra.mrb[0].mxu0 %v757
        %v1111 = vpop.f32.mrb[0].mxu0
        %v1112 = vadd.f32 0.0, %v1111
        %v1113 = vpop.f32.mrb[0].mxu0
        %v1114 = vadd.f32 0.0, %v1113
        %v1115 = vpop.f32.mrb[0].mxu0
        %v1116 = vadd.f32 0.0, %v1115
        %v1117 = vpop.f32.mrb[0].mxu0
        %v1118 = vadd.f32 0.0, %v1117
        %1119 = vmatprep.mubr.bf16.mxu0 %v760
        %1120 = vmatmul.mubr.bf16.gmra.mrb[0].mxu0 %v759
        %v1121 = vpop.f32.mrb[0].mxu0
        %v1122 = vadd.f32 0.0, %v1121
        %v1123 = vpop.f32.mrb[0].mxu0
        %v1124 = vadd.f32 0.0, %v1123
        %v1125 = vpop.f32.mrb[0].mxu0
        %v1126 = vadd.f32 0.0, %v1125
        %v1127 = vpop.f32.mrb[0].mxu0
        %v1128 = vadd.f32 0.0, %v1127
        %1129 = vmatprep.mubr.bf16.mxu0 %v762
        %1130 = vmatmul.mubr.bf16.gmra.mrb[0].mxu0 %v761
        %v1131 = vpop.f32.mrb[0].mxu0
        %v1132 = vadd.f32 0.0, %v1131
        %v1133 = vpop.f32.mrb[0].mxu0
        %v1134 = vadd.f32 0.0, %v1133
        %v1135 = vpop.f32.mrb[0].mxu0
        %v1136 = vadd.f32 0.0, %v1135
        %v1137 = vpop.f32.mrb[0].mxu0
        %v1138 = vadd.f32 0.0, %v1137
        %1139 = vmatprep.mubr.bf16.mxu0 %v764
        %1140 = vmatmul.mubr.bf16.gmra.mrb[0].mxu0 %v763
        %v1141 = vpop.f32.mrb[0].mxu0
        %v1142 = vadd.f32 0.0, %v1141
        %v1143 = vpop.f32.mrb[0].mxu0
        %v1144 = vadd.f32 0.0, %v1143
        %v1145 = vpop.f32.mrb[0].mxu0
        %v1146 = vadd.f32 0.0, %v1145
        %v1147 = vpop.f32.mrb[0].mxu0
        %v1148 = vadd.f32 0.0, %v1147
        %1149 = vmatprep.mubr.bf16.mxu0 %v766
        %1150 = vmatmul.mubr.bf16.gmra.mrb[0].mxu0 %v765
        %v1151 = vpop.f32.mrb[0].mxu0
        %v1152 = vadd.f32 0.0, %v1151
        %v1153 = vpop.f32.mrb[0].mxu0
        %v1154 = vadd.f32 0.0, %v1153
        %v1155 = vpop.f32.mrb[0].mxu0
        %v1156 = vadd.f32 0.0, %v1155
        %v1157 = vpop.f32.mrb[0].mxu0
        %v1158 = vadd.f32 0.0, %v1157
        %1159 = vmatprep.mubr.bf16.mxu0 %v768
        %1160 = vmatmul.mubr.bf16.gmra.mrb[0].mxu0 %v767
        %v1161 = vpop.f32.mrb[0].mxu0
        %v1162 = vadd.f32 0.0, %v1161
        %v1163 = vpop.f32.mrb[0].mxu0
        %v1164 = vadd.f32 0.0, %v1163
        %v1165 = vpop.f32.mrb[0].mxu0
        %v1166 = vadd.f32 0.0, %v1165
        %v1167 = vpop.f32.mrb[0].mxu0
        %v1168 = vadd.f32 0.0, %v1167
        %1169 = vmatprep.mubr.bf16.mxu0 %v770
        %1170 = vmatmul.mubr.bf16.gmra.mrb[0].mxu0 %v769
        %v1171 = vpop.f32.mrb[0].mxu0
        %v1172 = vadd.f32 0.0, %v1171
        %v1173 = vpop.f32.mrb[0].mxu0
        %v1174 = vadd.f32 0.0, %v1173
        %v1175 = vpop.f32.mrb[0].mxu0
        %v1176 = vadd.f32 0.0, %v1175
        %v1177 = vpop.f32.mrb[0].mxu0
        %v1178 = vadd.f32 0.0, %v1177
        %1179 = vmatprep.mubr.bf16.mxu0 %v772
        %1180 = vmatmul.mubr.bf16.gmra.mrb[0].mxu0 %v771
        %v1181 = vpop.f32.mrb[0].mxu0
        %v1182 = vadd.f32 0.0, %v1181
        %v1183 = vpop.f32.mrb[0].mxu0
        %v1184 = vadd.f32 0.0, %v1183
        %v1185 = vpop.f32.mrb[0].mxu0
        %v1186 = vadd.f32 0.0, %v1185
        %v1187 = vpop.f32.mrb[0].mxu0
        %v1188 = vadd.f32 0.0, %v1187
        %1189 = vmatprep.mubr.bf16.mxu0 %v774
        %1190 = vmatmul.mubr.bf16.gmra.mrb[0].mxu0 %v773
        %v1191 = vpop.f32.mrb[0].mxu0
        %v1192 = vadd.f32 0.0, %v1191
        %v1193 = vpop.f32.mrb[0].mxu0
        %v1194 = vadd.f32 0.0, %v1193
        %v1195 = vpop.f32.mrb[0].mxu0
        %v1196 = vadd.f32 0.0, %v1195
        %v1197 = vpop.f32.mrb[0].mxu0
        %v1198 = vadd.f32 0.0, %v1197
        %1199 = vmatprep.mubr.bf16.mxu0 %v776
        %1200 = vmatmul.mubr.bf16.gmra.mrb[0].mxu0 %v775
        %v1201 = vpop.f32.mrb[0].mxu0
        %v1202 = vadd.f32 0.0, %v1201
        %v1203 = vpop.f32.mrb[0].mxu0
        %v1204 = vadd.f32 0.0, %v1203
        %v1205 = vpop.f32.mrb[0].mxu0
        %v1206 = vadd.f32 0.0, %v1205
        %v1207 = vpop.f32.mrb[0].mxu0
        %v1208 = vadd.f32 0.0, %v1207
        %1209 = vmatprep.mubr.bf16.mxu0 %v778
        %1210 = vmatmul.mubr.bf16.gmra.mrb[0].mxu0 %v777
        %v1211 = vpop.f32.mrb[0].mxu0
        %v1212 = vadd.f32 0.0, %v1211
        %v1213 = vpop.f32.mrb[0].mxu0
        %v1214 = vadd.f32 0.0, %v1213
        %v1215 = vpop.f32.mrb[0].mxu0
        %v1216 = vadd.f32 0.0, %v1215
        %v1217 = vpop.f32.mrb[0].mxu0
        %v1218 = vadd.f32 0.0, %v1217
        %1219 = vmatprep.mubr.bf16.mxu0 %v780
        %1220 = vmatmul.mubr.bf16.gmra.mrb[0].mxu0 %v779
        %v1221 = vpop.f32.mrb[0].mxu0
        %v1222 = vadd.f32 0.0, %v1221
        %v1223 = vpop.f32.mrb[0].mxu0
        %v1224 = vadd.f32 0.0, %v1223
        %v1225 = vpop.f32.mrb[0].mxu0
        %v1226 = vadd.f32 0.0, %v1225
        %v1227 = vpop.f32.mrb[0].mxu0
        %v1228 = vadd.f32 0.0, %v1227
        %1229 = vmatprep.mubr.bf16.mxu0 %v782
        %1230 = vmatmul.mubr.bf16.gmra.mrb[0].mxu0 %v781
        %v1231 = vpop.f32.mrb[0].mxu0
        %v1232 = vadd.f32 0.0, %v1231
        %v1233 = vpop.f32.mrb[0].mxu0
        %v1234 = vadd.f32 0.0, %v1233
        %v1235 = vpop.f32.mrb[0].mxu0
        %v1236 = vadd.f32 0.0, %v1235
        %v1237 = vpop.f32.mrb[0].mxu0
        %v1238 = vadd.f32 0.0, %v1237
        %1239 = vmatprep.mubr.bf16.mxu0 %v784
        %1240 = vmatmul.mubr.bf16.gmra.mrb[0].mxu0 %v783
        %v1241 = vpop.f32.mrb[0].mxu0
        %v1242 = vadd.f32 0.0, %v1241
        %v1243 = vpop.f32.mrb[0].mxu0
        %v1244 = vadd.f32 0.0, %v1243
        %v1245 = vpop.f32.mrb[0].mxu0
        %v1246 = vadd.f32 0.0, %v1245
        %v1247 = vpop.f32.mrb[0].mxu0
        %v1248 = vadd.f32 0.0, %v1247
        %1249 = vmatprep.mubr.bf16.mxu0 %v786
        %1250 = vmatmul.mubr.bf16.gmra.mrb[0].mxu0 %v785
        %v1251 = vpop.f32.mrb[0].mxu0
        %v1252 = vadd.f32 0.0, %v1251
        %v1253 = vpop.f32.mrb[0].mxu0
        %v1254 = vadd.f32 0.0, %v1253
        %v1255 = vpop.f32.mrb[0].mxu0
        %v1256 = vadd.f32 0.0, %v1255
        %v1257 = vpop.f32.mrb[0].mxu0
        %v1258 = vadd.f32 0.0, %v1257
        %1259 = vmatprep.mubr.bf16.mxu0 %v788
        %1260 = vmatmul.mubr.bf16.gmra.mrb[0].mxu0 %v787
        %v1261 = vpop.f32.mrb[0].mxu0
        %v1262 = vadd.f32 0.0, %v1261
        %v1263 = vpop.f32.mrb[0].mxu0
        %v1264 = vadd.f32 0.0, %v1263
        %v1265 = vpop.f32.mrb[0].mxu0
        %v1266 = vadd.f32 0.0, %v1265
        %v1267 = vpop.f32.mrb[0].mxu0
        %v1268 = vadd.f32 0.0, %v1267
        %1269 = vmatprep.mubr.bf16.mxu0 %v790
        %1270 = vmatmul.mubr.bf16.gmra.mrb[0].mxu0 %v789
        %v1271 = vpop.f32.mrb[0].mxu0
        %v1272 = vadd.f32 0.0, %v1271
        %v1273 = vpop.f32.mrb[0].mxu0
        %v1274 = vadd.f32 0.0, %v1273
        %v1275 = vpop.f32.mrb[0].mxu0
        %v1276 = vadd.f32 0.0, %v1275
        %v1277 = vpop.f32.mrb[0].mxu0
        %v1278 = vadd.f32 0.0, %v1277
        %1279 = vmatprep.mubr.bf16.mxu0 %v792
        %1280 = vmatmul.mubr.bf16.gmra.mrb[0].mxu0 %v791
        %v1281 = vpop.f32.mrb[0].mxu0
        %v1282 = vadd.f32 0.0, %v1281
        %v1283 = vpop.f32.mrb[0].mxu0
        %v1284 = vadd.f32 0.0, %v1283
        %v1285 = vpop.f32.mrb[0].mxu0
        %v1286 = vadd.f32 0.0, %v1285
        %v1287 = vpop.f32.mrb[0].mxu0
        %v1288 = vadd.f32 0.0, %v1287
        %1289 = vmatprep.mubr.bf16.mxu0 %v794
        %1290 = vmatmul.mubr.bf16.gmra.mrb[0].mxu0 %v793
        %v1291 = vpop.f32.mrb[0].mxu0
        %v1292 = vadd.f32 0.0, %v1291
        %v1293 = vpop.f32.mrb[0].mxu0
        %v1294 = vadd.f32 0.0, %v1293
        %v1295 = vpop.f32.mrb[0].mxu0
        %v1296 = vadd.f32 0.0, %v1295
        %v1297 = vpop.f32.mrb[0].mxu0
        %v1298 = vadd.f32 0.0, %v1297
        %1299 = vmatprep.mubr.bf16.mxu0 %v796
        %1300 = vmatmul.mubr.bf16.gmra.mrb[0].mxu0 %v795
        %v1301 = vpop.f32.mrb[0].mxu0
        %v1302 = vadd.f32 0.0, %v1301
        %v1303 = vpop.f32.mrb[0].mxu0
        %v1304 = vadd.f32 0.0, %v1303
        %v1305 = vpop.f32.mrb[0].mxu0
        %v1306 = vadd.f32 0.0, %v1305
        %v1307 = vpop.f32.mrb[0].mxu0
        %v1308 = vadd.f32 0.0, %v1307
        %1309 = vmatprep.mubr.bf16.mxu0 %v798
        %1310 = vmatmul.mubr.bf16.gmra.mrb[0].mxu0 %v797
        %v1311 = vpop.f32.mrb[0].mxu0
        %v1312 = vadd.f32 0.0, %v1311
        %v1313 = vpop.f32.mrb[0].mxu0
        %v1314 = vadd.f32 0.0, %v1313
        %v1315 = vpop.f32.mrb[0].mxu0
        %v1316 = vadd.f32 0.0, %v1315
        %v1317 = vpop.f32.mrb[0].mxu0
        %v1318 = vadd.f32 0.0, %v1317
        %1319 = vmatprep.mubr.bf16.mxu0 %v800
        %1320 = vmatmul.mubr.bf16.gmra.mrb[0].mxu0 %v799
        %v1321 = vpop.f32.mrb[0].mxu0
        %v1322 = vadd.f32 0.0, %v1321
        %v1323 = vpop.f32.mrb[0].mxu0
        %v1324 = vadd.f32 0.0, %v1323
        %v1325 = vpop.f32.mrb[0].mxu0
        %v1326 = vadd.f32 0.0, %v1325
        %v1327 = vpop.f32.mrb[0].mxu0
        %v1328 = vadd.f32 0.0, %v1327
        %1329 = vmatprep.mubr.bf16.mxu0 %v802
        %1330 = vmatmul.mubr.bf16.gmra.mrb[0].mxu0 %v801
        %v1331 = vpop.f32.mrb[0].mxu0
        %v1332 = vadd.f32 0.0, %v1331
        %v1333 = vpop.f32.mrb[0].mxu0
        %v1334 = vadd.f32 0.0, %v1333
        %v1335 = vpop.f32.mrb[0].mxu0
        %v1336 = vadd.f32 0.0, %v1335
        %v1337 = vpop.f32.mrb[0].mxu0
        %v1338 = vadd.f32 0.0, %v1337
        %1339 = vmatprep.mubr.bf16.mxu0 %v804
        %1340 = vmatmul.mubr.bf16.gmra.mrb[0].mxu0 %v803
        %v1341 = vpop.f32.mrb[0].mxu0
        %v1342 = vadd.f32 0.0, %v1341
        %v1343 = vpop.f32.mrb[0].mxu0
        %v1344 = vadd.f32 0.0, %v1343
        %v1345 = vpop.f32.mrb[0].mxu0
        %v1346 = vadd.f32 0.0, %v1345
        %v1347 = vpop.f32.mrb[0].mxu0
        %v1348 = vadd.f32 0.0, %v1347
        %1349 = vmatprep.mubr.bf16.mxu0 %v806
        %1350 = vmatmul.mubr.bf16.gmra.mrb[0].mxu0 %v805
        %v1351 = vpop.f32.mrb[0].mxu0
        %v1352 = vadd.f32 0.0, %v1351
        %v1353 = vpop.f32.mrb[0].mxu0
        %v1354 = vadd.f32 0.0, %v1353
        %v1355 = vpop.f32.mrb[0].mxu0
        %v1356 = vadd.f32 0.0, %v1355
        %v1357 = vpop.f32.mrb[0].mxu0
        %v1358 = vadd.f32 0.0, %v1357
        %1359 = vmatprep.mubr.bf16.mxu0 %v808
        %1360 = vmatmul.mubr.bf16.gmra.mrb[0].mxu0 %v807
        %v1361 = vpop.f32.mrb[0].mxu0
        %v1362 = vadd.f32 0.0, %v1361
        %v1363 = vpop.f32.mrb[0].mxu0
        %v1364 = vadd.f32 0.0, %v1363
        %v1365 = vpop.f32.mrb[0].mxu0
        %v1366 = vadd.f32 0.0, %v1365
        %v1367 = vpop.f32.mrb[0].mxu0
        %v1368 = vadd.f32 0.0, %v1367
        %1369 = vmatprep.mubr.bf16.mxu0 %v810
        %1370 = vmatmul.mubr.bf16.gmra.mrb[0].mxu0 %v809
        %v1371 = vpop.f32.mrb[0].mxu0
        %v1372 = vadd.f32 0.0, %v1371
        %v1373 = vpop.f32.mrb[0].mxu0
        %v1374 = vadd.f32 0.0, %v1373
        %v1375 = vpop.f32.mrb[0].mxu0
        %v1376 = vadd.f32 0.0, %v1375
        %v1377 = vpop.f32.mrb[0].mxu0
        %v1378 = vadd.f32 0.0, %v1377
        %1379 = vmatprep.mubr.bf16.mxu0 %v812
        %1380 = vmatmul.mubr.bf16.gmra.mrb[0].mxu0 %v811
        %v1381 = vpop.f32.mrb[0].mxu0
        %v1382 = vadd.f32 0.0, %v1381
        %v1383 = vpop.f32.mrb[0].mxu0
        %v1384 = vadd.f32 0.0, %v1383
        %v1385 = vpop.f32.mrb[0].mxu0
        %v1386 = vadd.f32 0.0, %v1385
        %v1387 = vpop.f32.mrb[0].mxu0
        %v1388 = vadd.f32 0.0, %v1387
        %1389 = vdwg.mxu0
        %v1390 = vld [vmem:[%s453] sm:$0xff]
        %v1391 = vld [vmem:[%s453 + $0x8] sm:$0xff]
        %v1392 = vld [vmem:[%s453 + $0x10] sm:$0xff]
        %v1393 = vld [vmem:[%s453 + $0x18] sm:$0xff]
        %v1394 = vld [vmem:[%s453 + $0x20] sm:$0xff]
        %v1395 = vld [vmem:[%s453 + $0x28] sm:$0xff]
        %v1396 = vld [vmem:[%s453 + $0x30] sm:$0xff]
        %v1397 = vld [vmem:[%s453 + $0x38] sm:$0xff]
        %v1398 = vld [vmem:[%s453 + $0x40] sm:$0xff]
        %v1399 = vld [vmem:[%s453 + $0x48] sm:$0xff]
        %v1400 = vld [vmem:[%s453 + $0x50] sm:$0xff]
        %v1401 = vld [vmem:[%s453 + $0x58] sm:$0xff]
        %v1402 = vld [vmem:[%s453 + $0x60] sm:$0xff]
        %v1403 = vld [vmem:[%s453 + $0x68] sm:$0xff]
        %v1404 = vld [vmem:[%s453 + $0x70] sm:$0xff]
        %v1405 = vld [vmem:[%s453 + $0x78] sm:$0xff]
        %v1406 = vld [vmem:[%s453 + $0x80] sm:$0xff]
        %v1407 = vld [vmem:[%s453 + $0x88] sm:$0xff]
        %v1408 = vld [vmem:[%s453 + $0x90] sm:$0xff]
        %v1409 = vld [vmem:[%s453 + $0x98] sm:$0xff]
        %v1410 = vld [vmem:[%s453 + $0xa0] sm:$0xff]
        %v1411 = vld [vmem:[%s453 + $0xa8] sm:$0xff]
        %v1412 = vld [vmem:[%s453 + $0xb0] sm:$0xff]
        %v1413 = vld [vmem:[%s453 + $0xb8] sm:$0xff]
        %v1414 = vld [vmem:[%s453 + $0xc0] sm:$0xff]
        %v1415 = vld [vmem:[%s453 + $0xc8] sm:$0xff]
        %v1416 = vld [vmem:[%s453 + $0xd0] sm:$0xff]
        %v1417 = vld [vmem:[%s453 + $0xd8] sm:$0xff]
        %v1418 = vld [vmem:[%s453 + $0xe0] sm:$0xff]
        %v1419 = vld [vmem:[%s453 + $0xe8] sm:$0xff]
        %v1420 = vld [vmem:[%s453 + $0xf0] sm:$0xff]
        %v1421 = vld [vmem:[%s453 + $0xf8] sm:$0xff]
        %v1422 = vld [vmem:[%s453 + $0x100] sm:$0xff]
        %v1423 = vld [vmem:[%s453 + $0x108] sm:$0xff]
        %v1424 = vld [vmem:[%s453 + $0x110] sm:$0xff]
        %v1425 = vld [vmem:[%s453 + $0x118] sm:$0xff]
        %v1426 = vld [vmem:[%s453 + $0x120] sm:$0xff]
        %v1427 = vld [vmem:[%s453 + $0x128] sm:$0xff]
        %v1428 = vld [vmem:[%s453 + $0x130] sm:$0xff]
        %v1429 = vld [vmem:[%s453 + $0x138] sm:$0xff]
        %v1430 = vld [vmem:[%s453 + $0x140] sm:$0xff]
        %v1431 = vld [vmem:[%s453 + $0x148] sm:$0xff]
        %v1432 = vld [vmem:[%s453 + $0x150] sm:$0xff]
        %v1433 = vld [vmem:[%s453 + $0x158] sm:$0xff]
        %v1434 = vld [vmem:[%s453 + $0x160] sm:$0xff]
        %v1435 = vld [vmem:[%s453 + $0x168] sm:$0xff]
        %v1436 = vld [vmem:[%s453 + $0x170] sm:$0xff]
        %v1437 = vld [vmem:[%s453 + $0x178] sm:$0xff]
        %v1438 = vld [vmem:[%s453 + $0x180] sm:$0xff]
        %v1439 = vld [vmem:[%s453 + $0x188] sm:$0xff]
        %v1440 = vld [vmem:[%s453 + $0x190] sm:$0xff]
        %v1441 = vld [vmem:[%s453 + $0x198] sm:$0xff]
        %v1442 = vld [vmem:[%s453 + $0x1a0] sm:$0xff]
        %v1443 = vld [vmem:[%s453 + $0x1a8] sm:$0xff]
        %v1444 = vld [vmem:[%s453 + $0x1b0] sm:$0xff]
        %v1445 = vld [vmem:[%s453 + $0x1b8] sm:$0xff]
        %v1446 = vld [vmem:[%s453 + $0x1c0] sm:$0xff]
        %v1447 = vld [vmem:[%s453 + $0x1c8] sm:$0xff]
        %v1448 = vld [vmem:[%s453 + $0x1d0] sm:$0xff]
        %v1449 = vld [vmem:[%s453 + $0x1d8] sm:$0xff]
        %v1450 = vld [vmem:[%s453 + $0x1e0] sm:$0xff]
        %v1451 = vld [vmem:[%s453 + $0x1e8] sm:$0xff]
        %v1452 = vld [vmem:[%s453 + $0x1f0] sm:$0xff]
        %v1453 = vld [vmem:[%s453 + $0x1f8] sm:$0xff]
        %v1454 = vadd.f32 %v1072, %v1074
        %1455 = vadd.xlane.f32.xlu0 %v1454
        %v1456 = vpop.xlane.xlu0 %1455
        %v1457 = vadd.f32 %v1076, %v1078
        %1458 = vadd.xlane.f32.xlu0 %v1457
        %v1459 = vpop.xlane.xlu0 %1458
        %v1460 = vadd.f32 %v1082, %v1084
        %1461 = vadd.xlane.f32.xlu0 %v1460
        %v1462 = vpop.xlane.xlu0 %1461
        %v1463 = vadd.f32 %v1086, %v1088
        %1464 = vadd.xlane.f32.xlu0 %v1463
        %v1465 = vpop.xlane.xlu0 %1464
        %v1466 = vadd.f32 %v1092, %v1094
        %1467 = vadd.xlane.f32.xlu0 %v1466
        %v1468 = vpop.xlane.xlu0 %1467
        %v1469 = vadd.f32 %v1096, %v1098
        %1470 = vadd.xlane.f32.xlu0 %v1469
        %v1471 = vpop.xlane.xlu0 %1470
        %v1472 = vadd.f32 %v1102, %v1104
        %1473 = vadd.xlane.f32.xlu0 %v1472
        %v1474 = vpop.xlane.xlu0 %1473
        %v1475 = vadd.f32 %v1106, %v1108
        %1476 = vadd.xlane.f32.xlu0 %v1475
        %v1477 = vpop.xlane.xlu0 %1476
        %v1478 = vadd.f32 %v1112, %v1114
        %1479 = vadd.xlane.f32.xlu0 %v1478
        %v1480 = vpop.xlane.xlu0 %1479
        %v1481 = vadd.f32 %v1116, %v1118
        %1482 = vadd.xlane.f32.xlu0 %v1481
        %v1483 = vpop.xlane.xlu0 %1482
        %v1484 = vadd.f32 %v1122, %v1124
        %1485 = vadd.xlane.f32.xlu0 %v1484
        %v1486 = vpop.xlane.xlu0 %1485
        %v1487 = vadd.f32 %v1126, %v1128
        %1488 = vadd.xlane.f32.xlu0 %v1487
        %v1489 = vpop.xlane.xlu0 %1488
        %v1490 = vadd.f32 %v1132, %v1134
        %1491 = vadd.xlane.f32.xlu0 %v1490
        %v1492 = vpop.xlane.xlu0 %1491
        %v1493 = vadd.f32 %v1136, %v1138
        %1494 = vadd.xlane.f32.xlu0 %v1493
        %v1495 = vpop.xlane.xlu0 %1494
        %v1496 = vadd.f32 %v1142, %v1144
        %1497 = vadd.xlane.f32.xlu0 %v1496
        %v1498 = vpop.xlane.xlu0 %1497
        %v1499 = vadd.f32 %v1146, %v1148
        %1500 = vadd.xlane.f32.xlu0 %v1499
        %v1501 = vpop.xlane.xlu0 %1500
        %v1502 = vadd.f32 %v1152, %v1154
        %1503 = vadd.xlane.f32.xlu0 %v1502
        %v1504 = vpop.xlane.xlu0 %1503
        %v1505 = vadd.f32 %v1156, %v1158
        %1506 = vadd.xlane.f32.xlu0 %v1505
        %v1507 = vpop.xlane.xlu0 %1506
        %v1508 = vadd.f32 %v1162, %v1164
        %1509 = vadd.xlane.f32.xlu0 %v1508
        %v1510 = vpop.xlane.xlu0 %1509
        %v1511 = vadd.f32 %v1166, %v1168
        %1512 = vadd.xlane.f32.xlu0 %v1511
        %v1513 = vpop.xlane.xlu0 %1512
        %v1514 = vadd.f32 %v1172, %v1174
        %1515 = vadd.xlane.f32.xlu0 %v1514
        %v1516 = vpop.xlane.xlu0 %1515
        %v1517 = vadd.f32 %v1176, %v1178
        %1518 = vadd.xlane.f32.xlu0 %v1517
        %v1519 = vpop.xlane.xlu0 %1518
        %v1520 = vadd.f32 %v1182, %v1184
        %1521 = vadd.xlane.f32.xlu0 %v1520
        %v1522 = vpop.xlane.xlu0 %1521
        %v1523 = vadd.f32 %v1186, %v1188
        %1524 = vadd.xlane.f32.xlu0 %v1523
        %v1525 = vpop.xlane.xlu0 %1524
        %v1526 = vadd.f32 %v1192, %v1194
        %1527 = vadd.xlane.f32.xlu0 %v1526
        %v1528 = vpop.xlane.xlu0 %1527
        %v1529 = vadd.f32 %v1196, %v1198
        %1530 = vadd.xlane.f32.xlu0 %v1529
        %v1531 = vpop.xlane.xlu0 %1530
        %v1532 = vadd.f32 %v1202, %v1204
        %1533 = vadd.xlane.f32.xlu0 %v1532
        %v1534 = vpop.xlane.xlu0 %1533
        %v1535 = vadd.f32 %v1206, %v1208
        %1536 = vadd.xlane.f32.xlu0 %v1535
        %v1537 = vpop.xlane.xlu0 %1536
        %v1538 = vadd.f32 %v1212, %v1214
        %1539 = vadd.xlane.f32.xlu0 %v1538
        %v1540 = vpop.xlane.xlu0 %1539
        %v1541 = vadd.f32 %v1216, %v1218
        %1542 = vadd.xlane.f32.xlu0 %v1541
        %v1543 = vpop.xlane.xlu0 %1542
        %v1544 = vadd.f32 %v1222, %v1224
        %1545 = vadd.xlane.f32.xlu0 %v1544
        %v1546 = vpop.xlane.xlu0 %1545
        %v1547 = vadd.f32 %v1226, %v1228
        %1548 = vadd.xlane.f32.xlu0 %v1547
        %v1549 = vpop.xlane.xlu0 %1548
        %v1550 = vadd.f32 %v1232, %v1234
        %1551 = vadd.xlane.f32.xlu0 %v1550
        %v1552 = vpop.xlane.xlu0 %1551
        %v1553 = vadd.f32 %v1236, %v1238
        %1554 = vadd.xlane.f32.xlu0 %v1553
        %v1555 = vpop.xlane.xlu0 %1554
        %v1556 = vadd.f32 %v1242, %v1244
        %1557 = vadd.xlane.f32.xlu0 %v1556
        %v1558 = vpop.xlane.xlu0 %1557
        %v1559 = vadd.f32 %v1246, %v1248
        %1560 = vadd.xlane.f32.xlu0 %v1559
        %v1561 = vpop.xlane.xlu0 %1560
        %v1562 = vadd.f32 %v1252, %v1254
        %1563 = vadd.xlane.f32.xlu0 %v1562
        %v1564 = vpop.xlane.xlu0 %1563
        %v1565 = vadd.f32 %v1256, %v1258
        %1566 = vadd.xlane.f32.xlu0 %v1565
        %v1567 = vpop.xlane.xlu0 %1566
        %v1568 = vadd.f32 %v1262, %v1264
        %1569 = vadd.xlane.f32.xlu0 %v1568
        %v1570 = vpop.xlane.xlu0 %1569
        %v1571 = vadd.f32 %v1266, %v1268
        %1572 = vadd.xlane.f32.xlu0 %v1571
        %v1573 = vpop.xlane.xlu0 %1572
        %v1574 = vadd.f32 %v1272, %v1274
        %1575 = vadd.xlane.f32.xlu0 %v1574
        %v1576 = vpop.xlane.xlu0 %1575
        %v1577 = vadd.f32 %v1276, %v1278
        %1578 = vadd.xlane.f32.xlu0 %v1577
        %v1579 = vpop.xlane.xlu0 %1578
        %v1580 = vadd.f32 %v1282, %v1284
        %1581 = vadd.xlane.f32.xlu0 %v1580
        %v1582 = vpop.xlane.xlu0 %1581
        %v1583 = vadd.f32 %v1286, %v1288
        %1584 = vadd.xlane.f32.xlu0 %v1583
        %v1585 = vpop.xlane.xlu0 %1584
        %v1586 = vadd.f32 %v1292, %v1294
        %1587 = vadd.xlane.f32.xlu0 %v1586
        %v1588 = vpop.xlane.xlu0 %1587
        %v1589 = vadd.f32 %v1296, %v1298
        %1590 = vadd.xlane.f32.xlu0 %v1589
        %v1591 = vpop.xlane.xlu0 %1590
        %v1592 = vadd.f32 %v1302, %v1304
        %1593 = vadd.xlane.f32.xlu0 %v1592
        %v1594 = vpop.xlane.xlu0 %1593
        %v1595 = vadd.f32 %v1306, %v1308
        %1596 = vadd.xlane.f32.xlu0 %v1595
        %v1597 = vpop.xlane.xlu0 %1596
        %v1598 = vadd.f32 %v1312, %v1314
        %1599 = vadd.xlane.f32.xlu0 %v1598
        %v1600 = vpop.xlane.xlu0 %1599
        %v1601 = vadd.f32 %v1316, %v1318
        %1602 = vadd.xlane.f32.xlu0 %v1601
        %v1603 = vpop.xlane.xlu0 %1602
        %v1604 = vadd.f32 %v1322, %v1324
        %1605 = vadd.xlane.f32.xlu0 %v1604
        %v1606 = vpop.xlane.xlu0 %1605
        %v1607 = vadd.f32 %v1326, %v1328
        %1608 = vadd.xlane.f32.xlu0 %v1607
        %v1609 = vpop.xlane.xlu0 %1608
        %v1610 = vadd.f32 %v1332, %v1334
        %1611 = vadd.xlane.f32.xlu0 %v1610
        %v1612 = vpop.xlane.xlu0 %1611
        %v1613 = vadd.f32 %v1336, %v1338
        %1614 = vadd.xlane.f32.xlu0 %v1613
        %v1615 = vpop.xlane.xlu0 %1614
        %v1616 = vadd.f32 %v1342, %v1344
        %1617 = vadd.xlane.f32.xlu0 %v1616
        %v1618 = vpop.xlane.xlu0 %1617
        %v1619 = vadd.f32 %v1346, %v1348
        %1620 = vadd.xlane.f32.xlu0 %v1619
        %v1621 = vpop.xlane.xlu0 %1620
        %v1622 = vadd.f32 %v1352, %v1354
        %1623 = vadd.xlane.f32.xlu0 %v1622
        %v1624 = vpop.xlane.xlu0 %1623
        %v1625 = vadd.f32 %v1356, %v1358
        %1626 = vadd.xlane.f32.xlu0 %v1625
        %v1627 = vpop.xlane.xlu0 %1626
        %v1628 = vadd.f32 %v1362, %v1364
        %1629 = vadd.xlane.f32.xlu0 %v1628
        %v1630 = vpop.xlane.xlu0 %1629
        %v1631 = vadd.f32 %v1366, %v1368
        %1632 = vadd.xlane.f32.xlu0 %v1631
        %v1633 = vpop.xlane.xlu0 %1632
        %v1634 = vadd.f32 %v1372, %v1374
        %1635 = vadd.xlane.f32.xlu0 %v1634
        %v1636 = vpop.xlane.xlu0 %1635
        %v1637 = vadd.f32 %v1376, %v1378
        %1638 = vadd.xlane.f32.xlu0 %v1637
        %v1639 = vpop.xlane.xlu0 %1638
        %v1640 = vadd.f32 %v1382, %v1384
        %1641 = vadd.xlane.f32.xlu0 %v1640
        %v1642 = vpop.xlane.xlu0 %1641
        %v1643 = vadd.f32 %v1386, %v1388
        %1644 = vadd.xlane.f32.xlu0 %v1643
        %v1645 = vpop.xlane.xlu0 %1644
        %v1646 = vmul.f32 %v1456, 0.0051020407
        %v1647 = vmul.f32 %v1459, 0.0051020407
        %v1648 = vmul.f32 %v1462, 0.0051020407
        %v1649 = vmul.f32 %v1465, 0.0051020407
        %v1650 = vmul.f32 %v1468, 0.0051020407
        %v1651 = vmul.f32 %v1471, 0.0051020407
        %v1652 = vmul.f32 %v1474, 0.0051020407
        %v1653 = vmul.f32 %v1477, 0.0051020407
        %v1654 = vmul.f32 %v1480, 0.0051020407
        %v1655 = vmul.f32 %v1483, 0.0051020407
        %v1656 = vmul.f32 %v1486, 0.0051020407
        %v1657 = vmul.f32 %v1489, 0.0051020407
        %v1658 = vmul.f32 %v1492, 0.0051020407
        %v1659 = vmul.f32 %v1495, 0.0051020407
        %v1660 = vmul.f32 %v1498, 0.0051020407
        %v1661 = vmul.f32 %v1501, 0.0051020407
        %v1662 = vmul.f32 %v1504, 0.0051020407
        %v1663 = vmul.f32 %v1507, 0.0051020407
        %v1664 = vmul.f32 %v1510, 0.0051020407
        %v1665 = vmul.f32 %v1513, 0.0051020407
        %v1666 = vmul.f32 %v1516, 0.0051020407
        %v1667 = vmul.f32 %v1519, 0.0051020407
        %v1668 = vmul.f32 %v1522, 0.0051020407
        %v1669 = vmul.f32 %v1525, 0.0051020407
        %v1670 = vmul.f32 %v1528, 0.0051020407
        %v1671 = vmul.f32 %v1531, 0.0051020407
        %v1672 = vmul.f32 %v1534, 0.0051020407
        %v1673 = vmul.f32 %v1537, 0.0051020407
        %v1674 = vmul.f32 %v1540, 0.0051020407
        %v1675 = vmul.f32 %v1543, 0.0051020407
        %v1676 = vmul.f32 %v1546, 0.0051020407
        %v1677 = vmul.f32 %v1549, 0.0051020407
        %v1678 = vmul.f32 %v1552, 0.0051020407
        %v1679 = vmul.f32 %v1555, 0.0051020407
        %v1680 = vmul.f32 %v1558, 0.0051020407
        %v1681 = vmul.f32 %v1561, 0.0051020407
        %v1682 = vmul.f32 %v1564, 0.0051020407
        %v1683 = vmul.f32 %v1567, 0.0051020407
        %v1684 = vmul.f32 %v1570, 0.0051020407
        %v1685 = vmul.f32 %v1573, 0.0051020407
        %v1686 = vmul.f32 %v1576, 0.0051020407
        %v1687 = vmul.f32 %v1579, 0.0051020407
        %v1688 = vmul.f32 %v1582, 0.0051020407
        %v1689 = vmul.f32 %v1585, 0.0051020407
        %v1690 = vmul.f32 %v1588, 0.0051020407
        %v1691 = vmul.f32 %v1591, 0.0051020407
        %v1692 = vmul.f32 %v1594, 0.0051020407
        %v1693 = vmul.f32 %v1597, 0.0051020407
        %v1694 = vmul.f32 %v1600, 0.0051020407
        %v1695 = vmul.f32 %v1603, 0.0051020407
        %v1696 = vmul.f32 %v1606, 0.0051020407
        %v1697 = vmul.f32 %v1609, 0.0051020407
        %v1698 = vmul.f32 %v1612, 0.0051020407
        %v1699 = vmul.f32 %v1615, 0.0051020407
        %v1700 = vmul.f32 %v1618, 0.0051020407
        %v1701 = vmul.f32 %v1621, 0.0051020407
        %v1702 = vmul.f32 %v1624, 0.0051020407
        %v1703 = vmul.f32 %v1627, 0.0051020407
        %v1704 = vmul.f32 %v1630, 0.0051020407
        %v1705 = vmul.f32 %v1633, 0.0051020407
        %v1706 = vmul.f32 %v1636, 0.0051020407
        %v1707 = vmul.f32 %v1639, 0.0051020407
        %v1708 = vmul.f32 %v1642, 0.0051020407
        %v1709 = vmul.f32 %v1645, 0.0051020407
        %v1710 = vsub.f32 %v1072, %v1646
        %v1711 = vsub.f32 %v1074, %v1646
        %v1712 = vsub.f32 %v1076, %v1647
        %v1713 = vsub.f32 %v1078, %v1647
        %v1714 = vsub.f32 %v1082, %v1648
        %v1715 = vsub.f32 %v1084, %v1648
        %v1716 = vsub.f32 %v1086, %v1649
        %v1717 = vsub.f32 %v1088, %v1649
        %v1718 = vsub.f32 %v1092, %v1650
        %v1719 = vsub.f32 %v1094, %v1650
        %v1720 = vsub.f32 %v1096, %v1651
        %v1721 = vsub.f32 %v1098, %v1651
        %v1722 = vsub.f32 %v1102, %v1652
        %v1723 = vsub.f32 %v1104, %v1652
        %v1724 = vsub.f32 %v1106, %v1653
        %v1725 = vsub.f32 %v1108, %v1653
        %v1726 = vsub.f32 %v1112, %v1654
        %v1727 = vsub.f32 %v1114, %v1654
        %v1728 = vsub.f32 %v1116, %v1655
        %v1729 = vsub.f32 %v1118, %v1655
        %v1730 = vsub.f32 %v1122, %v1656
        %v1731 = vsub.f32 %v1124, %v1656
        %v1732 = vsub.f32 %v1126, %v1657
        %v1733 = vsub.f32 %v1128, %v1657
        %v1734 = vsub.f32 %v1132, %v1658
        %v1735 = vsub.f32 %v1134, %v1658
        %v1736 = vsub.f32 %v1136, %v1659
        %v1737 = vsub.f32 %v1138, %v1659
        %v1738 = vsub.f32 %v1142, %v1660
        %v1739 = vsub.f32 %v1144, %v1660
        %v1740 = vsub.f32 %v1146, %v1661
        %v1741 = vsub.f32 %v1148, %v1661
        %v1742 = vsub.f32 %v1152, %v1662
        %v1743 = vsub.f32 %v1154, %v1662
        %v1744 = vsub.f32 %v1156, %v1663
        %v1745 = vsub.f32 %v1158, %v1663
        %v1746 = vsub.f32 %v1162, %v1664
        %v1747 = vsub.f32 %v1164, %v1664
        %v1748 = vsub.f32 %v1166, %v1665
        %v1749 = vsub.f32 %v1168, %v1665
        %v1750 = vsub.f32 %v1172, %v1666
        %v1751 = vsub.f32 %v1174, %v1666
        %v1752 = vsub.f32 %v1176, %v1667
        %v1753 = vsub.f32 %v1178, %v1667
        %v1754 = vsub.f32 %v1182, %v1668
        %v1755 = vsub.f32 %v1184, %v1668
        %v1756 = vsub.f32 %v1186, %v1669
        %v1757 = vsub.f32 %v1188, %v1669
        %v1758 = vsub.f32 %v1192, %v1670
        %v1759 = vsub.f32 %v1194, %v1670
        %v1760 = vsub.f32 %v1196, %v1671
        %v1761 = vsub.f32 %v1198, %v1671
        %v1762 = vsub.f32 %v1202, %v1672
        %v1763 = vsub.f32 %v1204, %v1672
        %v1764 = vsub.f32 %v1206, %v1673
        %v1765 = vsub.f32 %v1208, %v1673
        %v1766 = vsub.f32 %v1212, %v1674
        %v1767 = vsub.f32 %v1214, %v1674
        %v1768 = vsub.f32 %v1216, %v1675
        %v1769 = vsub.f32 %v1218, %v1675
        %v1770 = vsub.f32 %v1222, %v1676
        %v1771 = vsub.f32 %v1224, %v1676
        %v1772 = vsub.f32 %v1226, %v1677
        %v1773 = vsub.f32 %v1228, %v1677
        %v1774 = vsub.f32 %v1232, %v1678
        %v1775 = vsub.f32 %v1234, %v1678
        %v1776 = vsub.f32 %v1236, %v1679
        %v1777 = vsub.f32 %v1238, %v1679
        %v1778 = vsub.f32 %v1242, %v1680
        %v1779 = vsub.f32 %v1244, %v1680
        %v1780 = vsub.f32 %v1246, %v1681
        %v1781 = vsub.f32 %v1248, %v1681
        %v1782 = vsub.f32 %v1252, %v1682
        %v1783 = vsub.f32 %v1254, %v1682
        %v1784 = vsub.f32 %v1256, %v1683
        %v1785 = vsub.f32 %v1258, %v1683
        %v1786 = vsub.f32 %v1262, %v1684
        %v1787 = vsub.f32 %v1264, %v1684
        %v1788 = vsub.f32 %v1266, %v1685
        %v1789 = vsub.f32 %v1268, %v1685
        %v1790 = vsub.f32 %v1272, %v1686
        %v1791 = vsub.f32 %v1274, %v1686
        %v1792 = vsub.f32 %v1276, %v1687
        %v1793 = vsub.f32 %v1278, %v1687
        %v1794 = vsub.f32 %v1282, %v1688
        %v1795 = vsub.f32 %v1284, %v1688
        %v1796 = vsub.f32 %v1286, %v1689
        %v1797 = vsub.f32 %v1288, %v1689
        %v1798 = vsub.f32 %v1292, %v1690
        %v1799 = vsub.f32 %v1294, %v1690
        %v1800 = vsub.f32 %v1296, %v1691
        %v1801 = vsub.f32 %v1298, %v1691
        %v1802 = vsub.f32 %v1302, %v1692
        %v1803 = vsub.f32 %v1304, %v1692
        %v1804 = vsub.f32 %v1306, %v1693
        %v1805 = vsub.f32 %v1308, %v1693
        %v1806 = vsub.f32 %v1312, %v1694
        %v1807 = vsub.f32 %v1314, %v1694
        %v1808 = vsub.f32 %v1316, %v1695
        %v1809 = vsub.f32 %v1318, %v1695
        %v1810 = vsub.f32 %v1322, %v1696
        %v1811 = vsub.f32 %v1324, %v1696
        %v1812 = vsub.f32 %v1326, %v1697
        %v1813 = vsub.f32 %v1328, %v1697
        %v1814 = vsub.f32 %v1332, %v1698
        %v1815 = vsub.f32 %v1334, %v1698
        %v1816 = vsub.f32 %v1336, %v1699
        %v1817 = vsub.f32 %v1338, %v1699
        %v1818 = vsub.f32 %v1342, %v1700
        %v1819 = vsub.f32 %v1344, %v1700
        %v1820 = vsub.f32 %v1346, %v1701
        %v1821 = vsub.f32 %v1348, %v1701
        %v1822 = vsub.f32 %v1352, %v1702
        %v1823 = vsub.f32 %v1354, %v1702
        %v1824 = vsub.f32 %v1356, %v1703
        %v1825 = vsub.f32 %v1358, %v1703
        %v1826 = vsub.f32 %v1362, %v1704
        %v1827 = vsub.f32 %v1364, %v1704
        %v1828 = vsub.f32 %v1366, %v1705
        %v1829 = vsub.f32 %v1368, %v1705
        %v1830 = vsub.f32 %v1372, %v1706
        %v1831 = vsub.f32 %v1374, %v1706
        %v1832 = vsub.f32 %v1376, %v1707
        %v1833 = vsub.f32 %v1378, %v1707
        %v1834 = vsub.f32 %v1382, %v1708
        %v1835 = vsub.f32 %v1384, %v1708
        %v1836 = vsub.f32 %v1386, %v1709
        %v1837 = vsub.f32 %v1388, %v1709
        %v1838 = vsel %vm459, 1, 0
        %v1839 = vsel %vm460, 1, 0
        %vm1840 = vcmp.eq.s32.totalorder %v1838, 1
        %vm1841 = vcmp.eq.s32.totalorder %v1839, 1
        %v1842 = vsel %vm1840, %v1710, 0.0
        %v1843 = vsel %vm1841, %v1711, 0.0
        %v1844 = vsel %vm1840, %v1712, 0.0
        %v1845 = vsel %vm1841, %v1713, 0.0
        %v1846 = vsel %vm1840, %v1714, 0.0
        %v1847 = vsel %vm1841, %v1715, 0.0
        %v1848 = vsel %vm1840, %v1716, 0.0
        %v1849 = vsel %vm1841, %v1717, 0.0
        %v1850 = vsel %vm1840, %v1718, 0.0
        %v1851 = vsel %vm1841, %v1719, 0.0
        %v1852 = vsel %vm1840, %v1720, 0.0
        %v1853 = vsel %vm1841, %v1721, 0.0
        %v1854 = vsel %vm1840, %v1722, 0.0
        %v1855 = vsel %vm1841, %v1723, 0.0
        %v1856 = vsel %vm1840, %v1724, 0.0
        %v1857 = vsel %vm1841, %v1725, 0.0
        %v1858 = vsel %vm1840, %v1726, 0.0
        %v1859 = vsel %vm1841, %v1727, 0.0
        %v1860 = vsel %vm1840, %v1728, 0.0
        %v1861 = vsel %vm1841, %v1729, 0.0
        %v1862 = vsel %vm1840, %v1730, 0.0
        %v1863 = vsel %vm1841, %v1731, 0.0
        %v1864 = vsel %vm1840, %v1732, 0.0
        %v1865 = vsel %vm1841, %v1733, 0.0
        %v1866 = vsel %vm1840, %v1734, 0.0
        %v1867 = vsel %vm1841, %v1735, 0.0
        %v1868 = vsel %vm1840, %v1736, 0.0
        %v1869 = vsel %vm1841, %v1737, 0.0
        %v1870 = vsel %vm1840, %v1738, 0.0
        %v1871 = vsel %vm1841, %v1739, 0.0
        %v1872 = vsel %vm1840, %v1740, 0.0
        %v1873 = vsel %vm1841, %v1741, 0.0
        %v1874 = vsel %vm1840, %v1742, 0.0
        %v1875 = vsel %vm1841, %v1743, 0.0
        %v1876 = vsel %vm1840, %v1744, 0.0
        %v1877 = vsel %vm1841, %v1745, 0.0
        %v1878 = vsel %vm1840, %v1746, 0.0
        %v1879 = vsel %vm1841, %v1747, 0.0
        %v1880 = vsel %vm1840, %v1748, 0.0
        %v1881 = vsel %vm1841, %v1749, 0.0
        %v1882 = vsel %vm1840, %v1750, 0.0
        %v1883 = vsel %vm1841, %v1751, 0.0
        %v1884 = vsel %vm1840, %v1752, 0.0
        %v1885 = vsel %vm1841, %v1753, 0.0
        %v1886 = vsel %vm1840, %v1754, 0.0
        %v1887 = vsel %vm1841, %v1755, 0.0
        %v1888 = vsel %vm1840, %v1756, 0.0
        %v1889 = vsel %vm1841, %v1757, 0.0
        %v1890 = vsel %vm1840, %v1758, 0.0
        %v1891 = vsel %vm1841, %v1759, 0.0
        %v1892 = vsel %vm1840, %v1760, 0.0
        %v1893 = vsel %vm1841, %v1761, 0.0
        %v1894 = vsel %vm1840, %v1762, 0.0
        %v1895 = vsel %vm1841, %v1763, 0.0
        %v1896 = vsel %vm1840, %v1764, 0.0
        %v1897 = vsel %vm1841, %v1765, 0.0
        %v1898 = vsel %vm1840, %v1766, 0.0
        %v1899 = vsel %vm1841, %v1767, 0.0
        %v1900 = vsel %vm1840, %v1768, 0.0
        %v1901 = vsel %vm1841, %v1769, 0.0
        %v1902 = vsel %vm1840, %v1770, 0.0
        %v1903 = vsel %vm1841, %v1771, 0.0
        %v1904 = vsel %vm1840, %v1772, 0.0
        %v1905 = vsel %vm1841, %v1773, 0.0
        %v1906 = vsel %vm1840, %v1774, 0.0
        %v1907 = vsel %vm1841, %v1775, 0.0
        %v1908 = vsel %vm1840, %v1776, 0.0
        %v1909 = vsel %vm1841, %v1777, 0.0
        %v1910 = vsel %vm1840, %v1778, 0.0
        %v1911 = vsel %vm1841, %v1779, 0.0
        %v1912 = vsel %vm1840, %v1780, 0.0
        %v1913 = vsel %vm1841, %v1781, 0.0
        %v1914 = vsel %vm1840, %v1782, 0.0
        %v1915 = vsel %vm1841, %v1783, 0.0
        %v1916 = vsel %vm1840, %v1784, 0.0
        %v1917 = vsel %vm1841, %v1785, 0.0
        %v1918 = vsel %vm1840, %v1786, 0.0
        %v1919 = vsel %vm1841, %v1787, 0.0
        %v1920 = vsel %vm1840, %v1788, 0.0
        %v1921 = vsel %vm1841, %v1789, 0.0
        %v1922 = vsel %vm1840, %v1790, 0.0
        %v1923 = vsel %vm1841, %v1791, 0.0
        %v1924 = vsel %vm1840, %v1792, 0.0
        %v1925 = vsel %vm1841, %v1793, 0.0
        %v1926 = vsel %vm1840, %v1794, 0.0
        %v1927 = vsel %vm1841, %v1795, 0.0
        %v1928 = vsel %vm1840, %v1796, 0.0
        %v1929 = vsel %vm1841, %v1797, 0.0
        %v1930 = vsel %vm1840, %v1798, 0.0
        %v1931 = vsel %vm1841, %v1799, 0.0
        %v1932 = vsel %vm1840, %v1800, 0.0
        %v1933 = vsel %vm1841, %v1801, 0.0
        %v1934 = vsel %vm1840, %v1802, 0.0
        %v1935 = vsel %vm1841, %v1803, 0.0
        %v1936 = vsel %vm1840, %v1804, 0.0
        %v1937 = vsel %vm1841, %v1805, 0.0
        %v1938 = vsel %vm1840, %v1806, 0.0
        %v1939 = vsel %vm1841, %v1807, 0.0
        %v1940 = vsel %vm1840, %v1808, 0.0
        %v1941 = vsel %vm1841, %v1809, 0.0
        %v1942 = vsel %vm1840, %v1810, 0.0
        %v1943 = vsel %vm1841, %v1811, 0.0
        %v1944 = vsel %vm1840, %v1812, 0.0
        %v1945 = vsel %vm1841, %v1813, 0.0
        %v1946 = vsel %vm1840, %v1814, 0.0
        %v1947 = vsel %vm1841, %v1815, 0.0
        %v1948 = vsel %vm1840, %v1816, 0.0
        %v1949 = vsel %vm1841, %v1817, 0.0
        %v1950 = vsel %vm1840, %v1818, 0.0
        %v1951 = vsel %vm1841, %v1819, 0.0
        %v1952 = vsel %vm1840, %v1820, 0.0
        %v1953 = vsel %vm1841, %v1821, 0.0
        %v1954 = vsel %vm1840, %v1822, 0.0
        %v1955 = vsel %vm1841, %v1823, 0.0
        %v1956 = vsel %vm1840, %v1824, 0.0
        %v1957 = vsel %vm1841, %v1825, 0.0
        %v1958 = vsel %vm1840, %v1826, 0.0
        %v1959 = vsel %vm1841, %v1827, 0.0
        %v1960 = vsel %vm1840, %v1828, 0.0
        %v1961 = vsel %vm1841, %v1829, 0.0
        %v1962 = vsel %vm1840, %v1830, 0.0
        %v1963 = vsel %vm1841, %v1831, 0.0
        %v1964 = vsel %vm1840, %v1832, 0.0
        %v1965 = vsel %vm1841, %v1833, 0.0
        %v1966 = vsel %vm1840, %v1834, 0.0
        %v1967 = vsel %vm1841, %v1835, 0.0
        %v1968 = vsel %vm1840, %v1836, 0.0
        %v1969 = vsel %vm1841, %v1837, 0.0
        %v1970 = vmul.f32 %v1842, %v1842
        %v1971 = vmul.f32 %v1843, %v1843
        %v1972 = vmul.f32 %v1844, %v1844
        %v1973 = vmul.f32 %v1845, %v1845
        %v1974 = vmul.f32 %v1846, %v1846
        %v1975 = vmul.f32 %v1847, %v1847
        %v1976 = vmul.f32 %v1848, %v1848
        %v1977 = vmul.f32 %v1849, %v1849
        %v1978 = vmul.f32 %v1850, %v1850
        %v1979 = vmul.f32 %v1851, %v1851
        %v1980 = vmul.f32 %v1852, %v1852
        %v1981 = vmul.f32 %v1853, %v1853
        %v1982 = vmul.f32 %v1854, %v1854
        %v1983 = vmul.f32 %v1855, %v1855
        %v1984 = vmul.f32 %v1856, %v1856
        %v1985 = vmul.f32 %v1857, %v1857
        %v1986 = vmul.f32 %v1858, %v1858
        %v1987 = vmul.f32 %v1859, %v1859
        %v1988 = vmul.f32 %v1860, %v1860
        %v1989 = vmul.f32 %v1861, %v1861
        %v1990 = vmul.f32 %v1862, %v1862
        %v1991 = vmul.f32 %v1863, %v1863
        %v1992 = vmul.f32 %v1864, %v1864
        %v1993 = vmul.f32 %v1865, %v1865
        %v1994 = vmul.f32 %v1866, %v1866
        %v1995 = vmul.f32 %v1867, %v1867
        %v1996 = vmul.f32 %v1868, %v1868
        %v1997 = vmul.f32 %v1869, %v1869
        %v1998 = vmul.f32 %v1870, %v1870
        %v1999 = vmul.f32 %v1871, %v1871
        %v2000 = vmul.f32 %v1872, %v1872
        %v2001 = vmul.f32 %v1873, %v1873
        %v2002 = vmul.f32 %v1874, %v1874
        %v2003 = vmul.f32 %v1875, %v1875
        %v2004 = vmul.f32 %v1876, %v1876
        %v2005 = vmul.f32 %v1877, %v1877
        %v2006 = vmul.f32 %v1878, %v1878
        %v2007 = vmul.f32 %v1879, %v1879
        %v2008 = vmul.f32 %v1880, %v1880
        %v2009 = vmul.f32 %v1881, %v1881
        %v2010 = vmul.f32 %v1882, %v1882
        %v2011 = vmul.f32 %v1883, %v1883
        %v2012 = vmul.f32 %v1884, %v1884
        %v2013 = vmul.f32 %v1885, %v1885
        %v2014 = vmul.f32 %v1886, %v1886
        %v2015 = vmul.f32 %v1887, %v1887
        %v2016 = vmul.f32 %v1888, %v1888
        %v2017 = vmul.f32 %v1889, %v1889
        %v2018 = vmul.f32 %v1890, %v1890
        %v2019 = vmul.f32 %v1891, %v1891
        %v2020 = vmul.f32 %v1892, %v1892
        %v2021 = vmul.f32 %v1893, %v1893
        %v2022 = vmul.f32 %v1894, %v1894
        %v2023 = vmul.f32 %v1895, %v1895
        %v2024 = vmul.f32 %v1896, %v1896
        %v2025 = vmul.f32 %v1897, %v1897
        %v2026 = vmul.f32 %v1898, %v1898
        %v2027 = vmul.f32 %v1899, %v1899
        %v2028 = vmul.f32 %v1900, %v1900
        %v2029 = vmul.f32 %v1901, %v1901
        %v2030 = vmul.f32 %v1902, %v1902
        %v2031 = vmul.f32 %v1903, %v1903
        %v2032 = vmul.f32 %v1904, %v1904
        %v2033 = vmul.f32 %v1905, %v1905
        %v2034 = vmul.f32 %v1906, %v1906
        %v2035 = vmul.f32 %v1907, %v1907
        %v2036 = vmul.f32 %v1908, %v1908
        %v2037 = vmul.f32 %v1909, %v1909
        %v2038 = vmul.f32 %v1910, %v1910
        %v2039 = vmul.f32 %v1911, %v1911
        %v2040 = vmul.f32 %v1912, %v1912
        %v2041 = vmul.f32 %v1913, %v1913
        %v2042 = vmul.f32 %v1914, %v1914
        %v2043 = vmul.f32 %v1915, %v1915
        %v2044 = vmul.f32 %v1916, %v1916
        %v2045 = vmul.f32 %v1917, %v1917
        %v2046 = vmul.f32 %v1918, %v1918
        %v2047 = vmul.f32 %v1919, %v1919
        %v2048 = vmul.f32 %v1920, %v1920
        %v2049 = vmul.f32 %v1921, %v1921
        %v2050 = vmul.f32 %v1922, %v1922
        %v2051 = vmul.f32 %v1923, %v1923
        %v2052 = vmul.f32 %v1924, %v1924
        %v2053 = vmul.f32 %v1925, %v1925
        %v2054 = vmul.f32 %v1926, %v1926
        %v2055 = vmul.f32 %v1927, %v1927
        %v2056 = vmul.f32 %v1928, %v1928
        %v2057 = vmul.f32 %v1929, %v1929
        %v2058 = vmul.f32 %v1930, %v1930
        %v2059 = vmul.f32 %v1931, %v1931
        %v2060 = vmul.f32 %v1932, %v1932
        %v2061 = vmul.f32 %v1933, %v1933
        %v2062 = vmul.f32 %v1934, %v1934
        %v2063 = vmul.f32 %v1935, %v1935
        %v2064 = vmul.f32 %v1936, %v1936
        %v2065 = vmul.f32 %v1937, %v1937
        %v2066 = vmul.f32 %v1938, %v1938
        %v2067 = vmul.f32 %v1939, %v1939
        %v2068 = vmul.f32 %v1940, %v1940
        %v2069 = vmul.f32 %v1941, %v1941
        %v2070 = vmul.f32 %v1942, %v1942
        %v2071 = vmul.f32 %v1943, %v1943
        %v2072 = vmul.f32 %v1944, %v1944
        %v2073 = vmul.f32 %v1945, %v1945
        %v2074 = vmul.f32 %v1946, %v1946
        %v2075 = vmul.f32 %v1947, %v1947
        %v2076 = vmul.f32 %v1948, %v1948
        %v2077 = vmul.f32 %v1949, %v1949
        %v2078 = vmul.f32 %v1950, %v1950
        %v2079 = vmul.f32 %v1951, %v1951
        %v2080 = vmul.f32 %v1952, %v1952
        %v2081 = vmul.f32 %v1953, %v1953
        %v2082 = vmul.f32 %v1954, %v1954
        %v2083 = vmul.f32 %v1955, %v1955
        %v2084 = vmul.f32 %v1956, %v1956
        %v2085 = vmul.f32 %v1957, %v1957
        %v2086 = vmul.f32 %v1958, %v1958
        %v2087 = vmul.f32 %v1959, %v1959
        %v2088 = vmul.f32 %v1960, %v1960
        %v2089 = vmul.f32 %v1961, %v1961
        %v2090 = vmul.f32 %v1962, %v1962
        %v2091 = vmul.f32 %v1963, %v1963
        %v2092 = vmul.f32 %v1964, %v1964
        %v2093 = vmul.f32 %v1965, %v1965
        %v2094 = vmul.f32 %v1966, %v1966
        %v2095 = vmul.f32 %v1967, %v1967
        %v2096 = vmul.f32 %v1968, %v1968
        %v2097 = vmul.f32 %v1969, %v1969
        %v2098 = vadd.f32 %v1970, %v1971
        %2099 = vadd.xlane.f32.xlu0 %v2098
        %v2100 = vpop.xlane.xlu0 %2099
        %v2101 = vadd.f32 %v1972, %v1973
        %2102 = vadd.xlane.f32.xlu0 %v2101
        %v2103 = vpop.xlane.xlu0 %2102
        %v2104 = vadd.f32 %v1974, %v1975
        %2105 = vadd.xlane.f32.xlu0 %v2104
        %v2106 = vpop.xlane.xlu0 %2105
        %v2107 = vadd.f32 %v1976, %v1977
        %2108 = vadd.xlane.f32.xlu0 %v2107
        %v2109 = vpop.xlane.xlu0 %2108
        %v2110 = vadd.f32 %v1978, %v1979
        %2111 = vadd.xlane.f32.xlu0 %v2110
        %v2112 = vpop.xlane.xlu0 %2111
        %v2113 = vadd.f32 %v1980, %v1981
        %2114 = vadd.xlane.f32.xlu0 %v2113
        %v2115 = vpop.xlane.xlu0 %2114
        %v2116 = vadd.f32 %v1982, %v1983
        %2117 = vadd.xlane.f32.xlu0 %v2116
        %v2118 = vpop.xlane.xlu0 %2117
        %v2119 = vadd.f32 %v1984, %v1985
        %2120 = vadd.xlane.f32.xlu0 %v2119
        %v2121 = vpop.xlane.xlu0 %2120
        %v2122 = vadd.f32 %v1986, %v1987
        %2123 = vadd.xlane.f32.xlu0 %v2122
        %v2124 = vpop.xlane.xlu0 %2123
        %v2125 = vadd.f32 %v1988, %v1989
        %2126 = vadd.xlane.f32.xlu0 %v2125
        %v2127 = vpop.xlane.xlu0 %2126
        %v2128 = vadd.f32 %v1990, %v1991
        %2129 = vadd.xlane.f32.xlu0 %v2128
        %v2130 = vpop.xlane.xlu0 %2129
        %v2131 = vadd.f32 %v1992, %v1993
        %2132 = vadd.xlane.f32.xlu0 %v2131
        %v2133 = vpop.xlane.xlu0 %2132
        %v2134 = vadd.f32 %v1994, %v1995
        %2135 = vadd.xlane.f32.xlu0 %v2134
        %v2136 = vpop.xlane.xlu0 %2135
        %v2137 = vadd.f32 %v1996, %v1997
        %2138 = vadd.xlane.f32.xlu0 %v2137
        %v2139 = vpop.xlane.xlu0 %2138
        %v2140 = vadd.f32 %v1998, %v1999
        %2141 = vadd.xlane.f32.xlu0 %v2140
        %v2142 = vpop.xlane.xlu0 %2141
        %v2143 = vadd.f32 %v2000, %v2001
        %2144 = vadd.xlane.f32.xlu0 %v2143
        %v2145 = vpop.xlane.xlu0 %2144
        %v2146 = vadd.f32 %v2002, %v2003
        %2147 = vadd.xlane.f32.xlu0 %v2146
        %v2148 = vpop.xlane.xlu0 %2147
        %v2149 = vadd.f32 %v2004, %v2005
        %2150 = vadd.xlane.f32.xlu0 %v2149
        %v2151 = vpop.xlane.xlu0 %2150
        %v2152 = vadd.f32 %v2006, %v2007
        %2153 = vadd.xlane.f32.xlu0 %v2152
        %v2154 = vpop.xlane.xlu0 %2153
        %v2155 = vadd.f32 %v2008, %v2009
        %2156 = vadd.xlane.f32.xlu0 %v2155
        %v2157 = vpop.xlane.xlu0 %2156
        %v2158 = vadd.f32 %v2010, %v2011
        %2159 = vadd.xlane.f32.xlu0 %v2158
        %v2160 = vpop.xlane.xlu0 %2159
        %v2161 = vadd.f32 %v2012, %v2013
        %2162 = vadd.xlane.f32.xlu0 %v2161
        %v2163 = vpop.xlane.xlu0 %2162
        %v2164 = vadd.f32 %v2014, %v2015
        %2165 = vadd.xlane.f32.xlu0 %v2164
        %v2166 = vpop.xlane.xlu0 %2165
        %v2167 = vadd.f32 %v2016, %v2017
        %2168 = vadd.xlane.f32.xlu0 %v2167
        %v2169 = vpop.xlane.xlu0 %2168
        %v2170 = vadd.f32 %v2018, %v2019
        %2171 = vadd.xlane.f32.xlu0 %v2170
        %v2172 = vpop.xlane.xlu0 %2171
        %v2173 = vadd.f32 %v2020, %v2021
        %2174 = vadd.xlane.f32.xlu0 %v2173
        %v2175 = vpop.xlane.xlu0 %2174
        %v2176 = vadd.f32 %v2022, %v2023
        %2177 = vadd.xlane.f32.xlu0 %v2176
        %v2178 = vpop.xlane.xlu0 %2177
        %v2179 = vadd.f32 %v2024, %v2025
        %2180 = vadd.xlane.f32.xlu0 %v2179
        %v2181 = vpop.xlane.xlu0 %2180
        %v2182 = vadd.f32 %v2026, %v2027
        %2183 = vadd.xlane.f32.xlu0 %v2182
        %v2184 = vpop.xlane.xlu0 %2183
        %v2185 = vadd.f32 %v2028, %v2029
        %2186 = vadd.xlane.f32.xlu0 %v2185
        %v2187 = vpop.xlane.xlu0 %2186
        %v2188 = vadd.f32 %v2030, %v2031
        %2189 = vadd.xlane.f32.xlu0 %v2188
        %v2190 = vpop.xlane.xlu0 %2189
        %v2191 = vadd.f32 %v2032, %v2033
        %2192 = vadd.xlane.f32.xlu0 %v2191
        %v2193 = vpop.xlane.xlu0 %2192
        %v2194 = vadd.f32 %v2034, %v2035
        %2195 = vadd.xlane.f32.xlu0 %v2194
        %v2196 = vpop.xlane.xlu0 %2195
        %v2197 = vadd.f32 %v2036, %v2037
        %2198 = vadd.xlane.f32.xlu0 %v2197
        %v2199 = vpop.xlane.xlu0 %2198
        %v2200 = vadd.f32 %v2038, %v2039
        %2201 = vadd.xlane.f32.xlu0 %v2200
        %v2202 = vpop.xlane.xlu0 %2201
        %v2203 = vadd.f32 %v2040, %v2041
        %2204 = vadd.xlane.f32.xlu0 %v2203
        %v2205 = vpop.xlane.xlu0 %2204
        %v2206 = vadd.f32 %v2042, %v2043
        %2207 = vadd.xlane.f32.xlu0 %v2206
        %v2208 = vpop.xlane.xlu0 %2207
        %v2209 = vadd.f32 %v2044, %v2045
        %2210 = vadd.xlane.f32.xlu0 %v2209
        %v2211 = vpop.xlane.xlu0 %2210
        %v2212 = vadd.f32 %v2046, %v2047
        %2213 = vadd.xlane.f32.xlu0 %v2212
        %v2214 = vpop.xlane.xlu0 %2213
        %v2215 = vadd.f32 %v2048, %v2049
        %2216 = vadd.xlane.f32.xlu0 %v2215
        %v2217 = vpop.xlane.xlu0 %2216
        %v2218 = vadd.f32 %v2050, %v2051
        %2219 = vadd.xlane.f32.xlu0 %v2218
        %v2220 = vpop.xlane.xlu0 %2219
        %v2221 = vadd.f32 %v2052, %v2053
        %2222 = vadd.xlane.f32.xlu0 %v2221
        %v2223 = vpop.xlane.xlu0 %2222
        %v2224 = vadd.f32 %v2054, %v2055
        %2225 = vadd.xlane.f32.xlu0 %v2224
        %v2226 = vpop.xlane.xlu0 %2225
        %v2227 = vadd.f32 %v2056, %v2057
        %2228 = vadd.xlane.f32.xlu0 %v2227
        %v2229 = vpop.xlane.xlu0 %2228
        %v2230 = vadd.f32 %v2058, %v2059
        %2231 = vadd.xlane.f32.xlu0 %v2230
        %v2232 = vpop.xlane.xlu0 %2231
        %v2233 = vadd.f32 %v2060, %v2061
        %2234 = vadd.xlane.f32.xlu0 %v2233
        %v2235 = vpop.xlane.xlu0 %2234
        %v2236 = vadd.f32 %v2062, %v2063
        %2237 = vadd.xlane.f32.xlu0 %v2236
        %v2238 = vpop.xlane.xlu0 %2237
        %v2239 = vadd.f32 %v2064, %v2065
        %2240 = vadd.xlane.f32.xlu0 %v2239
        %v2241 = vpop.xlane.xlu0 %2240
        %v2242 = vadd.f32 %v2066, %v2067
        %2243 = vadd.xlane.f32.xlu0 %v2242
        %v2244 = vpop.xlane.xlu0 %2243
        %v2245 = vadd.f32 %v2068, %v2069
        %2246 = vadd.xlane.f32.xlu0 %v2245
        %v2247 = vpop.xlane.xlu0 %2246
        %v2248 = vadd.f32 %v2070, %v2071
        %2249 = vadd.xlane.f32.xlu0 %v2248
        %v2250 = vpop.xlane.xlu0 %2249
        %v2251 = vadd.f32 %v2072, %v2073
        %2252 = vadd.xlane.f32.xlu0 %v2251
        %v2253 = vpop.xlane.xlu0 %2252
        %v2254 = vadd.f32 %v2074, %v2075
        %2255 = vadd.xlane.f32.xlu0 %v2254
        %v2256 = vpop.xlane.xlu0 %2255
        %v2257 = vadd.f32 %v2076, %v2077
        %2258 = vadd.xlane.f32.xlu0 %v2257
        %v2259 = vpop.xlane.xlu0 %2258
        %v2260 = vadd.f32 %v2078, %v2079
        %2261 = vadd.xlane.f32.xlu0 %v2260
        %v2262 = vpop.xlane.xlu0 %2261
        %v2263 = vadd.f32 %v2080, %v2081
        %2264 = vadd.xlane.f32.xlu0 %v2263
        %v2265 = vpop.xlane.xlu0 %2264
        %v2266 = vadd.f32 %v2082, %v2083
        %2267 = vadd.xlane.f32.xlu0 %v2266
        %v2268 = vpop.xlane.xlu0 %2267
        %v2269 = vadd.f32 %v2084, %v2085
        %2270 = vadd.xlane.f32.xlu0 %v2269
        %v2271 = vpop.xlane.xlu0 %2270
        %v2272 = vadd.f32 %v2086, %v2087
        %2273 = vadd.xlane.f32.xlu0 %v2272
        %v2274 = vpop.xlane.xlu0 %2273
        %v2275 = vadd.f32 %v2088, %v2089
        %2276 = vadd.xlane.f32.xlu0 %v2275
        %v2277 = vpop.xlane.xlu0 %2276
        %v2278 = vadd.f32 %v2090, %v2091
        %2279 = vadd.xlane.f32.xlu0 %v2278
        %v2280 = vpop.xlane.xlu0 %2279
        %v2281 = vadd.f32 %v2092, %v2093
        %2282 = vadd.xlane.f32.xlu0 %v2281
        %v2283 = vpop.xlane.xlu0 %2282
        %v2284 = vadd.f32 %v2094, %v2095
        %2285 = vadd.xlane.f32.xlu0 %v2284
        %v2286 = vpop.xlane.xlu0 %2285
        %v2287 = vadd.f32 %v2096, %v2097
        %2288 = vadd.xlane.f32.xlu0 %v2287
        %v2289 = vpop.xlane.xlu0 %2288
        %v2290 = vmul.f32 %v2100, 0.0051020407
        %v2291 = vmul.f32 %v2103, 0.0051020407
        %v2292 = vmul.f32 %v2106, 0.0051020407
        %v2293 = vmul.f32 %v2109, 0.0051020407
        %v2294 = vmul.f32 %v2112, 0.0051020407
        %v2295 = vmul.f32 %v2115, 0.0051020407
        %v2296 = vmul.f32 %v2118, 0.0051020407
        %v2297 = vmul.f32 %v2121, 0.0051020407
        %v2298 = vmul.f32 %v2124, 0.0051020407
        %v2299 = vmul.f32 %v2127, 0.0051020407
        %v2300 = vmul.f32 %v2130, 0.0051020407
        %v2301 = vmul.f32 %v2133, 0.0051020407
        %v2302 = vmul.f32 %v2136, 0.0051020407
        %v2303 = vmul.f32 %v2139, 0.0051020407
        %v2304 = vmul.f32 %v2142, 0.0051020407
        %v2305 = vmul.f32 %v2145, 0.0051020407
        %v2306 = vmul.f32 %v2148, 0.0051020407
        %v2307 = vmul.f32 %v2151, 0.0051020407
        %v2308 = vmul.f32 %v2154, 0.0051020407
        %v2309 = vmul.f32 %v2157, 0.0051020407
        %v2310 = vmul.f32 %v2160, 0.0051020407
        %v2311 = vmul.f32 %v2163, 0.0051020407
        %v2312 = vmul.f32 %v2166, 0.0051020407
        %v2313 = vmul.f32 %v2169, 0.0051020407
        %v2314 = vmul.f32 %v2172, 0.0051020407
        %v2315 = vmul.f32 %v2175, 0.0051020407
        %v2316 = vmul.f32 %v2178, 0.0051020407
        %v2317 = vmul.f32 %v2181, 0.0051020407
        %v2318 = vmul.f32 %v2184, 0.0051020407
        %v2319 = vmul.f32 %v2187, 0.0051020407
        %v2320 = vmul.f32 %v2190, 0.0051020407
        %v2321 = vmul.f32 %v2193, 0.0051020407
        %v2322 = vmul.f32 %v2196, 0.0051020407
        %v2323 = vmul.f32 %v2199, 0.0051020407
        %v2324 = vmul.f32 %v2202, 0.0051020407
        %v2325 = vmul.f32 %v2205, 0.0051020407
        %v2326 = vmul.f32 %v2208, 0.0051020407
        %v2327 = vmul.f32 %v2211, 0.0051020407
        %v2328 = vmul.f32 %v2214, 0.0051020407
        %v2329 = vmul.f32 %v2217, 0.0051020407
        %v2330 = vmul.f32 %v2220, 0.0051020407
        %v2331 = vmul.f32 %v2223, 0.0051020407
        %v2332 = vmul.f32 %v2226, 0.0051020407
        %v2333 = vmul.f32 %v2229, 0.0051020407
        %v2334 = vmul.f32 %v2232, 0.0051020407
        %v2335 = vmul.f32 %v2235, 0.0051020407
        %v2336 = vmul.f32 %v2238, 0.0051020407
        %v2337 = vmul.f32 %v2241, 0.0051020407
        %v2338 = vmul.f32 %v2244, 0.0051020407
        %v2339 = vmul.f32 %v2247, 0.0051020407
        %v2340 = vmul.f32 %v2250, 0.0051020407
        %v2341 = vmul.f32 %v2253, 0.0051020407
        %v2342 = vmul.f32 %v2256, 0.0051020407
        %v2343 = vmul.f32 %v2259, 0.0051020407
        %v2344 = vmul.f32 %v2262, 0.0051020407
        %v2345 = vmul.f32 %v2265, 0.0051020407
        %v2346 = vmul.f32 %v2268, 0.0051020407
        %v2347 = vmul.f32 %v2271, 0.0051020407
        %v2348 = vmul.f32 %v2274, 0.0051020407
        %v2349 = vmul.f32 %v2277, 0.0051020407
        %v2350 = vmul.f32 %v2280, 0.0051020407
        %v2351 = vmul.f32 %v2283, 0.0051020407
        %v2352 = vmul.f32 %v2286, 0.0051020407
        %v2353 = vmul.f32 %v2289, 0.0051020407
        %v2354 = vadd.f32 %v2290, 1e-05
        %v2355 = vadd.f32 %v2291, 1e-05
        %v2356 = vadd.f32 %v2292, 1e-05
        %v2357 = vadd.f32 %v2293, 1e-05
        %v2358 = vadd.f32 %v2294, 1e-05
        %v2359 = vadd.f32 %v2295, 1e-05
        %v2360 = vadd.f32 %v2296, 1e-05
        %v2361 = vadd.f32 %v2297, 1e-05
        %v2362 = vadd.f32 %v2298, 1e-05
        %v2363 = vadd.f32 %v2299, 1e-05
        %v2364 = vadd.f32 %v2300, 1e-05
        %v2365 = vadd.f32 %v2301, 1e-05
        %v2366 = vadd.f32 %v2302, 1e-05
        %v2367 = vadd.f32 %v2303, 1e-05
        %v2368 = vadd.f32 %v2304, 1e-05
        %v2369 = vadd.f32 %v2305, 1e-05
        %v2370 = vadd.f32 %v2306, 1e-05
        %v2371 = vadd.f32 %v2307, 1e-05
        %v2372 = vadd.f32 %v2308, 1e-05
        %v2373 = vadd.f32 %v2309, 1e-05
        %v2374 = vadd.f32 %v2310, 1e-05
        %v2375 = vadd.f32 %v2311, 1e-05
        %v2376 = vadd.f32 %v2312, 1e-05
        %v2377 = vadd.f32 %v2313, 1e-05
        %v2378 = vadd.f32 %v2314, 1e-05
        %v2379 = vadd.f32 %v2315, 1e-05
        %v2380 = vadd.f32 %v2316, 1e-05
        %v2381 = vadd.f32 %v2317, 1e-05
        %v2382 = vadd.f32 %v2318, 1e-05
        %v2383 = vadd.f32 %v2319, 1e-05
        %v2384 = vadd.f32 %v2320, 1e-05
        %v2385 = vadd.f32 %v2321, 1e-05
        %v2386 = vadd.f32 %v2322, 1e-05
        %v2387 = vadd.f32 %v2323, 1e-05
        %v2388 = vadd.f32 %v2324, 1e-05
        %v2389 = vadd.f32 %v2325, 1e-05
        %v2390 = vadd.f32 %v2326, 1e-05
        %v2391 = vadd.f32 %v2327, 1e-05
        %v2392 = vadd.f32 %v2328, 1e-05
        %v2393 = vadd.f32 %v2329, 1e-05
        %v2394 = vadd.f32 %v2330, 1e-05
        %v2395 = vadd.f32 %v2331, 1e-05
        %v2396 = vadd.f32 %v2332, 1e-05
        %v2397 = vadd.f32 %v2333, 1e-05
        %v2398 = vadd.f32 %v2334, 1e-05
        %v2399 = vadd.f32 %v2335, 1e-05
        %v2400 = vadd.f32 %v2336, 1e-05
        %v2401 = vadd.f32 %v2337, 1e-05
        %v2402 = vadd.f32 %v2338, 1e-05
        %v2403 = vadd.f32 %v2339, 1e-05
        %v2404 = vadd.f32 %v2340, 1e-05
        %v2405 = vadd.f32 %v2341, 1e-05
        %v2406 = vadd.f32 %v2342, 1e-05
        %v2407 = vadd.f32 %v2343, 1e-05
        %v2408 = vadd.f32 %v2344, 1e-05
        %v2409 = vadd.f32 %v2345, 1e-05
        %v2410 = vadd.f32 %v2346, 1e-05
        %v2411 = vadd.f32 %v2347, 1e-05
        %v2412 = vadd.f32 %v2348, 1e-05
        %v2413 = vadd.f32 %v2349, 1e-05
        %v2414 = vadd.f32 %v2350, 1e-05
        %v2415 = vadd.f32 %v2351, 1e-05
        %v2416 = vadd.f32 %v2352, 1e-05
        %v2417 = vadd.f32 %v2353, 1e-05
        %v2418 = vrsqrt.pop %v2354
        %v2419 = vrsqrt.pop %v2355
        %v2420 = vrsqrt.pop %v2356
        %v2421 = vrsqrt.pop %v2357
        %v2422 = vrsqrt.pop %v2358
        %v2423 = vrsqrt.pop %v2359
        %v2424 = vrsqrt.pop %v2360
        %v2425 = vrsqrt.pop %v2361
        %v2426 = vrsqrt.pop %v2362
        %v2427 = vrsqrt.pop %v2363
        %v2428 = vrsqrt.pop %v2364
        %v2429 = vrsqrt.pop %v2365
        %v2430 = vrsqrt.pop %v2366
        %v2431 = vrsqrt.pop %v2367
        %v2432 = vrsqrt.pop %v2368
        %v2433 = vrsqrt.pop %v2369
        %v2434 = vrsqrt.pop %v2370
        %v2435 = vrsqrt.pop %v2371
        %v2436 = vrsqrt.pop %v2372
        %v2437 = vrsqrt.pop %v2373
        %v2438 = vrsqrt.pop %v2374
        %v2439 = vrsqrt.pop %v2375
        %v2440 = vrsqrt.pop %v2376
        %v2441 = vrsqrt.pop %v2377
        %v2442 = vrsqrt.pop %v2378
        %v2443 = vrsqrt.pop %v2379
        %v2444 = vrsqrt.pop %v2380
        %v2445 = vrsqrt.pop %v2381
        %v2446 = vrsqrt.pop %v2382
        %v2447 = vrsqrt.pop %v2383
        %v2448 = vrsqrt.pop %v2384
        %v2449 = vrsqrt.pop %v2385
        %v2450 = vrsqrt.pop %v2386
        %v2451 = vrsqrt.pop %v2387
        %v2452 = vrsqrt.pop %v2388
        %v2453 = vrsqrt.pop %v2389
        %v2454 = vrsqrt.pop %v2390
        %v2455 = vrsqrt.pop %v2391
        %v2456 = vrsqrt.pop %v2392
        %v2457 = vrsqrt.pop %v2393
        %v2458 = vrsqrt.pop %v2394
        %v2459 = vrsqrt.pop %v2395
        %v2460 = vrsqrt.pop %v2396
        %v2461 = vrsqrt.pop %v2397
        %v2462 = vrsqrt.pop %v2398
        %v2463 = vrsqrt.pop %v2399
        %v2464 = vrsqrt.pop %v2400
        %v2465 = vrsqrt.pop %v2401
        %v2466 = vrsqrt.pop %v2402
        %v2467 = vrsqrt.pop %v2403
        %v2468 = vrsqrt.pop %v2404
        %v2469 = vrsqrt.pop %v2405
        %v2470 = vrsqrt.pop %v2406
        %v2471 = vrsqrt.pop %v2407
        %v2472 = vrsqrt.pop %v2408
        %v2473 = vrsqrt.pop %v2409
        %v2474 = vrsqrt.pop %v2410
        %v2475 = vrsqrt.pop %v2411
        %v2476 = vrsqrt.pop %v2412
        %v2477 = vrsqrt.pop %v2413
        %v2478 = vrsqrt.pop %v2414
        %v2479 = vrsqrt.pop %v2415
        %v2480 = vrsqrt.pop %v2416
        %v2481 = vrsqrt.pop %v2417
        %v2482 = vmul.f32 %v2418, %v1390
        %v2483 = vmul.f32 %v2419, %v1391
        %v2484 = vmul.f32 %v2420, %v1392
        %v2485 = vmul.f32 %v2421, %v1393
        %v2486 = vmul.f32 %v2422, %v1394
        %v2487 = vmul.f32 %v2423, %v1395
        %v2488 = vmul.f32 %v2424, %v1396
        %v2489 = vmul.f32 %v2425, %v1397
        %v2490 = vmul.f32 %v2426, %v1398
        %v2491 = vmul.f32 %v2427, %v1399
        %v2492 = vmul.f32 %v2428, %v1400
        %v2493 = vmul.f32 %v2429, %v1401
        %v2494 = vmul.f32 %v2430, %v1402
        %v2495 = vmul.f32 %v2431, %v1403
        %v2496 = vmul.f32 %v2432, %v1404
        %v2497 = vmul.f32 %v2433, %v1405
        %v2498 = vmul.f32 %v2434, %v1406
        %v2499 = vmul.f32 %v2435, %v1407
        %v2500 = vmul.f32 %v2436, %v1408
        %v2501 = vmul.f32 %v2437, %v1409
        %v2502 = vmul.f32 %v2438, %v1410
        %v2503 = vmul.f32 %v2439, %v1411
        %v2504 = vmul.f32 %v2440, %v1412
        %v2505 = vmul.f32 %v2441, %v1413
        %v2506 = vmul.f32 %v2442, %v1414
        %v2507 = vmul.f32 %v2443, %v1415
        %v2508 = vmul.f32 %v2444, %v1416
        %v2509 = vmul.f32 %v2445, %v1417
        %v2510 = vmul.f32 %v2446, %v1418
        %v2511 = vmul.f32 %v2447, %v1419
        %v2512 = vmul.f32 %v2448, %v1420
        %v2513 = vmul.f32 %v2449, %v1421
        %v2514 = vmul.f32 %v2450, %v1422
        %v2515 = vmul.f32 %v2451, %v1423
        %v2516 = vmul.f32 %v2452, %v1424
        %v2517 = vmul.f32 %v2453, %v1425
        %v2518 = vmul.f32 %v2454, %v1426
        %v2519 = vmul.f32 %v2455, %v1427
        %v2520 = vmul.f32 %v2456, %v1428
        %v2521 = vmul.f32 %v2457, %v1429
        %v2522 = vmul.f32 %v2458, %v1430
        %v2523 = vmul.f32 %v2459, %v1431
        %v2524 = vmul.f32 %v2460, %v1432
        %v2525 = vmul.f32 %v2461, %v1433
        %v2526 = vmul.f32 %v2462, %v1434
        %v2527 = vmul.f32 %v2463, %v1435
        %v2528 = vmul.f32 %v2464, %v1436
        %v2529 = vmul.f32 %v2465, %v1437
        %v2530 = vmul.f32 %v2466, %v1438
        %v2531 = vmul.f32 %v2467, %v1439
        %v2532 = vmul.f32 %v2468, %v1440
        %v2533 = vmul.f32 %v2469, %v1441
        %v2534 = vmul.f32 %v2470, %v1442
        %v2535 = vmul.f32 %v2471, %v1443
        %v2536 = vmul.f32 %v2472, %v1444
        %v2537 = vmul.f32 %v2473, %v1445
        %v2538 = vmul.f32 %v2474, %v1446
        %v2539 = vmul.f32 %v2475, %v1447
        %v2540 = vmul.f32 %v2476, %v1448
        %v2541 = vmul.f32 %v2477, %v1449
        %v2542 = vmul.f32 %v2478, %v1450
        %v2543 = vmul.f32 %v2479, %v1451
        %v2544 = vmul.f32 %v2480, %v1452
        %v2545 = vmul.f32 %v2481, %v1453
        %v2546 = vmul.f32 %v1646, %v2482
        %v2547 = vmul.f32 %v1647, %v2483
        %v2548 = vmul.f32 %v1648, %v2484
        %v2549 = vmul.f32 %v1649, %v2485
        %v2550 = vmul.f32 %v1650, %v2486
        %v2551 = vmul.f32 %v1651, %v2487
        %v2552 = vmul.f32 %v1652, %v2488
        %v2553 = vmul.f32 %v1653, %v2489
        %v2554 = vmul.f32 %v1654, %v2490
        %v2555 = vmul.f32 %v1655, %v2491
        %v2556 = vmul.f32 %v1656, %v2492
        %v2557 = vmul.f32 %v1657, %v2493
        %v2558 = vmul.f32 %v1658, %v2494
        %v2559 = vmul.f32 %v1659, %v2495
        %v2560 = vmul.f32 %v1660, %v2496
        %v2561 = vmul.f32 %v1661, %v2497
        %v2562 = vmul.f32 %v1662, %v2498
        %v2563 = vmul.f32 %v1663, %v2499
        %v2564 = vmul.f32 %v1664, %v2500
        %v2565 = vmul.f32 %v1665, %v2501
        %v2566 = vmul.f32 %v1666, %v2502
        %v2567 = vmul.f32 %v1667, %v2503
        %v2568 = vmul.f32 %v1668, %v2504
        %v2569 = vmul.f32 %v1669, %v2505
        %v2570 = vmul.f32 %v1670, %v2506
        %v2571 = vmul.f32 %v1671, %v2507
        %v2572 = vmul.f32 %v1672, %v2508
        %v2573 = vmul.f32 %v1673, %v2509
        %v2574 = vmul.f32 %v1674, %v2510
        %v2575 = vmul.f32 %v1675, %v2511
        %v2576 = vmul.f32 %v1676, %v2512
        %v2577 = vmul.f32 %v1677, %v2513
        %v2578 = vmul.f32 %v1678, %v2514
        %v2579 = vmul.f32 %v1679, %v2515
        %v2580 = vmul.f32 %v1680, %v2516
        %v2581 = vmul.f32 %v1681, %v2517
        %v2582 = vmul.f32 %v1682, %v2518
        %v2583 = vmul.f32 %v1683, %v2519
        %v2584 = vmul.f32 %v1684, %v2520
        %v2585 = vmul.f32 %v1685, %v2521
        %v2586 = vmul.f32 %v1686, %v2522
        %v2587 = vmul.f32 %v1687, %v2523
        %v2588 = vmul.f32 %v1688, %v2524
        %v2589 = vmul.f32 %v1689, %v2525
        %v2590 = vmul.f32 %v1690, %v2526
        %v2591 = vmul.f32 %v1691, %v2527
        %v2592 = vmul.f32 %v1692, %v2528
        %v2593 = vmul.f32 %v1693, %v2529
        %v2594 = vmul.f32 %v1694, %v2530
        %v2595 = vmul.f32 %v1695, %v2531
        %v2596 = vmul.f32 %v1696, %v2532
        %v2597 = vmul.f32 %v1697, %v2533
        %v2598 = vmul.f32 %v1698, %v2534
        %v2599 = vmul.f32 %v1699, %v2535
        %v2600 = vmul.f32 %v1700, %v2536
        %v2601 = vmul.f32 %v1701, %v2537
        %v2602 = vmul.f32 %v1702, %v2538
        %v2603 = vmul.f32 %v1703, %v2539
        %v2604 = vmul.f32 %v1704, %v2540
        %v2605 = vmul.f32 %v1705, %v2541
        %v2606 = vmul.f32 %v1706, %v2542
        %v2607 = vmul.f32 %v1707, %v2543
        %v2608 = vmul.f32 %v1708, %v2544
        %v2609 = vmul.f32 %v1709, %v2545
        %2674 = vrot.lane.b32.xlu0 %v2546, 1
        %v2675 = vpop.permute.xlu0 %2674
        %2676 = vrot.lane.b32.xlu0 %v2547, 1
        %v2677 = vpop.permute.xlu0 %2676
        %2678 = vrot.lane.b32.xlu0 %v2548, 1
        %v2679 = vpop.permute.xlu0 %2678
        %2680 = vrot.lane.b32.xlu0 %v2549, 1
        %v2681 = vpop.permute.xlu0 %2680
        %2682 = vrot.lane.b32.xlu0 %v2550, 1
        %v2683 = vpop.permute.xlu0 %2682
        %2684 = vrot.lane.b32.xlu0 %v2551, 1
        %v2685 = vpop.permute.xlu0 %2684
        %2686 = vrot.lane.b32.xlu0 %v2552, 1
        %v2687 = vpop.permute.xlu0 %2686
        %2688 = vrot.lane.b32.xlu0 %v2553, 1
        %v2689 = vpop.permute.xlu0 %2688
        %2690 = vrot.lane.b32.xlu0 %v2554, 1
        %v2691 = vpop.permute.xlu0 %2690
        %2692 = vrot.lane.b32.xlu0 %v2555, 1
        %v2693 = vpop.permute.xlu0 %2692
        %2694 = vrot.lane.b32.xlu0 %v2556, 1
        %v2695 = vpop.permute.xlu0 %2694
        %2696 = vrot.lane.b32.xlu0 %v2557, 1
        %v2697 = vpop.permute.xlu0 %2696
        %2698 = vrot.lane.b32.xlu0 %v2558, 1
        %v2699 = vpop.permute.xlu0 %2698
        %2700 = vrot.lane.b32.xlu0 %v2559, 1
        %v2701 = vpop.permute.xlu0 %2700
        %2702 = vrot.lane.b32.xlu0 %v2560, 1
        %v2703 = vpop.permute.xlu0 %2702
        %2704 = vrot.lane.b32.xlu0 %v2561, 1
        %v2705 = vpop.permute.xlu0 %2704
        %2706 = vrot.lane.b32.xlu0 %v2562, 1
        %v2707 = vpop.permute.xlu0 %2706
        %2708 = vrot.lane.b32.xlu0 %v2563, 1
        %v2709 = vpop.permute.xlu0 %2708
        %2710 = vrot.lane.b32.xlu0 %v2564, 1
        %v2711 = vpop.permute.xlu0 %2710
        %2712 = vrot.lane.b32.xlu0 %v2565, 1
        %v2713 = vpop.permute.xlu0 %2712
        %2714 = vrot.lane.b32.xlu0 %v2566, 1
        %v2715 = vpop.permute.xlu0 %2714
        %2716 = vrot.lane.b32.xlu0 %v2567, 1
        %v2717 = vpop.permute.xlu0 %2716
        %2718 = vrot.lane.b32.xlu0 %v2568, 1
        %v2719 = vpop.permute.xlu0 %2718
        %2720 = vrot.lane.b32.xlu0 %v2569, 1
        %v2721 = vpop.permute.xlu0 %2720
        %2722 = vrot.lane.b32.xlu0 %v2570, 1
        %v2723 = vpop.permute.xlu0 %2722
        %2724 = vrot.lane.b32.xlu0 %v2571, 1
        %v2725 = vpop.permute.xlu0 %2724
        %2726 = vrot.lane.b32.xlu0 %v2572, 1
        %v2727 = vpop.permute.xlu0 %2726
        %2728 = vrot.lane.b32.xlu0 %v2573, 1
        %v2729 = vpop.permute.xlu0 %2728
        %2730 = vrot.lane.b32.xlu0 %v2574, 1
        %v2731 = vpop.permute.xlu0 %2730
        %2732 = vrot.lane.b32.xlu0 %v2575, 1
        %v2733 = vpop.permute.xlu0 %2732
        %2734 = vrot.lane.b32.xlu0 %v2576, 1
        %v2735 = vpop.permute.xlu0 %2734
        %2736 = vrot.lane.b32.xlu0 %v2577, 1
        %v2737 = vpop.permute.xlu0 %2736
        %2738 = vrot.lane.b32.xlu0 %v2578, 1
        %v2739 = vpop.permute.xlu0 %2738
        %2740 = vrot.lane.b32.xlu0 %v2579, 1
        %v2741 = vpop.permute.xlu0 %2740
        %2742 = vrot.lane.b32.xlu0 %v2580, 1
        %v2743 = vpop.permute.xlu0 %2742
        %2744 = vrot.lane.b32.xlu0 %v2581, 1
        %v2745 = vpop.permute.xlu0 %2744
        %2746 = vrot.lane.b32.xlu0 %v2582, 1
        %v2747 = vpop.permute.xlu0 %2746
        %2748 = vrot.lane.b32.xlu0 %v2583, 1
        %v2749 = vpop.permute.xlu0 %2748
        %2750 = vrot.lane.b32.xlu0 %v2584, 1
        %v2751 = vpop.permute.xlu0 %2750
        %2752 = vrot.lane.b32.xlu0 %v2585, 1
        %v2753 = vpop.permute.xlu0 %2752
        %2754 = vrot.lane.b32.xlu0 %v2586, 1
        %v2755 = vpop.permute.xlu0 %2754
        %2756 = vrot.lane.b32.xlu0 %v2587, 1
        %v2757 = vpop.permute.xlu0 %2756
        %2758 = vrot.lane.b32.xlu0 %v2588, 1
        %v2759 = vpop.permute.xlu0 %2758
        %2760 = vrot.lane.b32.xlu0 %v2589, 1
        %v2761 = vpop.permute.xlu0 %2760
        %2762 = vrot.lane.b32.xlu0 %v2590, 1
        %v2763 = vpop.permute.xlu0 %2762
        %2764 = vrot.lane.b32.xlu0 %v2591, 1
        %v2765 = vpop.permute.xlu0 %2764
        %2766 = vrot.lane.b32.xlu0 %v2592, 1
        %v2767 = vpop.permute.xlu0 %2766
        %2768 = vrot.lane.b32.xlu0 %v2593, 1
        %v2769 = vpop.permute.xlu0 %2768
        %2770 = vrot.lane.b32.xlu0 %v2594, 1
        %v2771 = vpop.permute.xlu0 %2770
        %2772 = vrot.lane.b32.xlu0 %v2595, 1
        %v2773 = vpop.permute.xlu0 %2772
        %2774 = vrot.lane.b32.xlu0 %v2596, 1
        %v2775 = vpop.permute.xlu0 %2774
        %2776 = vrot.lane.b32.xlu0 %v2597, 1
        %v2777 = vpop.permute.xlu0 %2776
        %2778 = vrot.lane.b32.xlu0 %v2598, 1
        %v2779 = vpop.permute.xlu0 %2778
        %2780 = vrot.lane.b32.xlu0 %v2599, 1
        %v2781 = vpop.permute.xlu0 %2780
        %2782 = vrot.lane.b32.xlu0 %v2600, 1
        %v2783 = vpop.permute.xlu0 %2782
        %2784 = vrot.lane.b32.xlu0 %v2601, 1
        %v2785 = vpop.permute.xlu0 %2784
        %2786 = vrot.lane.b32.xlu0 %v2602, 1
        %v2787 = vpop.permute.xlu0 %2786
        %2788 = vrot.lane.b32.xlu0 %v2603, 1
        %v2789 = vpop.permute.xlu0 %2788
        %2790 = vrot.lane.b32.xlu0 %v2604, 1
        %v2791 = vpop.permute.xlu0 %2790
        %2792 = vrot.lane.b32.xlu0 %v2605, 1
        %v2793 = vpop.permute.xlu0 %2792
        %2794 = vrot.lane.b32.xlu0 %v2606, 1
        %v2795 = vpop.permute.xlu0 %2794
        %2796 = vrot.lane.b32.xlu0 %v2607, 1
        %v2797 = vpop.permute.xlu0 %2796
        %2798 = vrot.lane.b32.xlu0 %v2608, 1
        %v2799 = vpop.permute.xlu0 %2798
        %2800 = vrot.lane.b32.xlu0 %v2609, 1
        %v2801 = vpop.permute.xlu0 %2800
        %v2866 = vsub.f32 %v1390, %v2675
        %v2867 = vsub.f32 %v1391, %v2677
        %v2868 = vsub.f32 %v1392, %v2679
        %v2869 = vsub.f32 %v1393, %v2681
        %v2870 = vsub.f32 %v1394, %v2683
        %v2871 = vsub.f32 %v1395, %v2685
        %v2872 = vsub.f32 %v1396, %v2687
        %v2873 = vsub.f32 %v1397, %v2689
        %v2874 = vsub.f32 %v1398, %v2691
        %v2875 = vsub.f32 %v1399, %v2693
        %v2876 = vsub.f32 %v1400, %v2695
        %v2877 = vsub.f32 %v1401, %v2697
        %v2878 = vsub.f32 %v1402, %v2699
        %v2879 = vsub.f32 %v1403, %v2701
        %v2880 = vsub.f32 %v1404, %v2703
        %v2881 = vsub.f32 %v1405, %v2705
        %v2882 = vsub.f32 %v1406, %v2707
        %v2883 = vsub.f32 %v1407, %v2709
        %v2884 = vsub.f32 %v1408, %v2711
        %v2885 = vsub.f32 %v1409, %v2713
        %v2886 = vsub.f32 %v1410, %v2715
        %v2887 = vsub.f32 %v1411, %v2717
        %v2888 = vsub.f32 %v1412, %v2719
        %v2889 = vsub.f32 %v1413, %v2721
        %v2890 = vsub.f32 %v1414, %v2723
        %v2891 = vsub.f32 %v1415, %v2725
        %v2892 = vsub.f32 %v1416, %v2727
        %v2893 = vsub.f32 %v1417, %v2729
        %v2894 = vsub.f32 %v1418, %v2731
        %v2895 = vsub.f32 %v1419, %v2733
        %v2896 = vsub.f32 %v1420, %v2735
        %v2897 = vsub.f32 %v1421, %v2737
        %v2898 = vsub.f32 %v1422, %v2739
        %v2899 = vsub.f32 %v1423, %v2741
        %v2900 = vsub.f32 %v1424, %v2743
        %v2901 = vsub.f32 %v1425, %v2745
        %v2902 = vsub.f32 %v1426, %v2747
        %v2903 = vsub.f32 %v1427, %v2749
        %v2904 = vsub.f32 %v1428, %v2751
        %v2905 = vsub.f32 %v1429, %v2753
        %v2906 = vsub.f32 %v1430, %v2755
        %v2907 = vsub.f32 %v1431, %v2757
        %v2908 = vsub.f32 %v1432, %v2759
        %v2909 = vsub.f32 %v1433, %v2761
        %v2910 = vsub.f32 %v1434, %v2763
        %v2911 = vsub.f32 %v1435, %v2765
        %v2912 = vsub.f32 %v1436, %v2767
        %v2913 = vsub.f32 %v1437, %v2769
        %v2914 = vsub.f32 %v1438, %v2771
        %v2915 = vsub.f32 %v1439, %v2773
        %v2916 = vsub.f32 %v1440, %v2775
        %v2917 = vsub.f32 %v1441, %v2777
        %v2918 = vsub.f32 %v1442, %v2779
        %v2919 = vsub.f32 %v1443, %v2781
        %v2920 = vsub.f32 %v1444, %v2783
        %v2921 = vsub.f32 %v1445, %v2785
        %v2922 = vsub.f32 %v1446, %v2787
        %v2923 = vsub.f32 %v1447, %v2789
        %v2924 = vsub.f32 %v1448, %v2791
        %v2925 = vsub.f32 %v1449, %v2793
        %v2926 = vsub.f32 %v1450, %v2795
        %v2927 = vsub.f32 %v1451, %v2797
        %v2928 = vsub.f32 %v1452, %v2799
        %v2929 = vsub.f32 %v1453, %v2801
        %2931 = vset.pattern.permute.xlu0 0
        %2932 = vperm.xlu0 %2931, %v2482
        %v2933 = vpop.permute.xlu0 %2932
        %2936 = vset.pattern.permute.xlu0 0
        %2937 = vperm.xlu0 %2936, %v2483
        %v2938 = vpop.permute.xlu0 %2937
        %2941 = vset.pattern.permute.xlu0 0
        %2942 = vperm.xlu0 %2941, %v2484
        %v2943 = vpop.permute.xlu0 %2942
        %2946 = vset.pattern.permute.xlu0 0
        %2947 = vperm.xlu0 %2946, %v2485
        %v2948 = vpop.permute.xlu0 %2947
        %2951 = vset.pattern.permute.xlu0 0
        %2952 = vperm.xlu0 %2951, %v2486
        %v2953 = vpop.permute.xlu0 %2952
        %2956 = vset.pattern.permute.xlu0 0
        %2957 = vperm.xlu0 %2956, %v2487
        %v2958 = vpop.permute.xlu0 %2957
        %2961 = vset.pattern.permute.xlu0 0
        %2962 = vperm.xlu0 %2961, %v2488
        %v2963 = vpop.permute.xlu0 %2962
        %2966 = vset.pattern.permute.xlu0 0
        %2967 = vperm.xlu0 %2966, %v2489
        %v2968 = vpop.permute.xlu0 %2967
        %2971 = vset.pattern.permute.xlu0 0
        %2972 = vperm.xlu0 %2971, %v2490
        %v2973 = vpop.permute.xlu0 %2972
        %2976 = vset.pattern.permute.xlu0 0
        %2977 = vperm.xlu0 %2976, %v2491
        %v2978 = vpop.permute.xlu0 %2977
        %2981 = vset.pattern.permute.xlu0 0
        %2982 = vperm.xlu0 %2981, %v2492
        %v2983 = vpop.permute.xlu0 %2982
        %2986 = vset.pattern.permute.xlu0 0
        %2987 = vperm.xlu0 %2986, %v2493
        %v2988 = vpop.permute.xlu0 %2987
        %2991 = vset.pattern.permute.xlu0 0
        %2992 = vperm.xlu0 %2991, %v2494
        %v2993 = vpop.permute.xlu0 %2992
        %2996 = vset.pattern.permute.xlu0 0
        %2997 = vperm.xlu0 %2996, %v2495
        %v2998 = vpop.permute.xlu0 %2997
        %3001 = vset.pattern.permute.xlu0 0
        %3002 = vperm.xlu0 %3001, %v2496
        %v3003 = vpop.permute.xlu0 %3002
        %3006 = vset.pattern.permute.xlu0 0
        %3007 = vperm.xlu0 %3006, %v2497
        %v3008 = vpop.permute.xlu0 %3007
        %3011 = vset.pattern.permute.xlu0 0
        %3012 = vperm.xlu0 %3011, %v2498
        %v3013 = vpop.permute.xlu0 %3012
        %3016 = vset.pattern.permute.xlu0 0
        %3017 = vperm.xlu0 %3016, %v2499
        %v3018 = vpop.permute.xlu0 %3017
        %3021 = vset.pattern.permute.xlu0 0
        %3022 = vperm.xlu0 %3021, %v2500
        %v3023 = vpop.permute.xlu0 %3022
        %3026 = vset.pattern.permute.xlu0 0
        %3027 = vperm.xlu0 %3026, %v2501
        %v3028 = vpop.permute.xlu0 %3027
        %3031 = vset.pattern.permute.xlu0 0
        %3032 = vperm.xlu0 %3031, %v2502
        %v3033 = vpop.permute.xlu0 %3032
        %3036 = vset.pattern.permute.xlu0 0
        %3037 = vperm.xlu0 %3036, %v2503
        %v3038 = vpop.permute.xlu0 %3037
        %3041 = vset.pattern.permute.xlu0 0
        %3042 = vperm.xlu0 %3041, %v2504
        %v3043 = vpop.permute.xlu0 %3042
        %3046 = vset.pattern.permute.xlu0 0
        %3047 = vperm.xlu0 %3046, %v2505
        %v3048 = vpop.permute.xlu0 %3047
        %3051 = vset.pattern.permute.xlu0 0
        %3052 = vperm.xlu0 %3051, %v2506
        %v3053 = vpop.permute.xlu0 %3052
        %3056 = vset.pattern.permute.xlu0 0
        %3057 = vperm.xlu0 %3056, %v2507
        %v3058 = vpop.permute.xlu0 %3057
        %3061 = vset.pattern.permute.xlu0 0
        %3062 = vperm.xlu0 %3061, %v2508
        %v3063 = vpop.permute.xlu0 %3062
        %3066 = vset.pattern.permute.xlu0 0
        %3067 = vperm.xlu0 %3066, %v2509
        %v3068 = vpop.permute.xlu0 %3067
        %3071 = vset.pattern.permute.xlu0 0
        %3072 = vperm.xlu0 %3071, %v2510
        %v3073 = vpop.permute.xlu0 %3072
        %3076 = vset.pattern.permute.xlu0 0
        %3077 = vperm.xlu0 %3076, %v2511
        %v3078 = vpop.permute.xlu0 %3077
        %3081 = vset.pattern.permute.xlu0 0
        %3082 = vperm.xlu0 %3081, %v2512
        %v3083 = vpop.permute.xlu0 %3082
        %3086 = vset.pattern.permute.xlu0 0
        %3087 = vperm.xlu0 %3086, %v2513
        %v3088 = vpop.permute.xlu0 %3087
        %3091 = vset.pattern.permute.xlu0 0
        %3092 = vperm.xlu0 %3091, %v2514
        %v3093 = vpop.permute.xlu0 %3092
        %3096 = vset.pattern.permute.xlu0 0
        %3097 = vperm.xlu0 %3096, %v2515
        %v3098 = vpop.permute.xlu0 %3097
        %3101 = vset.pattern.permute.xlu0 0
        %3102 = vperm.xlu0 %3101, %v2516
        %v3103 = vpop.permute.xlu0 %3102
        %3106 = vset.pattern.permute.xlu0 0
        %3107 = vperm.xlu0 %3106, %v2517
        %v3108 = vpop.permute.xlu0 %3107
        %3111 = vset.pattern.permute.xlu0 0
        %3112 = vperm.xlu0 %3111, %v2518
        %v3113 = vpop.permute.xlu0 %3112
        %3116 = vset.pattern.permute.xlu0 0
        %3117 = vperm.xlu0 %3116, %v2519
        %v3118 = vpop.permute.xlu0 %3117
        %3121 = vset.pattern.permute.xlu0 0
        %3122 = vperm.xlu0 %3121, %v2520
        %v3123 = vpop.permute.xlu0 %3122
        %3126 = vset.pattern.permute.xlu0 0
        %3127 = vperm.xlu0 %3126, %v2521
        %v3128 = vpop.permute.xlu0 %3127
        %3131 = vset.pattern.permute.xlu0 0
        %3132 = vperm.xlu0 %3131, %v2522
        %v3133 = vpop.permute.xlu0 %3132
        %3136 = vset.pattern.permute.xlu0 0
        %3137 = vperm.xlu0 %3136, %v2523
        %v3138 = vpop.permute.xlu0 %3137
        %3141 = vset.pattern.permute.xlu0 0
        %3142 = vperm.xlu0 %3141, %v2524
        %v3143 = vpop.permute.xlu0 %3142
        %3146 = vset.pattern.permute.xlu0 0
        %3147 = vperm.xlu0 %3146, %v2525
        %v3148 = vpop.permute.xlu0 %3147
        %3151 = vset.pattern.permute.xlu0 0
        %3152 = vperm.xlu0 %3151, %v2526
        %v3153 = vpop.permute.xlu0 %3152
        %3156 = vset.pattern.permute.xlu0 0
        %3157 = vperm.xlu0 %3156, %v2527
        %v3158 = vpop.permute.xlu0 %3157
        %3161 = vset.pattern.permute.xlu0 0
        %3162 = vperm.xlu0 %3161, %v2528
        %v3163 = vpop.permute.xlu0 %3162
        %3166 = vset.pattern.permute.xlu0 0
        %3167 = vperm.xlu0 %3166, %v2529
        %v3168 = vpop.permute.xlu0 %3167
        %3171 = vset.pattern.permute.xlu0 0
        %3172 = vperm.xlu0 %3171, %v2530
        %v3173 = vpop.permute.xlu0 %3172
        %3176 = vset.pattern.permute.xlu0 0
        %3177 = vperm.xlu0 %3176, %v2531
        %v3178 = vpop.permute.xlu0 %3177
        %3181 = vset.pattern.permute.xlu0 0
        %3182 = vperm.xlu0 %3181, %v2532
        %v3183 = vpop.permute.xlu0 %3182
        %3186 = vset.pattern.permute.xlu0 0
        %3187 = vperm.xlu0 %3186, %v2533
        %v3188 = vpop.permute.xlu0 %3187
        %3191 = vset.pattern.permute.xlu0 0
        %3192 = vperm.xlu0 %3191, %v2534
        %v3193 = vpop.permute.xlu0 %3192
        %3196 = vset.pattern.permute.xlu0 0
        %3197 = vperm.xlu0 %3196, %v2535
        %v3198 = vpop.permute.xlu0 %3197
        %3201 = vset.pattern.permute.xlu0 0
        %3202 = vperm.xlu0 %3201, %v2536
        %v3203 = vpop.permute.xlu0 %3202
        %3206 = vset.pattern.permute.xlu0 0
        %3207 = vperm.xlu0 %3206, %v2537
        %v3208 = vpop.permute.xlu0 %3207
        %3211 = vset.pattern.permute.xlu0 0
        %3212 = vperm.xlu0 %3211, %v2538
        %v3213 = vpop.permute.xlu0 %3212
        %3216 = vset.pattern.permute.xlu0 0
        %3217 = vperm.xlu0 %3216, %v2539
        %v3218 = vpop.permute.xlu0 %3217
        %3221 = vset.pattern.permute.xlu0 0
        %3222 = vperm.xlu0 %3221, %v2540
        %v3223 = vpop.permute.xlu0 %3222
        %3226 = vset.pattern.permute.xlu0 0
        %3227 = vperm.xlu0 %3226, %v2541
        %v3228 = vpop.permute.xlu0 %3227
        %3231 = vset.pattern.permute.xlu0 0
        %3232 = vperm.xlu0 %3231, %v2542
        %v3233 = vpop.permute.xlu0 %3232
        %3236 = vset.pattern.permute.xlu0 0
        %3237 = vperm.xlu0 %3236, %v2543
        %v3238 = vpop.permute.xlu0 %3237
        %3241 = vset.pattern.permute.xlu0 0
        %3242 = vperm.xlu0 %3241, %v2544
        %v3243 = vpop.permute.xlu0 %3242
        %3246 = vset.pattern.permute.xlu0 0
        %3247 = vperm.xlu0 %3246, %v2545
        %v3248 = vpop.permute.xlu0 %3247
        %v3250 = vmul.f32 %v1072, %v2933
        %v3251 = vmul.f32 %v1074, %v2933
        %v3252 = vmul.f32 %v1076, %v2938
        %v3253 = vmul.f32 %v1078, %v2938
        %v3254 = vmul.f32 %v1082, %v2943
        %v3255 = vmul.f32 %v1084, %v2943
        %v3256 = vmul.f32 %v1086, %v2948
        %v3257 = vmul.f32 %v1088, %v2948
        %v3258 = vmul.f32 %v1092, %v2953
        %v3259 = vmul.f32 %v1094, %v2953
        %v3260 = vmul.f32 %v1096, %v2958
        %v3261 = vmul.f32 %v1098, %v2958
        %v3262 = vmul.f32 %v1102, %v2963
        %v3263 = vmul.f32 %v1104, %v2963
        %v3264 = vmul.f32 %v1106, %v2968
        %v3265 = vmul.f32 %v1108, %v2968
        %v3266 = vmul.f32 %v1112, %v2973
        %v3267 = vmul.f32 %v1114, %v2973
        %v3268 = vmul.f32 %v1116, %v2978
        %v3269 = vmul.f32 %v1118, %v2978
        %v3270 = vmul.f32 %v1122, %v2983
        %v3271 = vmul.f32 %v1124, %v2983
        %v3272 = vmul.f32 %v1126, %v2988
        %v3273 = vmul.f32 %v1128, %v2988
        %v3274 = vmul.f32 %v1132, %v2993
        %v3275 = vmul.f32 %v1134, %v2993
        %v3276 = vmul.f32 %v1136, %v2998
        %v3277 = vmul.f32 %v1138, %v2998
        %v3278 = vmul.f32 %v1142, %v3003
        %v3279 = vmul.f32 %v1144, %v3003
        %v3280 = vmul.f32 %v1146, %v3008
        %v3281 = vmul.f32 %v1148, %v3008
        %v3282 = vmul.f32 %v1152, %v3013
        %v3283 = vmul.f32 %v1154, %v3013
        %v3284 = vmul.f32 %v1156, %v3018
        %v3285 = vmul.f32 %v1158, %v3018
        %v3286 = vmul.f32 %v1162, %v3023
        %v3287 = vmul.f32 %v1164, %v3023
        %v3288 = vmul.f32 %v1166, %v3028
        %v3289 = vmul.f32 %v1168, %v3028
        %v3290 = vmul.f32 %v1172, %v3033
        %v3291 = vmul.f32 %v1174, %v3033
        %v3292 = vmul.f32 %v1176, %v3038
        %v3293 = vmul.f32 %v1178, %v3038
        %v3294 = vmul.f32 %v1182, %v3043
        %v3295 = vmul.f32 %v1184, %v3043
        %v3296 = vmul.f32 %v1186, %v3048
        %v3297 = vmul.f32 %v1188, %v3048
        %v3298 = vmul.f32 %v1192, %v3053
        %v3299 = vmul.f32 %v1194, %v3053
        %v3300 = vmul.f32 %v1196, %v3058
        %v3301 = vmul.f32 %v1198, %v3058
        %v3302 = vmul.f32 %v1202, %v3063
        %v3303 = vmul.f32 %v1204, %v3063
        %v3304 = vmul.f32 %v1206, %v3068
        %v3305 = vmul.f32 %v1208, %v3068
        %v3306 = vmul.f32 %v1212, %v3073
        %v3307 = vmul.f32 %v1214, %v3073
        %v3308 = vmul.f32 %v1216, %v3078
        %v3309 = vmul.f32 %v1218, %v3078
        %v3310 = vmul.f32 %v1222, %v3083
        %v3311 = vmul.f32 %v1224, %v3083
        %v3312 = vmul.f32 %v1226, %v3088
        %v3313 = vmul.f32 %v1228, %v3088
        %v3314 = vmul.f32 %v1232, %v3093
        %v3315 = vmul.f32 %v1234, %v3093
        %v3316 = vmul.f32 %v1236, %v3098
        %v3317 = vmul.f32 %v1238, %v3098
        %v3318 = vmul.f32 %v1242, %v3103
        %v3319 = vmul.f32 %v1244, %v3103
        %v3320 = vmul.f32 %v1246, %v3108
        %v3321 = vmul.f32 %v1248, %v3108
        %v3322 = vmul.f32 %v1252, %v3113
        %v3323 = vmul.f32 %v1254, %v3113
        %v3324 = vmul.f32 %v1256, %v3118
        %v3325 = vmul.f32 %v1258, %v3118
        %v3326 = vmul.f32 %v1262, %v3123
        %v3327 = vmul.f32 %v1264, %v3123
        %v3328 = vmul.f32 %v1266, %v3128
        %v3329 = vmul.f32 %v1268, %v3128
        %v3330 = vmul.f32 %v1272, %v3133
        %v3331 = vmul.f32 %v1274, %v3133
        %v3332 = vmul.f32 %v1276, %v3138
        %v3333 = vmul.f32 %v1278, %v3138
        %v3334 = vmul.f32 %v1282, %v3143
        %v3335 = vmul.f32 %v1284, %v3143
        %v3336 = vmul.f32 %v1286, %v3148
        %v3337 = vmul.f32 %v1288, %v3148
        %v3338 = vmul.f32 %v1292, %v3153
        %v3339 = vmul.f32 %v1294, %v3153
        %v3340 = vmul.f32 %v1296, %v3158
        %v3341 = vmul.f32 %v1298, %v3158
        %v3342 = vmul.f32 %v1302, %v3163
        %v3343 = vmul.f32 %v1304, %v3163
        %v3344 = vmul.f32 %v1306, %v3168
        %v3345 = vmul.f32 %v1308, %v3168
        %v3346 = vmul.f32 %v1312, %v3173
        %v3347 = vmul.f32 %v1314, %v3173
        %v3348 = vmul.f32 %v1316, %v3178
        %v3349 = vmul.f32 %v1318, %v3178
        %v3350 = vmul.f32 %v1322, %v3183
        %v3351 = vmul.f32 %v1324, %v3183
        %v3352 = vmul.f32 %v1326, %v3188
        %v3353 = vmul.f32 %v1328, %v3188
        %v3354 = vmul.f32 %v1332, %v3193
        %v3355 = vmul.f32 %v1334, %v3193
        %v3356 = vmul.f32 %v1336, %v3198
        %v3357 = vmul.f32 %v1338, %v3198
        %v3358 = vmul.f32 %v1342, %v3203
        %v3359 = vmul.f32 %v1344, %v3203
        %v3360 = vmul.f32 %v1346, %v3208
        %v3361 = vmul.f32 %v1348, %v3208
        %v3362 = vmul.f32 %v1352, %v3213
        %v3363 = vmul.f32 %v1354, %v3213
        %v3364 = vmul.f32 %v1356, %v3218
        %v3365 = vmul.f32 %v1358, %v3218
        %v3366 = vmul.f32 %v1362, %v3223
        %v3367 = vmul.f32 %v1364, %v3223
        %v3368 = vmul.f32 %v1366, %v3228
        %v3369 = vmul.f32 %v1368, %v3228
        %v3370 = vmul.f32 %v1372, %v3233
        %v3371 = vmul.f32 %v1374, %v3233
        %v3372 = vmul.f32 %v1376, %v3238
        %v3373 = vmul.f32 %v1378, %v3238
        %v3374 = vmul.f32 %v1382, %v3243
        %v3375 = vmul.f32 %v1384, %v3243
        %v3376 = vmul.f32 %v1386, %v3248
        %v3377 = vmul.f32 %v1388, %v3248
        %3379 = vset.pattern.permute.xlu0 1
        %3380 = vperm.xlu0 %3379, %v2866
        %v3381 = vpop.permute.xlu0 %3380
        %3384 = vset.pattern.permute.xlu0 1
        %3385 = vperm.xlu0 %3384, %v2867
        %v3386 = vpop.permute.xlu0 %3385
        %3389 = vset.pattern.permute.xlu0 1
        %3390 = vperm.xlu0 %3389, %v2868
        %v3391 = vpop.permute.xlu0 %3390
        %3394 = vset.pattern.permute.xlu0 1
        %3395 = vperm.xlu0 %3394, %v2869
        %v3396 = vpop.permute.xlu0 %3395
        %3399 = vset.pattern.permute.xlu0 1
        %3400 = vperm.xlu0 %3399, %v2870
        %v3401 = vpop.permute.xlu0 %3400
        %3404 = vset.pattern.permute.xlu0 1
        %3405 = vperm.xlu0 %3404, %v2871
        %v3406 = vpop.permute.xlu0 %3405
        %3409 = vset.pattern.permute.xlu0 1
        %3410 = vperm.xlu0 %3409, %v2872
        %v3411 = vpop.permute.xlu0 %3410
        %3414 = vset.pattern.permute.xlu0 1
        %3415 = vperm.xlu0 %3414, %v2873
        %v3416 = vpop.permute.xlu0 %3415
        %3419 = vset.pattern.permute.xlu0 1
        %3420 = vperm.xlu0 %3419, %v2874
        %v3421 = vpop.permute.xlu0 %3420
        %3424 = vset.pattern.permute.xlu0 1
        %3425 = vperm.xlu0 %3424, %v2875
        %v3426 = vpop.permute.xlu0 %3425
        %3429 = vset.pattern.permute.xlu0 1
        %3430 = vperm.xlu0 %3429, %v2876
        %v3431 = vpop.permute.xlu0 %3430
        %3434 = vset.pattern.permute.xlu0 1
        %3435 = vperm.xlu0 %3434, %v2877
        %v3436 = vpop.permute.xlu0 %3435
        %3439 = vset.pattern.permute.xlu0 1
        %3440 = vperm.xlu0 %3439, %v2878
        %v3441 = vpop.permute.xlu0 %3440
        %3444 = vset.pattern.permute.xlu0 1
        %3445 = vperm.xlu0 %3444, %v2879
        %v3446 = vpop.permute.xlu0 %3445
        %3449 = vset.pattern.permute.xlu0 1
        %3450 = vperm.xlu0 %3449, %v2880
        %v3451 = vpop.permute.xlu0 %3450
        %3454 = vset.pattern.permute.xlu0 1
        %3455 = vperm.xlu0 %3454, %v2881
        %v3456 = vpop.permute.xlu0 %3455
        %3459 = vset.pattern.permute.xlu0 1
        %3460 = vperm.xlu0 %3459, %v2882
        %v3461 = vpop.permute.xlu0 %3460
        %3464 = vset.pattern.permute.xlu0 1
        %3465 = vperm.xlu0 %3464, %v2883
        %v3466 = vpop.permute.xlu0 %3465
        %3469 = vset.pattern.permute.xlu0 1
        %3470 = vperm.xlu0 %3469, %v2884
        %v3471 = vpop.permute.xlu0 %3470
        %3474 = vset.pattern.permute.xlu0 1
        %3475 = vperm.xlu0 %3474, %v2885
        %v3476 = vpop.permute.xlu0 %3475
        %3479 = vset.pattern.permute.xlu0 1
        %3480 = vperm.xlu0 %3479, %v2886
        %v3481 = vpop.permute.xlu0 %3480
        %3484 = vset.pattern.permute.xlu0 1
        %3485 = vperm.xlu0 %3484, %v2887
        %v3486 = vpop.permute.xlu0 %3485
        %3489 = vset.pattern.permute.xlu0 1
        %3490 = vperm.xlu0 %3489, %v2888
        %v3491 = vpop.permute.xlu0 %3490
        %3494 = vset.pattern.permute.xlu0 1
        %3495 = vperm.xlu0 %3494, %v2889
        %v3496 = vpop.permute.xlu0 %3495
        %3499 = vset.pattern.permute.xlu0 1
        %3500 = vperm.xlu0 %3499, %v2890
        %v3501 = vpop.permute.xlu0 %3500
        %3504 = vset.pattern.permute.xlu0 1
        %3505 = vperm.xlu0 %3504, %v2891
        %v3506 = vpop.permute.xlu0 %3505
        %3509 = vset.pattern.permute.xlu0 1
        %3510 = vperm.xlu0 %3509, %v2892
        %v3511 = vpop.permute.xlu0 %3510
        %3514 = vset.pattern.permute.xlu0 1
        %3515 = vperm.xlu0 %3514, %v2893
        %v3516 = vpop.permute.xlu0 %3515
        %3519 = vset.pattern.permute.xlu0 1
        %3520 = vperm.xlu0 %3519, %v2894
        %v3521 = vpop.permute.xlu0 %3520
        %3524 = vset.pattern.permute.xlu0 1
        %3525 = vperm.xlu0 %3524, %v2895
        %v3526 = vpop.permute.xlu0 %3525
        %3529 = vset.pattern.permute.xlu0 1
        %3530 = vperm.xlu0 %3529, %v2896
        %v3531 = vpop.permute.xlu0 %3530
        %3534 = vset.pattern.permute.xlu0 1
        %3535 = vperm.xlu0 %3534, %v2897
        %v3536 = vpop.permute.xlu0 %3535
        %3539 = vset.pattern.permute.xlu0 1
        %3540 = vperm.xlu0 %3539, %v2898
        %v3541 = vpop.permute.xlu0 %3540
        %3544 = vset.pattern.permute.xlu0 1
        %3545 = vperm.xlu0 %3544, %v2899
        %v3546 = vpop.permute.xlu0 %3545
        %3549 = vset.pattern.permute.xlu0 1
        %3550 = vperm.xlu0 %3549, %v2900
        %v3551 = vpop.permute.xlu0 %3550
        %3554 = vset.pattern.permute.xlu0 1
        %3555 = vperm.xlu0 %3554, %v2901
        %v3556 = vpop.permute.xlu0 %3555
        %3559 = vset.pattern.permute.xlu0 1
        %3560 = vperm.xlu0 %3559, %v2902
        %v3561 = vpop.permute.xlu0 %3560
        %3564 = vset.pattern.permute.xlu0 1
        %3565 = vperm.xlu0 %3564, %v2903
        %v3566 = vpop.permute.xlu0 %3565
        %3569 = vset.pattern.permute.xlu0 1
        %3570 = vperm.xlu0 %3569, %v2904
        %v3571 = vpop.permute.xlu0 %3570
        %3574 = vset.pattern.permute.xlu0 1
        %3575 = vperm.xlu0 %3574, %v2905
        %v3576 = vpop.permute.xlu0 %3575
        %3579 = vset.pattern.permute.xlu0 1
        %3580 = vperm.xlu0 %3579, %v2906
        %v3581 = vpop.permute.xlu0 %3580
        %3584 = vset.pattern.permute.xlu0 1
        %3585 = vperm.xlu0 %3584, %v2907
        %v3586 = vpop.permute.xlu0 %3585
        %3589 = vset.pattern.permute.xlu0 1
        %3590 = vperm.xlu0 %3589, %v2908
        %v3591 = vpop.permute.xlu0 %3590
        %3594 = vset.pattern.permute.xlu0 1
        %3595 = vperm.xlu0 %3594, %v2909
        %v3596 = vpop.permute.xlu0 %3595
        %3599 = vset.pattern.permute.xlu0 1
        %3600 = vperm.xlu0 %3599, %v2910
        %v3601 = vpop.permute.xlu0 %3600
        %3604 = vset.pattern.permute.xlu0 1
        %3605 = vperm.xlu0 %3604, %v2911
        %v3606 = vpop.permute.xlu0 %3605
        %3609 = vset.pattern.permute.xlu0 1
        %3610 = vperm.xlu0 %3609, %v2912
        %v3611 = vpop.permute.xlu0 %3610
        %3614 = vset.pattern.permute.xlu0 1
        %3615 = vperm.xlu0 %3614, %v2913
        %v3616 = vpop.permute.xlu0 %3615
        %3619 = vset.pattern.permute.xlu0 1
        %3620 = vperm.xlu0 %3619, %v2914
        %v3621 = vpop.permute.xlu0 %3620
        %3624 = vset.pattern.permute.xlu0 1
        %3625 = vperm.xlu0 %3624, %v2915
        %v3626 = vpop.permute.xlu0 %3625
        %3629 = vset.pattern.permute.xlu0 1
        %3630 = vperm.xlu0 %3629, %v2916
        %v3631 = vpop.permute.xlu0 %3630
        %3634 = vset.pattern.permute.xlu0 1
        %3635 = vperm.xlu0 %3634, %v2917
        %v3636 = vpop.permute.xlu0 %3635
        %3639 = vset.pattern.permute.xlu0 1
        %3640 = vperm.xlu0 %3639, %v2918
        %v3641 = vpop.permute.xlu0 %3640
        %3644 = vset.pattern.permute.xlu0 1
        %3645 = vperm.xlu0 %3644, %v2919
        %v3646 = vpop.permute.xlu0 %3645
        %3649 = vset.pattern.permute.xlu0 1
        %3650 = vperm.xlu0 %3649, %v2920
        %v3651 = vpop.permute.xlu0 %3650
        %3654 = vset.pattern.permute.xlu0 1
        %3655 = vperm.xlu0 %3654, %v2921
        %v3656 = vpop.permute.xlu0 %3655
        %3659 = vset.pattern.permute.xlu0 1
        %3660 = vperm.xlu0 %3659, %v2922
        %v3661 = vpop.permute.xlu0 %3660
        %3664 = vset.pattern.permute.xlu0 1
        %3665 = vperm.xlu0 %3664, %v2923
        %v3666 = vpop.permute.xlu0 %3665
        %3669 = vset.pattern.permute.xlu0 1
        %3670 = vperm.xlu0 %3669, %v2924
        %v3671 = vpop.permute.xlu0 %3670
        %3674 = vset.pattern.permute.xlu0 1
        %3675 = vperm.xlu0 %3674, %v2925
        %v3676 = vpop.permute.xlu0 %3675
        %3679 = vset.pattern.permute.xlu0 1
        %3680 = vperm.xlu0 %3679, %v2926
        %v3681 = vpop.permute.xlu0 %3680
        %3684 = vset.pattern.permute.xlu0 1
        %3685 = vperm.xlu0 %3684, %v2927
        %v3686 = vpop.permute.xlu0 %3685
        %3689 = vset.pattern.permute.xlu0 1
        %3690 = vperm.xlu0 %3689, %v2928
        %v3691 = vpop.permute.xlu0 %3690
        %3694 = vset.pattern.permute.xlu0 1
        %3695 = vperm.xlu0 %3694, %v2929
        %v3696 = vpop.permute.xlu0 %3695
        %v3698 = vadd.f32 %v3250, %v3381
        %v3699 = vadd.f32 %v3251, %v3381
        %v3700 = vadd.f32 %v3252, %v3386
        %v3701 = vadd.f32 %v3253, %v3386
        %v3702 = vadd.f32 %v3254, %v3391
        %v3703 = vadd.f32 %v3255, %v3391
        %v3704 = vadd.f32 %v3256, %v3396
        %v3705 = vadd.f32 %v3257, %v3396
        %v3706 = vadd.f32 %v3258, %v3401
        %v3707 = vadd.f32 %v3259, %v3401
        %v3708 = vadd.f32 %v3260, %v3406
        %v3709 = vadd.f32 %v3261, %v3406
        %v3710 = vadd.f32 %v3262, %v3411
        %v3711 = vadd.f32 %v3263, %v3411
        %v3712 = vadd.f32 %v3264, %v3416
        %v3713 = vadd.f32 %v3265, %v3416
        %v3714 = vadd.f32 %v3266, %v3421
        %v3715 = vadd.f32 %v3267, %v3421
        %v3716 = vadd.f32 %v3268, %v3426
        %v3717 = vadd.f32 %v3269, %v3426
        %v3718 = vadd.f32 %v3270, %v3431
        %v3719 = vadd.f32 %v3271, %v3431
        %v3720 = vadd.f32 %v3272, %v3436
        %v3721 = vadd.f32 %v3273, %v3436
        %v3722 = vadd.f32 %v3274, %v3441
        %v3723 = vadd.f32 %v3275, %v3441
        %v3724 = vadd.f32 %v3276, %v3446
        %v3725 = vadd.f32 %v3277, %v3446
        %v3726 = vadd.f32 %v3278, %v3451
        %v3727 = vadd.f32 %v3279, %v3451
        %v3728 = vadd.f32 %v3280, %v3456
        %v3729 = vadd.f32 %v3281, %v3456
        %v3730 = vadd.f32 %v3282, %v3461
        %v3731 = vadd.f32 %v3283, %v3461
        %v3732 = vadd.f32 %v3284, %v3466
        %v3733 = vadd.f32 %v3285, %v3466
        %v3734 = vadd.f32 %v3286, %v3471
        %v3735 = vadd.f32 %v3287, %v3471
        %v3736 = vadd.f32 %v3288, %v3476
        %v3737 = vadd.f32 %v3289, %v3476
        %v3738 = vadd.f32 %v3290, %v3481
        %v3739 = vadd.f32 %v3291, %v3481
        %v3740 = vadd.f32 %v3292, %v3486
        %v3741 = vadd.f32 %v3293, %v3486
        %v3742 = vadd.f32 %v3294, %v3491
        %v3743 = vadd.f32 %v3295, %v3491
        %v3744 = vadd.f32 %v3296, %v3496
        %v3745 = vadd.f32 %v3297, %v3496
        %v3746 = vadd.f32 %v3298, %v3501
        %v3747 = vadd.f32 %v3299, %v3501
        %v3748 = vadd.f32 %v3300, %v3506
        %v3749 = vadd.f32 %v3301, %v3506
        %v3750 = vadd.f32 %v3302, %v3511
        %v3751 = vadd.f32 %v3303, %v3511
        %v3752 = vadd.f32 %v3304, %v3516
        %v3753 = vadd.f32 %v3305, %v3516
        %v3754 = vadd.f32 %v3306, %v3521
        %v3755 = vadd.f32 %v3307, %v3521
        %v3756 = vadd.f32 %v3308, %v3526
        %v3757 = vadd.f32 %v3309, %v3526
        %v3758 = vadd.f32 %v3310, %v3531
        %v3759 = vadd.f32 %v3311, %v3531
        %v3760 = vadd.f32 %v3312, %v3536
        %v3761 = vadd.f32 %v3313, %v3536
        %v3762 = vadd.f32 %v3314, %v3541
        %v3763 = vadd.f32 %v3315, %v3541
        %v3764 = vadd.f32 %v3316, %v3546
        %v3765 = vadd.f32 %v3317, %v3546
        %v3766 = vadd.f32 %v3318, %v3551
        %v3767 = vadd.f32 %v3319, %v3551
        %v3768 = vadd.f32 %v3320, %v3556
        %v3769 = vadd.f32 %v3321, %v3556
        %v3770 = vadd.f32 %v3322, %v3561
        %v3771 = vadd.f32 %v3323, %v3561
        %v3772 = vadd.f32 %v3324, %v3566
        %v3773 = vadd.f32 %v3325, %v3566
        %v3774 = vadd.f32 %v3326, %v3571
        %v3775 = vadd.f32 %v3327, %v3571
        %v3776 = vadd.f32 %v3328, %v3576
        %v3777 = vadd.f32 %v3329, %v3576
        %v3778 = vadd.f32 %v3330, %v3581
        %v3779 = vadd.f32 %v3331, %v3581
        %v3780 = vadd.f32 %v3332, %v3586
        %v3781 = vadd.f32 %v3333, %v3586
        %v3782 = vadd.f32 %v3334, %v3591
        %v3783 = vadd.f32 %v3335, %v3591
        %v3784 = vadd.f32 %v3336, %v3596
        %v3785 = vadd.f32 %v3337, %v3596
        %v3786 = vadd.f32 %v3338, %v3601
        %v3787 = vadd.f32 %v3339, %v3601
        %v3788 = vadd.f32 %v3340, %v3606
        %v3789 = vadd.f32 %v3341, %v3606
        %v3790 = vadd.f32 %v3342, %v3611
        %v3791 = vadd.f32 %v3343, %v3611
        %v3792 = vadd.f32 %v3344, %v3616
        %v3793 = vadd.f32 %v3345, %v3616
        %v3794 = vadd.f32 %v3346, %v3621
        %v3795 = vadd.f32 %v3347, %v3621
        %v3796 = vadd.f32 %v3348, %v3626
        %v3797 = vadd.f32 %v3349, %v3626
        %v3798 = vadd.f32 %v3350, %v3631
        %v3799 = vadd.f32 %v3351, %v3631
        %v3800 = vadd.f32 %v3352, %v3636
        %v3801 = vadd.f32 %v3353, %v3636
        %v3802 = vadd.f32 %v3354, %v3641
        %v3803 = vadd.f32 %v3355, %v3641
        %v3804 = vadd.f32 %v3356, %v3646
        %v3805 = vadd.f32 %v3357, %v3646
        %v3806 = vadd.f32 %v3358, %v3651
        %v3807 = vadd.f32 %v3359, %v3651
        %v3808 = vadd.f32 %v3360, %v3656
        %v3809 = vadd.f32 %v3361, %v3656
        %v3810 = vadd.f32 %v3362, %v3661
        %v3811 = vadd.f32 %v3363, %v3661
        %v3812 = vadd.f32 %v3364, %v3666
        %v3813 = vadd.f32 %v3365, %v3666
        %v3814 = vadd.f32 %v3366, %v3671
        %v3815 = vadd.f32 %v3367, %v3671
        %v3816 = vadd.f32 %v3368, %v3676
        %v3817 = vadd.f32 %v3369, %v3676
        %v3818 = vadd.f32 %v3370, %v3681
        %v3819 = vadd.f32 %v3371, %v3681
        %v3820 = vadd.f32 %v3372, %v3686
        %v3821 = vadd.f32 %v3373, %v3686
        %v3822 = vadd.f32 %v3374, %v3691
        %v3823 = vadd.f32 %v3375, %v3691
        %v3824 = vadd.f32 %v3376, %v3696
        %v3825 = vadd.f32 %v3377, %v3696
        %v3826 = vld [vmem:[%s440] sm:$0xff]
        %v3827 = vld [vmem:[%s440 + $0x8] sm:$0xff]
        %v3828 = vld [vmem:[%s440 + $0x10] sm:$0xff]
        %v3829 = vld [vmem:[%s440 + $0x18] sm:$0xff]
        %v3830 = vld [vmem:[%s440 + $0x20] sm:$0xff]
        %v3831 = vld [vmem:[%s440 + $0x28] sm:$0xff]
        %v3832 = vld [vmem:[%s440 + $0x30] sm:$0xff]
        %v3833 = vld [vmem:[%s440 + $0x38] sm:$0xff]
        %v3834 = vld [vmem:[%s440 + $0x40] sm:$0xff]
        %v3835 = vld [vmem:[%s440 + $0x48] sm:$0xff]
        %v3836 = vld [vmem:[%s440 + $0x50] sm:$0xff]
        %v3837 = vld [vmem:[%s440 + $0x58] sm:$0xff]
        %v3838 = vld [vmem:[%s440 + $0x60] sm:$0xff]
        %v3839 = vld [vmem:[%s440 + $0x68] sm:$0xff]
        %v3840 = vld [vmem:[%s440 + $0x70] sm:$0xff]
        %v3841 = vld [vmem:[%s440 + $0x78] sm:$0xff]
        %v3842 = vld [vmem:[%s440 + $0x80] sm:$0xff]
        %v3843 = vld [vmem:[%s440 + $0x88] sm:$0xff]
        %v3844 = vld [vmem:[%s440 + $0x90] sm:$0xff]
        %v3845 = vld [vmem:[%s440 + $0x98] sm:$0xff]
        %v3846 = vld [vmem:[%s440 + $0xa0] sm:$0xff]
        %v3847 = vld [vmem:[%s440 + $0xa8] sm:$0xff]
        %v3848 = vld [vmem:[%s440 + $0xb0] sm:$0xff]
        %v3849 = vld [vmem:[%s440 + $0xb8] sm:$0xff]
        %v3850 = vld [vmem:[%s440 + $0xc0] sm:$0xff]
        %v3851 = vld [vmem:[%s440 + $0xc8] sm:$0xff]
        %v3852 = vld [vmem:[%s440 + $0xd0] sm:$0xff]
        %v3853 = vld [vmem:[%s440 + $0xd8] sm:$0xff]
        %v3854 = vld [vmem:[%s440 + $0xe0] sm:$0xff]
        %v3855 = vld [vmem:[%s440 + $0xe8] sm:$0xff]
        %v3856 = vld [vmem:[%s440 + $0xf0] sm:$0xff]
        %v3857 = vld [vmem:[%s440 + $0xf8] sm:$0xff]
        %v3858 = vld [vmem:[%s440 + $0x100] sm:$0xff]
        %v3859 = vld [vmem:[%s440 + $0x108] sm:$0xff]
        %v3860 = vld [vmem:[%s440 + $0x110] sm:$0xff]
        %v3861 = vld [vmem:[%s440 + $0x118] sm:$0xff]
        %v3862 = vld [vmem:[%s440 + $0x120] sm:$0xff]
        %v3863 = vld [vmem:[%s440 + $0x128] sm:$0xff]
        %v3864 = vld [vmem:[%s440 + $0x130] sm:$0xff]
        %v3865 = vld [vmem:[%s440 + $0x138] sm:$0xff]
        %v3866 = vld [vmem:[%s440 + $0x140] sm:$0xff]
        %v3867 = vld [vmem:[%s440 + $0x148] sm:$0xff]
        %v3868 = vld [vmem:[%s440 + $0x150] sm:$0xff]
        %v3869 = vld [vmem:[%s440 + $0x158] sm:$0xff]
        %v3870 = vld [vmem:[%s440 + $0x160] sm:$0xff]
        %v3871 = vld [vmem:[%s440 + $0x168] sm:$0xff]
        %v3872 = vld [vmem:[%s440 + $0x170] sm:$0xff]
        %v3873 = vld [vmem:[%s440 + $0x178] sm:$0xff]
        %v3874 = vld [vmem:[%s440 + $0x180] sm:$0xff]
        %v3875 = vld [vmem:[%s440 + $0x188] sm:$0xff]
        %v3876 = vld [vmem:[%s440 + $0x190] sm:$0xff]
        %v3877 = vld [vmem:[%s440 + $0x198] sm:$0xff]
        %v3878 = vld [vmem:[%s440 + $0x1a0] sm:$0xff]
        %v3879 = vld [vmem:[%s440 + $0x1a8] sm:$0xff]
        %v3880 = vld [vmem:[%s440 + $0x1b0] sm:$0xff]
        %v3881 = vld [vmem:[%s440 + $0x1b8] sm:$0xff]
        %v3882 = vld [vmem:[%s440 + $0x1c0] sm:$0xff]
        %v3883 = vld [vmem:[%s440 + $0x1c8] sm:$0xff]
        %v3884 = vld [vmem:[%s440 + $0x1d0] sm:$0xff]
        %v3885 = vld [vmem:[%s440 + $0x1d8] sm:$0xff]
        %v3886 = vld [vmem:[%s440 + $0x1e0] sm:$0xff]
        %v3887 = vld [vmem:[%s440 + $0x1e8] sm:$0xff]
        %v3888 = vld [vmem:[%s440 + $0x1f0] sm:$0xff]
        %v3889 = vld [vmem:[%s440 + $0x1f8] sm:$0xff]
        %v3890 = vunpack.c.l.bf16 %v3826
        %v3891 = vunpack.c.h.bf16 %v3826
        %v3892 = vunpack.c.l.bf16 %v3827
        %v3893 = vunpack.c.h.bf16 %v3827
        %v3894 = vunpack.c.l.bf16 %v3828
        %v3895 = vunpack.c.h.bf16 %v3828
        %v3896 = vunpack.c.l.bf16 %v3829
        %v3897 = vunpack.c.h.bf16 %v3829
        %v3898 = vunpack.c.l.bf16 %v3830
        %v3899 = vunpack.c.h.bf16 %v3830
        %v3900 = vunpack.c.l.bf16 %v3831
        %v3901 = vunpack.c.h.bf16 %v3831
        %v3902 = vunpack.c.l.bf16 %v3832
        %v3903 = vunpack.c.h.bf16 %v3832
        %v3904 = vunpack.c.l.bf16 %v3833
        %v3905 = vunpack.c.h.bf16 %v3833
        %v3906 = vunpack.c.l.bf16 %v3834
        %v3907 = vunpack.c.h.bf16 %v3834
        %v3908 = vunpack.c.l.bf16 %v3835
        %v3909 = vunpack.c.h.bf16 %v3835
        %v3910 = vunpack.c.l.bf16 %v3836
        %v3911 = vunpack.c.h.bf16 %v3836
        %v3912 = vunpack.c.l.bf16 %v3837
        %v3913 = vunpack.c.h.bf16 %v3837
        %v3914 = vunpack.c.l.bf16 %v3838
        %v3915 = vunpack.c.h.bf16 %v3838
        %v3916 = vunpack.c.l.bf16 %v3839
        %v3917 = vunpack.c.h.bf16 %v3839
        %v3918 = vunpack.c.l.bf16 %v3840
        %v3919 = vunpack.c.h.bf16 %v3840
        %v3920 = vunpack.c.l.bf16 %v3841
        %v3921 = vunpack.c.h.bf16 %v3841
        %v3922 = vunpack.c.l.bf16 %v3842
        %v3923 = vunpack.c.h.bf16 %v3842
        %v3924 = vunpack.c.l.bf16 %v3843
        %v3925 = vunpack.c.h.bf16 %v3843
        %v3926 = vunpack.c.l.bf16 %v3844
        %v3927 = vunpack.c.h.bf16 %v3844
        %v3928 = vunpack.c.l.bf16 %v3845
        %v3929 = vunpack.c.h.bf16 %v3845
        %v3930 = vunpack.c.l.bf16 %v3846
        %v3931 = vunpack.c.h.bf16 %v3846
        %v3932 = vunpack.c.l.bf16 %v3847
        %v3933 = vunpack.c.h.bf16 %v3847
        %v3934 = vunpack.c.l.bf16 %v3848
        %v3935 = vunpack.c.h.bf16 %v3848
        %v3936 = vunpack.c.l.bf16 %v3849
        %v3937 = vunpack.c.h.bf16 %v3849
        %v3938 = vunpack.c.l.bf16 %v3850
        %v3939 = vunpack.c.h.bf16 %v3850
        %v3940 = vunpack.c.l.bf16 %v3851
        %v3941 = vunpack.c.h.bf16 %v3851
        %v3942 = vunpack.c.l.bf16 %v3852
        %v3943 = vunpack.c.h.bf16 %v3852
        %v3944 = vunpack.c.l.bf16 %v3853
        %v3945 = vunpack.c.h.bf16 %v3853
        %v3946 = vunpack.c.l.bf16 %v3854
        %v3947 = vunpack.c.h.bf16 %v3854
        %v3948 = vunpack.c.l.bf16 %v3855
        %v3949 = vunpack.c.h.bf16 %v3855
        %v3950 = vunpack.c.l.bf16 %v3856
        %v3951 = vunpack.c.h.bf16 %v3856
        %v3952 = vunpack.c.l.bf16 %v3857
        %v3953 = vunpack.c.h.bf16 %v3857
        %v3954 = vunpack.c.l.bf16 %v3858
        %v3955 = vunpack.c.h.bf16 %v3858
        %v3956 = vunpack.c.l.bf16 %v3859
        %v3957 = vunpack.c.h.bf16 %v3859
        %v3958 = vunpack.c.l.bf16 %v3860
        %v3959 = vunpack.c.h.bf16 %v3860
        %v3960 = vunpack.c.l.bf16 %v3861
        %v3961 = vunpack.c.h.bf16 %v3861
        %v3962 = vunpack.c.l.bf16 %v3862
        %v3963 = vunpack.c.h.bf16 %v3862
        %v3964 = vunpack.c.l.bf16 %v3863
        %v3965 = vunpack.c.h.bf16 %v3863
        %v3966 = vunpack.c.l.bf16 %v3864
        %v3967 = vunpack.c.h.bf16 %v3864
        %v3968 = vunpack.c.l.bf16 %v3865
        %v3969 = vunpack.c.h.bf16 %v3865
        %v3970 = vunpack.c.l.bf16 %v3866
        %v3971 = vunpack.c.h.bf16 %v3866
        %v3972 = vunpack.c.l.bf16 %v3867
        %v3973 = vunpack.c.h.bf16 %v3867
        %v3974 = vunpack.c.l.bf16 %v3868
        %v3975 = vunpack.c.h.bf16 %v3868
        %v3976 = vunpack.c.l.bf16 %v3869
        %v3977 = vunpack.c.h.bf16 %v3869
        %v3978 = vunpack.c.l.bf16 %v3870
        %v3979 = vunpack.c.h.bf16 %v3870
        %v3980 = vunpack.c.l.bf16 %v3871
        %v3981 = vunpack.c.h.bf16 %v3871
        %v3982 = vunpack.c.l.bf16 %v3872
        %v3983 = vunpack.c.h.bf16 %v3872
        %v3984 = vunpack.c.l.bf16 %v3873
        %v3985 = vunpack.c.h.bf16 %v3873
        %v3986 = vunpack.c.l.bf16 %v3874
        %v3987 = vunpack.c.h.bf16 %v3874
        %v3988 = vunpack.c.l.bf16 %v3875
        %v3989 = vunpack.c.h.bf16 %v3875
        %v3990 = vunpack.c.l.bf16 %v3876
        %v3991 = vunpack.c.h.bf16 %v3876
        %v3992 = vunpack.c.l.bf16 %v3877
        %v3993 = vunpack.c.h.bf16 %v3877
        %v3994 = vunpack.c.l.bf16 %v3878
        %v3995 = vunpack.c.h.bf16 %v3878
        %v3996 = vunpack.c.l.bf16 %v3879
        %v3997 = vunpack.c.h.bf16 %v3879
        %v3998 = vunpack.c.l.bf16 %v3880
        %v3999 = vunpack.c.h.bf16 %v3880
        %v4000 = vunpack.c.l.bf16 %v3881
        %v4001 = vunpack.c.h.bf16 %v3881
        %v4002 = vunpack.c.l.bf16 %v3882
        %v4003 = vunpack.c.h.bf16 %v3882
        %v4004 = vunpack.c.l.bf16 %v3883
        %v4005 = vunpack.c.h.bf16 %v3883
        %v4006 = vunpack.c.l.bf16 %v3884
        %v4007 = vunpack.c.h.bf16 %v3884
        %v4008 = vunpack.c.l.bf16 %v3885
        %v4009 = vunpack.c.h.bf16 %v3885
        %v4010 = vunpack.c.l.bf16 %v3886
        %v4011 = vunpack.c.h.bf16 %v3886
        %v4012 = vunpack.c.l.bf16 %v3887
        %v4013 = vunpack.c.h.bf16 %v3887
        %v4014 = vunpack.c.l.bf16 %v3888
        %v4015 = vunpack.c.h.bf16 %v3888
        %v4016 = vunpack.c.l.bf16 %v3889
        %v4017 = vunpack.c.h.bf16 %v3889
        %v4018 = vadd.f32 %v3698, %v3890
        %v4019 = vadd.f32 %v3699, %v3891
        %v4020 = vadd.f32 %v3700, %v3892
        %v4021 = vadd.f32 %v3701, %v3893
        %v4022 = vadd.f32 %v3702, %v3894
        %v4023 = vadd.f32 %v3703, %v3895
        %v4024 = vadd.f32 %v3704, %v3896
        %v4025 = vadd.f32 %v3705, %v3897
        %v4026 = vadd.f32 %v3706, %v3898
        %v4027 = vadd.f32 %v3707, %v3899
        %v4028 = vadd.f32 %v3708, %v3900
        %v4029 = vadd.f32 %v3709, %v3901
        %v4030 = vadd.f32 %v3710, %v3902
        %v4031 = vadd.f32 %v3711, %v3903
        %v4032 = vadd.f32 %v3712, %v3904
        %v4033 = vadd.f32 %v3713, %v3905
        %v4034 = vadd.f32 %v3714, %v3906
        %v4035 = vadd.f32 %v3715, %v3907
        %v4036 = vadd.f32 %v3716, %v3908
        %v4037 = vadd.f32 %v3717, %v3909
        %v4038 = vadd.f32 %v3718, %v3910
        %v4039 = vadd.f32 %v3719, %v3911
        %v4040 = vadd.f32 %v3720, %v3912
        %v4041 = vadd.f32 %v3721, %v3913
        %v4042 = vadd.f32 %v3722, %v3914
        %v4043 = vadd.f32 %v3723, %v3915
        %v4044 = vadd.f32 %v3724, %v3916
        %v4045 = vadd.f32 %v3725, %v3917
        %v4046 = vadd.f32 %v3726, %v3918
        %v4047 = vadd.f32 %v3727, %v3919
        %v4048 = vadd.f32 %v3728, %v3920
        %v4049 = vadd.f32 %v3729, %v3921
        %v4050 = vadd.f32 %v3730, %v3922
        %v4051 = vadd.f32 %v3731, %v3923
        %v4052 = vadd.f32 %v3732, %v3924
        %v4053 = vadd.f32 %v3733, %v3925
        %v4054 = vadd.f32 %v3734, %v3926
        %v4055 = vadd.f32 %v3735, %v3927
        %v4056 = vadd.f32 %v3736, %v3928
        %v4057 = vadd.f32 %v3737, %v3929
        %v4058 = vadd.f32 %v3738, %v3930
        %v4059 = vadd.f32 %v3739, %v3931
        %v4060 = vadd.f32 %v3740, %v3932
        %v4061 = vadd.f32 %v3741, %v3933
        %v4062 = vadd.f32 %v3742, %v3934
        %v4063 = vadd.f32 %v3743, %v3935
        %v4064 = vadd.f32 %v3744, %v3936
        %v4065 = vadd.f32 %v3745, %v3937
        %v4066 = vadd.f32 %v3746, %v3938
        %v4067 = vadd.f32 %v3747, %v3939
        %v4068 = vadd.f32 %v3748, %v3940
        %v4069 = vadd.f32 %v3749, %v3941
        %v4070 = vadd.f32 %v3750, %v3942
        %v4071 = vadd.f32 %v3751, %v3943
        %v4072 = vadd.f32 %v3752, %v3944
        %v4073 = vadd.f32 %v3753, %v3945
        %v4074 = vadd.f32 %v3754, %v3946
        %v4075 = vadd.f32 %v3755, %v3947
        %v4076 = vadd.f32 %v3756, %v3948
        %v4077 = vadd.f32 %v3757, %v3949
        %v4078 = vadd.f32 %v3758, %v3950
        %v4079 = vadd.f32 %v3759, %v3951
        %v4080 = vadd.f32 %v3760, %v3952
        %v4081 = vadd.f32 %v3761, %v3953
        %v4082 = vadd.f32 %v3762, %v3954
        %v4083 = vadd.f32 %v3763, %v3955
        %v4084 = vadd.f32 %v3764, %v3956
        %v4085 = vadd.f32 %v3765, %v3957
        %v4086 = vadd.f32 %v3766, %v3958
        %v4087 = vadd.f32 %v3767, %v3959
        %v4088 = vadd.f32 %v3768, %v3960
        %v4089 = vadd.f32 %v3769, %v3961
        %v4090 = vadd.f32 %v3770, %v3962
        %v4091 = vadd.f32 %v3771, %v3963
        %v4092 = vadd.f32 %v3772, %v3964
        %v4093 = vadd.f32 %v3773, %v3965
        %v4094 = vadd.f32 %v3774, %v3966
        %v4095 = vadd.f32 %v3775, %v3967
        %v4096 = vadd.f32 %v3776, %v3968
        %v4097 = vadd.f32 %v3777, %v3969
        %v4098 = vadd.f32 %v3778, %v3970
        %v4099 = vadd.f32 %v3779, %v3971
        %v4100 = vadd.f32 %v3780, %v3972
        %v4101 = vadd.f32 %v3781, %v3973
        %v4102 = vadd.f32 %v3782, %v3974
        %v4103 = vadd.f32 %v3783, %v3975
        %v4104 = vadd.f32 %v3784, %v3976
        %v4105 = vadd.f32 %v3785, %v3977
        %v4106 = vadd.f32 %v3786, %v3978
        %v4107 = vadd.f32 %v3787, %v3979
        %v4108 = vadd.f32 %v3788, %v3980
        %v4109 = vadd.f32 %v3789, %v3981
        %v4110 = vadd.f32 %v3790, %v3982
        %v4111 = vadd.f32 %v3791, %v3983
        %v4112 = vadd.f32 %v3792, %v3984
        %v4113 = vadd.f32 %v3793, %v3985
        %v4114 = vadd.f32 %v3794, %v3986
        %v4115 = vadd.f32 %v3795, %v3987
        %v4116 = vadd.f32 %v3796, %v3988
        %v4117 = vadd.f32 %v3797, %v3989
        %v4118 = vadd.f32 %v3798, %v3990
        %v4119 = vadd.f32 %v3799, %v3991
        %v4120 = vadd.f32 %v3800, %v3992
        %v4121 = vadd.f32 %v3801, %v3993
        %v4122 = vadd.f32 %v3802, %v3994
        %v4123 = vadd.f32 %v3803, %v3995
        %v4124 = vadd.f32 %v3804, %v3996
        %v4125 = vadd.f32 %v3805, %v3997
        %v4126 = vadd.f32 %v3806, %v3998
        %v4127 = vadd.f32 %v3807, %v3999
        %v4128 = vadd.f32 %v3808, %v4000
        %v4129 = vadd.f32 %v3809, %v4001
        %v4130 = vadd.f32 %v3810, %v4002
        %v4131 = vadd.f32 %v3811, %v4003
        %v4132 = vadd.f32 %v3812, %v4004
        %v4133 = vadd.f32 %v3813, %v4005
        %v4134 = vadd.f32 %v3814, %v4006
        %v4135 = vadd.f32 %v3815, %v4007
        %v4136 = vadd.f32 %v3816, %v4008
        %v4137 = vadd.f32 %v3817, %v4009
        %v4138 = vadd.f32 %v3818, %v4010
        %v4139 = vadd.f32 %v3819, %v4011
        %v4140 = vadd.f32 %v3820, %v4012
        %v4141 = vadd.f32 %v3821, %v4013
        %v4142 = vadd.f32 %v3822, %v4014
        %v4143 = vadd.f32 %v3823, %v4015
        %v4144 = vadd.f32 %v3824, %v4016
        %v4145 = vadd.f32 %v3825, %v4017
        %v4146 = vmax.f32 %v4018, 0.0
        %v4147 = vmax.f32 %v4019, 0.0
        %v4148 = vmax.f32 %v4020, 0.0
        %v4149 = vmax.f32 %v4021, 0.0
        %v4150 = vmax.f32 %v4022, 0.0
        %v4151 = vmax.f32 %v4023, 0.0
        %v4152 = vmax.f32 %v4024, 0.0
        %v4153 = vmax.f32 %v4025, 0.0
        %v4154 = vmax.f32 %v4026, 0.0
        %v4155 = vmax.f32 %v4027, 0.0
        %v4156 = vmax.f32 %v4028, 0.0
        %v4157 = vmax.f32 %v4029, 0.0
        %v4158 = vmax.f32 %v4030, 0.0
        %v4159 = vmax.f32 %v4031, 0.0
        %v4160 = vmax.f32 %v4032, 0.0
        %v4161 = vmax.f32 %v4033, 0.0
        %v4162 = vmax.f32 %v4034, 0.0
        %v4163 = vmax.f32 %v4035, 0.0
        %v4164 = vmax.f32 %v4036, 0.0
        %v4165 = vmax.f32 %v4037, 0.0
        %v4166 = vmax.f32 %v4038, 0.0
        %v4167 = vmax.f32 %v4039, 0.0
        %v4168 = vmax.f32 %v4040, 0.0
        %v4169 = vmax.f32 %v4041, 0.0
        %v4170 = vmax.f32 %v4042, 0.0
        %v4171 = vmax.f32 %v4043, 0.0
        %v4172 = vmax.f32 %v4044, 0.0
        %v4173 = vmax.f32 %v4045, 0.0
        %v4174 = vmax.f32 %v4046, 0.0
        %v4175 = vmax.f32 %v4047, 0.0
        %v4176 = vmax.f32 %v4048, 0.0
        %v4177 = vmax.f32 %v4049, 0.0
        %v4178 = vmax.f32 %v4050, 0.0
        %v4179 = vmax.f32 %v4051, 0.0
        %v4180 = vmax.f32 %v4052, 0.0
        %v4181 = vmax.f32 %v4053, 0.0
        %v4182 = vmax.f32 %v4054, 0.0
        %v4183 = vmax.f32 %v4055, 0.0
        %v4184 = vmax.f32 %v4056, 0.0
        %v4185 = vmax.f32 %v4057, 0.0
        %v4186 = vmax.f32 %v4058, 0.0
        %v4187 = vmax.f32 %v4059, 0.0
        %v4188 = vmax.f32 %v4060, 0.0
        %v4189 = vmax.f32 %v4061, 0.0
        %v4190 = vmax.f32 %v4062, 0.0
        %v4191 = vmax.f32 %v4063, 0.0
        %v4192 = vmax.f32 %v4064, 0.0
        %v4193 = vmax.f32 %v4065, 0.0
        %v4194 = vmax.f32 %v4066, 0.0
        %v4195 = vmax.f32 %v4067, 0.0
        %v4196 = vmax.f32 %v4068, 0.0
        %v4197 = vmax.f32 %v4069, 0.0
        %v4198 = vmax.f32 %v4070, 0.0
        %v4199 = vmax.f32 %v4071, 0.0
        %v4200 = vmax.f32 %v4072, 0.0
        %v4201 = vmax.f32 %v4073, 0.0
        %v4202 = vmax.f32 %v4074, 0.0
        %v4203 = vmax.f32 %v4075, 0.0
        %v4204 = vmax.f32 %v4076, 0.0
        %v4205 = vmax.f32 %v4077, 0.0
        %v4206 = vmax.f32 %v4078, 0.0
        %v4207 = vmax.f32 %v4079, 0.0
        %v4208 = vmax.f32 %v4080, 0.0
        %v4209 = vmax.f32 %v4081, 0.0
        %v4210 = vmax.f32 %v4082, 0.0
        %v4211 = vmax.f32 %v4083, 0.0
        %v4212 = vmax.f32 %v4084, 0.0
        %v4213 = vmax.f32 %v4085, 0.0
        %v4214 = vmax.f32 %v4086, 0.0
        %v4215 = vmax.f32 %v4087, 0.0
        %v4216 = vmax.f32 %v4088, 0.0
        %v4217 = vmax.f32 %v4089, 0.0
        %v4218 = vmax.f32 %v4090, 0.0
        %v4219 = vmax.f32 %v4091, 0.0
        %v4220 = vmax.f32 %v4092, 0.0
        %v4221 = vmax.f32 %v4093, 0.0
        %v4222 = vmax.f32 %v4094, 0.0
        %v4223 = vmax.f32 %v4095, 0.0
        %v4224 = vmax.f32 %v4096, 0.0
        %v4225 = vmax.f32 %v4097, 0.0
        %v4226 = vmax.f32 %v4098, 0.0
        %v4227 = vmax.f32 %v4099, 0.0
        %v4228 = vmax.f32 %v4100, 0.0
        %v4229 = vmax.f32 %v4101, 0.0
        %v4230 = vmax.f32 %v4102, 0.0
        %v4231 = vmax.f32 %v4103, 0.0
        %v4232 = vmax.f32 %v4104, 0.0
        %v4233 = vmax.f32 %v4105, 0.0
        %v4234 = vmax.f32 %v4106, 0.0
        %v4235 = vmax.f32 %v4107, 0.0
        %v4236 = vmax.f32 %v4108, 0.0
        %v4237 = vmax.f32 %v4109, 0.0
        %v4238 = vmax.f32 %v4110, 0.0
        %v4239 = vmax.f32 %v4111, 0.0
        %v4240 = vmax.f32 %v4112, 0.0
        %v4241 = vmax.f32 %v4113, 0.0
        %v4242 = vmax.f32 %v4114, 0.0
        %v4243 = vmax.f32 %v4115, 0.0
        %v4244 = vmax.f32 %v4116, 0.0
        %v4245 = vmax.f32 %v4117, 0.0
        %v4246 = vmax.f32 %v4118, 0.0
        %v4247 = vmax.f32 %v4119, 0.0
        %v4248 = vmax.f32 %v4120, 0.0
        %v4249 = vmax.f32 %v4121, 0.0
        %v4250 = vmax.f32 %v4122, 0.0
        %v4251 = vmax.f32 %v4123, 0.0
        %v4252 = vmax.f32 %v4124, 0.0
        %v4253 = vmax.f32 %v4125, 0.0
        %v4254 = vmax.f32 %v4126, 0.0
        %v4255 = vmax.f32 %v4127, 0.0
        %v4256 = vmax.f32 %v4128, 0.0
        %v4257 = vmax.f32 %v4129, 0.0
        %v4258 = vmax.f32 %v4130, 0.0
        %v4259 = vmax.f32 %v4131, 0.0
        %v4260 = vmax.f32 %v4132, 0.0
        %v4261 = vmax.f32 %v4133, 0.0
        %v4262 = vmax.f32 %v4134, 0.0
        %v4263 = vmax.f32 %v4135, 0.0
        %v4264 = vmax.f32 %v4136, 0.0
        %v4265 = vmax.f32 %v4137, 0.0
        %v4266 = vmax.f32 %v4138, 0.0
        %v4267 = vmax.f32 %v4139, 0.0
        %v4268 = vmax.f32 %v4140, 0.0
        %v4269 = vmax.f32 %v4141, 0.0
        %v4270 = vmax.f32 %v4142, 0.0
        %v4271 = vmax.f32 %v4143, 0.0
        %v4272 = vmax.f32 %v4144, 0.0
        %v4273 = vmax.f32 %v4145, 0.0
        %v4274 = vsel %vm1840, %v4146, 0.0
        %v4275 = vsel %vm1841, %v4147, 0.0
        %v4276 = vsel %vm1840, %v4148, 0.0
        %v4277 = vsel %vm1841, %v4149, 0.0
        %v4278 = vsel %vm1840, %v4150, 0.0
        %v4279 = vsel %vm1841, %v4151, 0.0
        %v4280 = vsel %vm1840, %v4152, 0.0
        %v4281 = vsel %vm1841, %v4153, 0.0
        %v4282 = vsel %vm1840, %v4154, 0.0
        %v4283 = vsel %vm1841, %v4155, 0.0
        %v4284 = vsel %vm1840, %v4156, 0.0
        %v4285 = vsel %vm1841, %v4157, 0.0
        %v4286 = vsel %vm1840, %v4158, 0.0
        %v4287 = vsel %vm1841, %v4159, 0.0
        %v4288 = vsel %vm1840, %v4160, 0.0
        %v4289 = vsel %vm1841, %v4161, 0.0
        %v4290 = vsel %vm1840, %v4162, 0.0
        %v4291 = vsel %vm1841, %v4163, 0.0
        %v4292 = vsel %vm1840, %v4164, 0.0
        %v4293 = vsel %vm1841, %v4165, 0.0
        %v4294 = vsel %vm1840, %v4166, 0.0
        %v4295 = vsel %vm1841, %v4167, 0.0
        %v4296 = vsel %vm1840, %v4168, 0.0
        %v4297 = vsel %vm1841, %v4169, 0.0
        %v4298 = vsel %vm1840, %v4170, 0.0
        %v4299 = vsel %vm1841, %v4171, 0.0
        %v4300 = vsel %vm1840, %v4172, 0.0
        %v4301 = vsel %vm1841, %v4173, 0.0
        %v4302 = vsel %vm1840, %v4174, 0.0
        %v4303 = vsel %vm1841, %v4175, 0.0
        %v4304 = vsel %vm1840, %v4176, 0.0
        %v4305 = vsel %vm1841, %v4177, 0.0
        %v4306 = vsel %vm1840, %v4178, 0.0
        %v4307 = vsel %vm1841, %v4179, 0.0
        %v4308 = vsel %vm1840, %v4180, 0.0
        %v4309 = vsel %vm1841, %v4181, 0.0
        %v4310 = vsel %vm1840, %v4182, 0.0
        %v4311 = vsel %vm1841, %v4183, 0.0
        %v4312 = vsel %vm1840, %v4184, 0.0
        %v4313 = vsel %vm1841, %v4185, 0.0
        %v4314 = vsel %vm1840, %v4186, 0.0
        %v4315 = vsel %vm1841, %v4187, 0.0
        %v4316 = vsel %vm1840, %v4188, 0.0
        %v4317 = vsel %vm1841, %v4189, 0.0
        %v4318 = vsel %vm1840, %v4190, 0.0
        %v4319 = vsel %vm1841, %v4191, 0.0
        %v4320 = vsel %vm1840, %v4192, 0.0
        %v4321 = vsel %vm1841, %v4193, 0.0
        %v4322 = vsel %vm1840, %v4194, 0.0
        %v4323 = vsel %vm1841, %v4195, 0.0
        %v4324 = vsel %vm1840, %v4196, 0.0
        %v4325 = vsel %vm1841, %v4197, 0.0
        %v4326 = vsel %vm1840, %v4198, 0.0
        %v4327 = vsel %vm1841, %v4199, 0.0
        %v4328 = vsel %vm1840, %v4200, 0.0
        %v4329 = vsel %vm1841, %v4201, 0.0
        %v4330 = vsel %vm1840, %v4202, 0.0
        %v4331 = vsel %vm1841, %v4203, 0.0
        %v4332 = vsel %vm1840, %v4204, 0.0
        %v4333 = vsel %vm1841, %v4205, 0.0
        %v4334 = vsel %vm1840, %v4206, 0.0
        %v4335 = vsel %vm1841, %v4207, 0.0
        %v4336 = vsel %vm1840, %v4208, 0.0
        %v4337 = vsel %vm1841, %v4209, 0.0
        %v4338 = vsel %vm1840, %v4210, 0.0
        %v4339 = vsel %vm1841, %v4211, 0.0
        %v4340 = vsel %vm1840, %v4212, 0.0
        %v4341 = vsel %vm1841, %v4213, 0.0
        %v4342 = vsel %vm1840, %v4214, 0.0
        %v4343 = vsel %vm1841, %v4215, 0.0
        %v4344 = vsel %vm1840, %v4216, 0.0
        %v4345 = vsel %vm1841, %v4217, 0.0
        %v4346 = vsel %vm1840, %v4218, 0.0
        %v4347 = vsel %vm1841, %v4219, 0.0
        %v4348 = vsel %vm1840, %v4220, 0.0
        %v4349 = vsel %vm1841, %v4221, 0.0
        %v4350 = vsel %vm1840, %v4222, 0.0
        %v4351 = vsel %vm1841, %v4223, 0.0
        %v4352 = vsel %vm1840, %v4224, 0.0
        %v4353 = vsel %vm1841, %v4225, 0.0
        %v4354 = vsel %vm1840, %v4226, 0.0
        %v4355 = vsel %vm1841, %v4227, 0.0
        %v4356 = vsel %vm1840, %v4228, 0.0
        %v4357 = vsel %vm1841, %v4229, 0.0
        %v4358 = vsel %vm1840, %v4230, 0.0
        %v4359 = vsel %vm1841, %v4231, 0.0
        %v4360 = vsel %vm1840, %v4232, 0.0
        %v4361 = vsel %vm1841, %v4233, 0.0
        %v4362 = vsel %vm1840, %v4234, 0.0
        %v4363 = vsel %vm1841, %v4235, 0.0
        %v4364 = vsel %vm1840, %v4236, 0.0
        %v4365 = vsel %vm1841, %v4237, 0.0
        %v4366 = vsel %vm1840, %v4238, 0.0
        %v4367 = vsel %vm1841, %v4239, 0.0
        %v4368 = vsel %vm1840, %v4240, 0.0
        %v4369 = vsel %vm1841, %v4241, 0.0
        %v4370 = vsel %vm1840, %v4242, 0.0
        %v4371 = vsel %vm1841, %v4243, 0.0
        %v4372 = vsel %vm1840, %v4244, 0.0
        %v4373 = vsel %vm1841, %v4245, 0.0
        %v4374 = vsel %vm1840, %v4246, 0.0
        %v4375 = vsel %vm1841, %v4247, 0.0
        %v4376 = vsel %vm1840, %v4248, 0.0
        %v4377 = vsel %vm1841, %v4249, 0.0
        %v4378 = vsel %vm1840, %v4250, 0.0
        %v4379 = vsel %vm1841, %v4251, 0.0
        %v4380 = vsel %vm1840, %v4252, 0.0
        %v4381 = vsel %vm1841, %v4253, 0.0
        %v4382 = vsel %vm1840, %v4254, 0.0
        %v4383 = vsel %vm1841, %v4255, 0.0
        %v4384 = vsel %vm1840, %v4256, 0.0
        %v4385 = vsel %vm1841, %v4257, 0.0
        %v4386 = vsel %vm1840, %v4258, 0.0
        %v4387 = vsel %vm1841, %v4259, 0.0
        %v4388 = vsel %vm1840, %v4260, 0.0
        %v4389 = vsel %vm1841, %v4261, 0.0
        %v4390 = vsel %vm1840, %v4262, 0.0
        %v4391 = vsel %vm1841, %v4263, 0.0
        %v4392 = vsel %vm1840, %v4264, 0.0
        %v4393 = vsel %vm1841, %v4265, 0.0
        %v4394 = vsel %vm1840, %v4266, 0.0
        %v4395 = vsel %vm1841, %v4267, 0.0
        %v4396 = vsel %vm1840, %v4268, 0.0
        %v4397 = vsel %vm1841, %v4269, 0.0
        %v4398 = vsel %vm1840, %v4270, 0.0
        %v4399 = vsel %vm1841, %v4271, 0.0
        %v4400 = vsel %vm1840, %v4272, 0.0
        %v4401 = vsel %vm1841, %v4273, 0.0
        %v4402 = vpack.c.bf16 %v4276, %v4274
        %v4403 = vpack.c.bf16 %v4277, %v4275
        %v4404 = vpack.c.bf16 %v4280, %v4278
        %v4405 = vpack.c.bf16 %v4281, %v4279
        %v4406 = vpack.c.bf16 %v4284, %v4282
        %v4407 = vpack.c.bf16 %v4285, %v4283
        %v4408 = vpack.c.bf16 %v4288, %v4286
        %v4409 = vpack.c.bf16 %v4289, %v4287
        %v4410 = vpack.c.bf16 %v4292, %v4290
        %v4411 = vpack.c.bf16 %v4293, %v4291
        %v4412 = vpack.c.bf16 %v4296, %v4294
        %v4413 = vpack.c.bf16 %v4297, %v4295
        %v4414 = vpack.c.bf16 %v4300, %v4298
        %v4415 = vpack.c.bf16 %v4301, %v4299
        %v4416 = vpack.c.bf16 %v4304, %v4302
        %v4417 = vpack.c.bf16 %v4305, %v4303
        %v4418 = vpack.c.bf16 %v4308, %v4306
        %v4419 = vpack.c.bf16 %v4309, %v4307
        %v4420 = vpack.c.bf16 %v4312, %v4310
        %v4421 = vpack.c.bf16 %v4313, %v4311
        %v4422 = vpack.c.bf16 %v4316, %v4314
        %v4423 = vpack.c.bf16 %v4317, %v4315
        %v4424 = vpack.c.bf16 %v4320, %v4318
        %v4425 = vpack.c.bf16 %v4321, %v4319
        %v4426 = vpack.c.bf16 %v4324, %v4322
        %v4427 = vpack.c.bf16 %v4325, %v4323
        %v4428 = vpack.c.bf16 %v4328, %v4326
        %v4429 = vpack.c.bf16 %v4329, %v4327
        %v4430 = vpack.c.bf16 %v4332, %v4330
        %v4431 = vpack.c.bf16 %v4333, %v4331
        %v4432 = vpack.c.bf16 %v4336, %v4334
        %v4433 = vpack.c.bf16 %v4337, %v4335
        %v4434 = vpack.c.bf16 %v4340, %v4338
        %v4435 = vpack.c.bf16 %v4341, %v4339
        %v4436 = vpack.c.bf16 %v4344, %v4342
        %v4437 = vpack.c.bf16 %v4345, %v4343
        %v4438 = vpack.c.bf16 %v4348, %v4346
        %v4439 = vpack.c.bf16 %v4349, %v4347
        %v4440 = vpack.c.bf16 %v4352, %v4350
        %v4441 = vpack.c.bf16 %v4353, %v4351
        %v4442 = vpack.c.bf16 %v4356, %v4354
        %v4443 = vpack.c.bf16 %v4357, %v4355
        %v4444 = vpack.c.bf16 %v4360, %v4358
        %v4445 = vpack.c.bf16 %v4361, %v4359
        %v4446 = vpack.c.bf16 %v4364, %v4362
        %v4447 = vpack.c.bf16 %v4365, %v4363
        %v4448 = vpack.c.bf16 %v4368, %v4366
        %v4449 = vpack.c.bf16 %v4369, %v4367
        %v4450 = vpack.c.bf16 %v4372, %v4370
        %v4451 = vpack.c.bf16 %v4373, %v4371
        %v4452 = vpack.c.bf16 %v4376, %v4374
        %v4453 = vpack.c.bf16 %v4377, %v4375
        %v4454 = vpack.c.bf16 %v4380, %v4378
        %v4455 = vpack.c.bf16 %v4381, %v4379
        %v4456 = vpack.c.bf16 %v4384, %v4382
        %v4457 = vpack.c.bf16 %v4385, %v4383
        %v4458 = vpack.c.bf16 %v4388, %v4386
        %v4459 = vpack.c.bf16 %v4389, %v4387
        %v4460 = vpack.c.bf16 %v4392, %v4390
        %v4461 = vpack.c.bf16 %v4393, %v4391
        %v4462 = vpack.c.bf16 %v4396, %v4394
        %v4463 = vpack.c.bf16 %v4397, %v4395
        %v4464 = vpack.c.bf16 %v4400, %v4398
        %v4465 = vpack.c.bf16 %v4401, %v4399
        %p4466 = scmp.eq.s32.totalorder %s17, 0
        // Predicated region
        $region68: #{forward.1} parent=62 // pred_check
          %p4467 = pneg %p4466
        $region69: #{forward.1} parent=62 // pred_check_branch
          %4469 = sbr.rel (%p4467) target = $region71
        $region70: #{forward.1} parent=62 // pred_region
          %4470 = vst [vmem:[%s6] sm:$0xff] 0.0
          %4471 = vst [vmem:[%s6 + $0x8] sm:$0xff] 0.0
          %4472 = vst [vmem:[%s6 + $0x10] sm:$0xff] 0.0
          %4473 = vst [vmem:[%s6 + $0x18] sm:$0xff] 0.0
          %4474 = vst [vmem:[%s6 + $0x20] sm:$0xff] 0.0
          %4475 = vst [vmem:[%s6 + $0x28] sm:$0xff] 0.0
          %4476 = vst [vmem:[%s6 + $0x30] sm:$0xff] 0.0
          %4477 = vst [vmem:[%s6 + $0x38] sm:$0xff] 0.0
          %4478 = vst [vmem:[%s6 + $0x40] sm:$0xff] 0.0
          %4479 = vst [vmem:[%s6 + $0x48] sm:$0xff] 0.0
          %4480 = vst [vmem:[%s6 + $0x50] sm:$0xff] 0.0
          %4481 = vst [vmem:[%s6 + $0x58] sm:$0xff] 0.0
          %4482 = vst [vmem:[%s6 + $0x60] sm:$0xff] 0.0
          %4483 = vst [vmem:[%s6 + $0x68] sm:$0xff] 0.0
          %4484 = vst [vmem:[%s6 + $0x70] sm:$0xff] 0.0
          %4485 = vst [vmem:[%s6 + $0x78] sm:$0xff] 0.0
          %4486 = vst [vmem:[%s6 + $0x80] sm:$0xff] 0.0
          %4487 = vst [vmem:[%s6 + $0x88] sm:$0xff] 0.0
          %4488 = vst [vmem:[%s6 + $0x90] sm:$0xff] 0.0
          %4489 = vst [vmem:[%s6 + $0x98] sm:$0xff] 0.0
          %4490 = vst [vmem:[%s6 + $0xa0] sm:$0xff] 0.0
          %4491 = vst [vmem:[%s6 + $0xa8] sm:$0xff] 0.0
          %4492 = vst [vmem:[%s6 + $0xb0] sm:$0xff] 0.0
          %4493 = vst [vmem:[%s6 + $0xb8] sm:$0xff] 0.0
          %4494 = vst [vmem:[%s6 + $0xc0] sm:$0xff] 0.0
          %4495 = vst [vmem:[%s6 + $0xc8] sm:$0xff] 0.0
          %4496 = vst [vmem:[%s6 + $0xd0] sm:$0xff] 0.0
          %4497 = vst [vmem:[%s6 + $0xd8] sm:$0xff] 0.0
          %4498 = vst [vmem:[%s6 + $0xe0] sm:$0xff] 0.0
          %4499 = vst [vmem:[%s6 + $0xe8] sm:$0xff] 0.0
          %4500 = vst [vmem:[%s6 + $0xf0] sm:$0xff] 0.0
          %4501 = vst [vmem:[%s6 + $0xf8] sm:$0xff] 0.0
          %4502 = vst [vmem:[%s6 + $0x100] sm:$0xff] 0.0
          %4503 = vst [vmem:[%s6 + $0x108] sm:$0xff] 0.0
          %4504 = vst [vmem:[%s6 + $0x110] sm:$0xff] 0.0
          %4505 = vst [vmem:[%s6 + $0x118] sm:$0xff] 0.0
          %4506 = vst [vmem:[%s6 + $0x120] sm:$0xff] 0.0
          %4507 = vst [vmem:[%s6 + $0x128] sm:$0xff] 0.0
          %4508 = vst [vmem:[%s6 + $0x130] sm:$0xff] 0.0
          %4509 = vst [vmem:[%s6 + $0x138] sm:$0xff] 0.0
          %4510 = vst [vmem:[%s6 + $0x140] sm:$0xff] 0.0
          %4511 = vst [vmem:[%s6 + $0x148] sm:$0xff] 0.0
          %4512 = vst [vmem:[%s6 + $0x150] sm:$0xff] 0.0
          %4513 = vst [vmem:[%s6 + $0x158] sm:$0xff] 0.0
          %4514 = vst [vmem:[%s6 + $0x160] sm:$0xff] 0.0
          %4515 = vst [vmem:[%s6 + $0x168] sm:$0xff] 0.0
          %4516 = vst [vmem:[%s6 + $0x170] sm:$0xff] 0.0
          %4517 = vst [vmem:[%s6 + $0x178] sm:$0xff] 0.0
          %4518 = vst [vmem:[%s6 + $0x180] sm:$0xff] 0.0
          %4519 = vst [vmem:[%s6 + $0x188] sm:$0xff] 0.0
          %4520 = vst [vmem:[%s6 + $0x190] sm:$0xff] 0.0
          %4521 = vst [vmem:[%s6 + $0x198] sm:$0xff] 0.0
          %4522 = vst [vmem:[%s6 + $0x1a0] sm:$0xff] 0.0
          %4523 = vst [vmem:[%s6 + $0x1a8] sm:$0xff] 0.0
          %4524 = vst [vmem:[%s6 + $0x1b0] sm:$0xff] 0.0
          %4525 = vst [vmem:[%s6 + $0x1b8] sm:$0xff] 0.0
          %4526 = vst [vmem:[%s6 + $0x1c0] sm:$0xff] 0.0
          %4527 = vst [vmem:[%s6 + $0x1c8] sm:$0xff] 0.0
          %4528 = vst [vmem:[%s6 + $0x1d0] sm:$0xff] 0.0
          %4529 = vst [vmem:[%s6 + $0x1d8] sm:$0xff] 0.0
          %4530 = vst [vmem:[%s6 + $0x1e0] sm:$0xff] 0.0
          %4531 = vst [vmem:[%s6 + $0x1e8] sm:$0xff] 0.0
          %4532 = vst [vmem:[%s6 + $0x1f0] sm:$0xff] 0.0
          %4533 = vst [vmem:[%s6 + $0x1f8] sm:$0xff] 0.0
        $region71: #{forward.1} parent=62 // pred_fallthru
          _
        %v4534 = vld [vmem:[%s6] sm:$0xff]
        %v4535 = vld [vmem:[%s6 + $0x8] sm:$0xff]
        %v4536 = vld [vmem:[%s6 + $0x10] sm:$0xff]
        %v4537 = vld [vmem:[%s6 + $0x18] sm:$0xff]
        %v4538 = vld [vmem:[%s6 + $0x20] sm:$0xff]
        %v4539 = vld [vmem:[%s6 + $0x28] sm:$0xff]
        %v4540 = vld [vmem:[%s6 + $0x30] sm:$0xff]
        %v4541 = vld [vmem:[%s6 + $0x38] sm:$0xff]
        %v4542 = vld [vmem:[%s6 + $0x40] sm:$0xff]
        %v4543 = vld [vmem:[%s6 + $0x48] sm:$0xff]
        %v4544 = vld [vmem:[%s6 + $0x50] sm:$0xff]
        %v4545 = vld [vmem:[%s6 + $0x58] sm:$0xff]
        %v4546 = vld [vmem:[%s6 + $0x60] sm:$0xff]
        %v4547 = vld [vmem:[%s6 + $0x68] sm:$0xff]
        %v4548 = vld [vmem:[%s6 + $0x70] sm:$0xff]
        %v4549 = vld [vmem:[%s6 + $0x78] sm:$0xff]
        %v4550 = vld [vmem:[%s6 + $0x80] sm:$0xff]
        %v4551 = vld [vmem:[%s6 + $0x88] sm:$0xff]
        %v4552 = vld [vmem:[%s6 + $0x90] sm:$0xff]
        %v4553 = vld [vmem:[%s6 + $0x98] sm:$0xff]
        %v4554 = vld [vmem:[%s6 + $0xa0] sm:$0xff]
        %v4555 = vld [vmem:[%s6 + $0xa8] sm:$0xff]
        %v4556 = vld [vmem:[%s6 + $0xb0] sm:$0xff]
        %v4557 = vld [vmem:[%s6 + $0xb8] sm:$0xff]
        %v4558 = vld [vmem:[%s6 + $0xc0] sm:$0xff]
        %v4559 = vld [vmem:[%s6 + $0xc8] sm:$0xff]
        %v4560 = vld [vmem:[%s6 + $0xd0] sm:$0xff]
        %v4561 = vld [vmem:[%s6 + $0xd8] sm:$0xff]
        %v4562 = vld [vmem:[%s6 + $0xe0] sm:$0xff]
        %v4563 = vld [vmem:[%s6 + $0xe8] sm:$0xff]
        %v4564 = vld [vmem:[%s6 + $0xf0] sm:$0xff]
        %v4565 = vld [vmem:[%s6 + $0xf8] sm:$0xff]
        %v4566 = vld [vmem:[%s6 + $0x100] sm:$0xff]
        %v4567 = vld [vmem:[%s6 + $0x108] sm:$0xff]
        %v4568 = vld [vmem:[%s6 + $0x110] sm:$0xff]
        %v4569 = vld [vmem:[%s6 + $0x118] sm:$0xff]
        %v4570 = vld [vmem:[%s6 + $0x120] sm:$0xff]
        %v4571 = vld [vmem:[%s6 + $0x128] sm:$0xff]
        %v4572 = vld [vmem:[%s6 + $0x130] sm:$0xff]
        %v4573 = vld [vmem:[%s6 + $0x138] sm:$0xff]
        %v4574 = vld [vmem:[%s6 + $0x140] sm:$0xff]
        %v4575 = vld [vmem:[%s6 + $0x148] sm:$0xff]
        %v4576 = vld [vmem:[%s6 + $0x150] sm:$0xff]
        %v4577 = vld [vmem:[%s6 + $0x158] sm:$0xff]
        %v4578 = vld [vmem:[%s6 + $0x160] sm:$0xff]
        %v4579 = vld [vmem:[%s6 + $0x168] sm:$0xff]
        %v4580 = vld [vmem:[%s6 + $0x170] sm:$0xff]
        %v4581 = vld [vmem:[%s6 + $0x178] sm:$0xff]
        %v4582 = vld [vmem:[%s6 + $0x180] sm:$0xff]
        %v4583 = vld [vmem:[%s6 + $0x188] sm:$0xff]
        %v4584 = vld [vmem:[%s6 + $0x190] sm:$0xff]
        %v4585 = vld [vmem:[%s6 + $0x198] sm:$0xff]
        %v4586 = vld [vmem:[%s6 + $0x1a0] sm:$0xff]
        %v4587 = vld [vmem:[%s6 + $0x1a8] sm:$0xff]
        %v4588 = vld [vmem:[%s6 + $0x1b0] sm:$0xff]
        %v4589 = vld [vmem:[%s6 + $0x1b8] sm:$0xff]
        %v4590 = vld [vmem:[%s6 + $0x1c0] sm:$0xff]
        %v4591 = vld [vmem:[%s6 + $0x1c8] sm:$0xff]
        %v4592 = vld [vmem:[%s6 + $0x1d0] sm:$0xff]
        %v4593 = vld [vmem:[%s6 + $0x1d8] sm:$0xff]
        %v4594 = vld [vmem:[%s6 + $0x1e0] sm:$0xff]
        %v4595 = vld [vmem:[%s6 + $0x1e8] sm:$0xff]
        %v4596 = vld [vmem:[%s6 + $0x1f0] sm:$0xff]
        %v4597 = vld [vmem:[%s6 + $0x1f8] sm:$0xff]
        %v4598 = vld [vmem:[%s396] sm:$0xff]
        %v4599 = vld [vmem:[%s396 + $0x8] sm:$0xff]
        %v4600 = vld [vmem:[%s396 + $0x10] sm:$0xff]
        %v4601 = vld [vmem:[%s396 + $0x18] sm:$0xff]
        %v4602 = vld [vmem:[%s396 + $0x20] sm:$0xff]
        %v4603 = vld [vmem:[%s396 + $0x28] sm:$0xff]
        %v4604 = vld [vmem:[%s396 + $0x30] sm:$0xff]
        %v4605 = vld [vmem:[%s396 + $0x38] sm:$0xff]
        %v4606 = vld [vmem:[%s396 + $0x40] sm:$0xff]
        %v4607 = vld [vmem:[%s396 + $0x48] sm:$0xff]
        %v4608 = vld [vmem:[%s396 + $0x50] sm:$0xff]
        %v4609 = vld [vmem:[%s396 + $0x58] sm:$0xff]
        %v4610 = vld [vmem:[%s396 + $0x60] sm:$0xff]
        %v4611 = vld [vmem:[%s396 + $0x68] sm:$0xff]
        %v4612 = vld [vmem:[%s396 + $0x70] sm:$0xff]
        %v4613 = vld [vmem:[%s396 + $0x78] sm:$0xff]
        %v4614 = vld [vmem:[%s396 + $0x80] sm:$0xff]
        %v4615 = vld [vmem:[%s396 + $0x88] sm:$0xff]
        %v4616 = vld [vmem:[%s396 + $0x90] sm:$0xff]
        %v4617 = vld [vmem:[%s396 + $0x98] sm:$0xff]
        %v4618 = vld [vmem:[%s396 + $0xa0] sm:$0xff]
        %v4619 = vld [vmem:[%s396 + $0xa8] sm:$0xff]
        %v4620 = vld [vmem:[%s396 + $0xb0] sm:$0xff]
        %v4621 = vld [vmem:[%s396 + $0xb8] sm:$0xff]
        %v4622 = vld [vmem:[%s396 + $0xc0] sm:$0xff]
        %v4623 = vld [vmem:[%s396 + $0xc8] sm:$0xff]
        %v4624 = vld [vmem:[%s396 + $0xd0] sm:$0xff]
        %v4625 = vld [vmem:[%s396 + $0xd8] sm:$0xff]
        %v4626 = vld [vmem:[%s396 + $0xe0] sm:$0xff]
        %v4627 = vld [vmem:[%s396 + $0xe8] sm:$0xff]
        %v4628 = vld [vmem:[%s396 + $0xf0] sm:$0xff]
        %v4629 = vld [vmem:[%s396 + $0xf8] sm:$0xff]
        %v4630 = vld [vmem:[%s396 + $0x100] sm:$0xff]
        %v4631 = vld [vmem:[%s396 + $0x108] sm:$0xff]
        %v4632 = vld [vmem:[%s396 + $0x110] sm:$0xff]
        %v4633 = vld [vmem:[%s396 + $0x118] sm:$0xff]
        %v4634 = vld [vmem:[%s396 + $0x120] sm:$0xff]
        %v4635 = vld [vmem:[%s396 + $0x128] sm:$0xff]
        %v4636 = vld [vmem:[%s396 + $0x130] sm:$0xff]
        %v4637 = vld [vmem:[%s396 + $0x138] sm:$0xff]
        %v4638 = vld [vmem:[%s396 + $0x140] sm:$0xff]
        %v4639 = vld [vmem:[%s396 + $0x148] sm:$0xff]
        %v4640 = vld [vmem:[%s396 + $0x150] sm:$0xff]
        %v4641 = vld [vmem:[%s396 + $0x158] sm:$0xff]
        %v4642 = vld [vmem:[%s396 + $0x160] sm:$0xff]
        %v4643 = vld [vmem:[%s396 + $0x168] sm:$0xff]
        %v4644 = vld [vmem:[%s396 + $0x170] sm:$0xff]
        %v4645 = vld [vmem:[%s396 + $0x178] sm:$0xff]
        %v4646 = vld [vmem:[%s396 + $0x180] sm:$0xff]
        %v4647 = vld [vmem:[%s396 + $0x188] sm:$0xff]
        %v4648 = vld [vmem:[%s396 + $0x190] sm:$0xff]
        %v4649 = vld [vmem:[%s396 + $0x198] sm:$0xff]
        %v4650 = vld [vmem:[%s396 + $0x1a0] sm:$0xff]
        %v4651 = vld [vmem:[%s396 + $0x1a8] sm:$0xff]
        %v4652 = vld [vmem:[%s396 + $0x1b0] sm:$0xff]
        %v4653 = vld [vmem:[%s396 + $0x1b8] sm:$0xff]
        %v4654 = vld [vmem:[%s396 + $0x1c0] sm:$0xff]
        %v4655 = vld [vmem:[%s396 + $0x1c8] sm:$0xff]
        %v4656 = vld [vmem:[%s396 + $0x1d0] sm:$0xff]
        %v4657 = vld [vmem:[%s396 + $0x1d8] sm:$0xff]
        %v4658 = vld [vmem:[%s396 + $0x1e0] sm:$0xff]
        %v4659 = vld [vmem:[%s396 + $0x1e8] sm:$0xff]
        %v4660 = vld [vmem:[%s396 + $0x1f0] sm:$0xff]
        %v4661 = vld [vmem:[%s396 + $0x1f8] sm:$0xff]
        %v4726 = vunpack.c.l.b16 %v4598
        %v4727 = vunpack.c.h.b16 %v4598
        %v4728 = vunpack.c.l.b16 %v4599
        %v4729 = vunpack.c.h.b16 %v4599
        %v4730 = vunpack.c.l.b16 %v4600
        %v4731 = vunpack.c.h.b16 %v4600
        %v4732 = vunpack.c.l.b16 %v4601
        %v4733 = vunpack.c.h.b16 %v4601
        %v4734 = vunpack.c.l.b16 %v4602
        %v4735 = vunpack.c.h.b16 %v4602
        %v4736 = vunpack.c.l.b16 %v4603
        %v4737 = vunpack.c.h.b16 %v4603
        %v4738 = vunpack.c.l.b16 %v4604
        %v4739 = vunpack.c.h.b16 %v4604
        %v4740 = vunpack.c.l.b16 %v4605
        %v4741 = vunpack.c.h.b16 %v4605
        %v4742 = vunpack.c.l.b16 %v4606
        %v4743 = vunpack.c.h.b16 %v4606
        %v4744 = vunpack.c.l.b16 %v4607
        %v4745 = vunpack.c.h.b16 %v4607
        %v4746 = vunpack.c.l.b16 %v4608
        %v4747 = vunpack.c.h.b16 %v4608
        %v4748 = vunpack.c.l.b16 %v4609
        %v4749 = vunpack.c.h.b16 %v4609
        %v4750 = vunpack.c.l.b16 %v4610
        %v4751 = vunpack.c.h.b16 %v4610
        %v4752 = vunpack.c.l.b16 %v4611
        %v4753 = vunpack.c.h.b16 %v4611
        %v4754 = vunpack.c.l.b16 %v4612
        %v4755 = vunpack.c.h.b16 %v4612
        %v4756 = vunpack.c.l.b16 %v4613
        %v4757 = vunpack.c.h.b16 %v4613
        %v4758 = vunpack.c.l.b16 %v4614
        %v4759 = vunpack.c.h.b16 %v4614
        %v4760 = vunpack.c.l.b16 %v4615
        %v4761 = vunpack.c.h.b16 %v4615
        %v4762 = vunpack.c.l.b16 %v4616
        %v4763 = vunpack.c.h.b16 %v4616
        %v4764 = vunpack.c.l.b16 %v4617
        %v4765 = vunpack.c.h.b16 %v4617
        %v4766 = vunpack.c.l.b16 %v4618
        %v4767 = vunpack.c.h.b16 %v4618
        %v4768 = vunpack.c.l.b16 %v4619
        %v4769 = vunpack.c.h.b16 %v4619
        %v4770 = vunpack.c.l.b16 %v4620
        %v4771 = vunpack.c.h.b16 %v4620
        %v4772 = vunpack.c.l.b16 %v4621
        %v4773 = vunpack.c.h.b16 %v4621
        %v4774 = vunpack.c.l.b16 %v4622
        %v4775 = vunpack.c.h.b16 %v4622
        %v4776 = vunpack.c.l.b16 %v4623
        %v4777 = vunpack.c.h.b16 %v4623
        %v4778 = vunpack.c.l.b16 %v4624
        %v4779 = vunpack.c.h.b16 %v4624
        %v4780 = vunpack.c.l.b16 %v4625
        %v4781 = vunpack.c.h.b16 %v4625
        %v4782 = vunpack.c.l.b16 %v4626
        %v4783 = vunpack.c.h.b16 %v4626
        %v4784 = vunpack.c.l.b16 %v4627
        %v4785 = vunpack.c.h.b16 %v4627
        %v4786 = vunpack.c.l.b16 %v4628
        %v4787 = vunpack.c.h.b16 %v4628
        %v4788 = vunpack.c.l.b16 %v4629
        %v4789 = vunpack.c.h.b16 %v4629
        %v4790 = vunpack.c.l.b16 %v4630
        %v4791 = vunpack.c.h.b16 %v4630
        %v4792 = vunpack.c.l.b16 %v4631
        %v4793 = vunpack.c.h.b16 %v4631
        %v4794 = vunpack.c.l.b16 %v4632
        %v4795 = vunpack.c.h.b16 %v4632
        %v4796 = vunpack.c.l.b16 %v4633
        %v4797 = vunpack.c.h.b16 %v4633
        %v4798 = vunpack.c.l.b16 %v4634
        %v4799 = vunpack.c.h.b16 %v4634
        %v4800 = vunpack.c.l.b16 %v4635
        %v4801 = vunpack.c.h.b16 %v4635
        %v4802 = vunpack.c.l.b16 %v4636
        %v4803 = vunpack.c.h.b16 %v4636
        %v4804 = vunpack.c.l.b16 %v4637
        %v4805 = vunpack.c.h.b16 %v4637
        %v4806 = vunpack.c.l.b16 %v4638
        %v4807 = vunpack.c.h.b16 %v4638
        %v4808 = vunpack.c.l.b16 %v4639
        %v4809 = vunpack.c.h.b16 %v4639
        %v4810 = vunpack.c.l.b16 %v4640
        %v4811 = vunpack.c.h.b16 %v4640
        %v4812 = vunpack.c.l.b16 %v4641
        %v4813 = vunpack.c.h.b16 %v4641
        %v4814 = vunpack.c.l.b16 %v4642
        %v4815 = vunpack.c.h.b16 %v4642
        %v4816 = vunpack.c.l.b16 %v4643
        %v4817 = vunpack.c.h.b16 %v4643
        %v4818 = vunpack.c.l.b16 %v4644
        %v4819 = vunpack.c.h.b16 %v4644
        %v4820 = vunpack.c.l.b16 %v4645
        %v4821 = vunpack.c.h.b16 %v4645
        %v4822 = vunpack.c.l.b16 %v4646
        %v4823 = vunpack.c.h.b16 %v4646
        %v4824 = vunpack.c.l.b16 %v4647
        %v4825 = vunpack.c.h.b16 %v4647
        %v4826 = vunpack.c.l.b16 %v4648
        %v4827 = vunpack.c.h.b16 %v4648
        %v4828 = vunpack.c.l.b16 %v4649
        %v4829 = vunpack.c.h.b16 %v4649
        %v4830 = vunpack.c.l.b16 %v4650
        %v4831 = vunpack.c.h.b16 %v4650
        %v4832 = vunpack.c.l.b16 %v4651
        %v4833 = vunpack.c.h.b16 %v4651
        %v4834 = vunpack.c.l.b16 %v4652
        %v4835 = vunpack.c.h.b16 %v4652
        %v4836 = vunpack.c.l.b16 %v4653
        %v4837 = vunpack.c.h.b16 %v4653
        %v4838 = vunpack.c.l.b16 %v4654
        %v4839 = vunpack.c.h.b16 %v4654
        %v4840 = vunpack.c.l.b16 %v4655
        %v4841 = vunpack.c.h.b16 %v4655
        %v4842 = vunpack.c.l.b16 %v4656
        %v4843 = vunpack.c.h.b16 %v4656
        %v4844 = vunpack.c.l.b16 %v4657
        %v4845 = vunpack.c.h.b16 %v4657
        %v4846 = vunpack.c.l.b16 %v4658
        %v4847 = vunpack.c.h.b16 %v4658
        %v4848 = vunpack.c.l.b16 %v4659
        %v4849 = vunpack.c.h.b16 %v4659
        %v4850 = vunpack.c.l.b16 %v4660
        %v4851 = vunpack.c.h.b16 %v4660
        %v4852 = vunpack.c.l.b16 %v4661
        %v4853 = vunpack.c.h.b16 %v4661
        %v4854 = vpack.c.b16 %v4730, %v4726
        %v4855 = vpack.c.b16 %v4731, %v4727
        %v4856 = vpack.c.b16 %v4732, %v4728
        %v4857 = vpack.c.b16 %v4733, %v4729
        %v4858 = vpack.c.b16 %v4738, %v4734
        %v4859 = vpack.c.b16 %v4739, %v4735
        %v4860 = vpack.c.b16 %v4740, %v4736
        %v4861 = vpack.c.b16 %v4741, %v4737
        %v4862 = vpack.c.b16 %v4746, %v4742
        %v4863 = vpack.c.b16 %v4747, %v4743
        %v4864 = vpack.c.b16 %v4748, %v4744
        %v4865 = vpack.c.b16 %v4749, %v4745
        %v4866 = vpack.c.b16 %v4754, %v4750
        %v4867 = vpack.c.b16 %v4755, %v4751
        %v4868 = vpack.c.b16 %v4756, %v4752
        %v4869 = vpack.c.b16 %v4757, %v4753
        %v4870 = vpack.c.b16 %v4762, %v4758
        %v4871 = vpack.c.b16 %v4763, %v4759
        %v4872 = vpack.c.b16 %v4764, %v4760
        %v4873 = vpack.c.b16 %v4765, %v4761
        %v4874 = vpack.c.b16 %v4770, %v4766
        %v4875 = vpack.c.b16 %v4771, %v4767
        %v4876 = vpack.c.b16 %v4772, %v4768
        %v4877 = vpack.c.b16 %v4773, %v4769
        %v4878 = vpack.c.b16 %v4778, %v4774
        %v4879 = vpack.c.b16 %v4779, %v4775
        %v4880 = vpack.c.b16 %v4780, %v4776
        %v4881 = vpack.c.b16 %v4781, %v4777
        %v4882 = vpack.c.b16 %v4786, %v4782
        %v4883 = vpack.c.b16 %v4787, %v4783
        %v4884 = vpack.c.b16 %v4788, %v4784
        %v4885 = vpack.c.b16 %v4789, %v4785
        %v4886 = vpack.c.b16 %v4794, %v4790
        %v4887 = vpack.c.b16 %v4795, %v4791
        %v4888 = vpack.c.b16 %v4796, %v4792
        %v4889 = vpack.c.b16 %v4797, %v4793
        %v4890 = vpack.c.b16 %v4802, %v4798
        %v4891 = vpack.c.b16 %v4803, %v4799
        %v4892 = vpack.c.b16 %v4804, %v4800
        %v4893 = vpack.c.b16 %v4805, %v4801
        %v4894 = vpack.c.b16 %v4810, %v4806
        %v4895 = vpack.c.b16 %v4811, %v4807
        %v4896 = vpack.c.b16 %v4812, %v4808
        %v4897 = vpack.c.b16 %v4813, %v4809
        %v4898 = vpack.c.b16 %v4818, %v4814
        %v4899 = vpack.c.b16 %v4819, %v4815
        %v4900 = vpack.c.b16 %v4820, %v4816
        %v4901 = vpack.c.b16 %v4821, %v4817
        %v4902 = vpack.c.b16 %v4826, %v4822
        %v4903 = vpack.c.b16 %v4827, %v4823
        %v4904 = vpack.c.b16 %v4828, %v4824
        %v4905 = vpack.c.b16 %v4829, %v4825
        %v4906 = vpack.c.b16 %v4834, %v4830
        %v4907 = vpack.c.b16 %v4835, %v4831
        %v4908 = vpack.c.b16 %v4836, %v4832
        %v4909 = vpack.c.b16 %v4837, %v4833
        %v4910 = vpack.c.b16 %v4842, %v4838
        %v4911 = vpack.c.b16 %v4843, %v4839
        %v4912 = vpack.c.b16 %v4844, %v4840
        %v4913 = vpack.c.b16 %v4845, %v4841
        %v4914 = vpack.c.b16 %v4850, %v4846
        %v4915 = vpack.c.b16 %v4851, %v4847
        %v4916 = vpack.c.b16 %v4852, %v4848
        %v4917 = vpack.c.b16 %v4853, %v4849
        %4982 = vmatprep.subr.bf16.mxu0 %v4403
        %4983 = vmatpush1.bf16.msra.mxu0 %v4402
        %4984 = vmatprep.subr.bf16.mxu0 %v4405
        %4985 = vmatpush1.bf16.msra.mxu0 %v4404
        %4986 = vmatprep.subr.bf16.mxu0 %v4407
        %4987 = vmatpush1.bf16.msra.mxu0 %v4406
        %4988 = vmatprep.subr.bf16.mxu0 %v4409
        %4989 = vmatpush1.bf16.msra.mxu0 %v4408
        %4990 = vmatprep.subr.bf16.mxu0 %v4411
        %4991 = vmatpush1.bf16.msra.mxu0 %v4410
        %4992 = vmatprep.subr.bf16.mxu0 %v4413
        %4993 = vmatpush1.bf16.msra.mxu0 %v4412
        %4994 = vmatprep.subr.bf16.mxu0 %v4415
        %4995 = vmatpush1.bf16.msra.mxu0 %v4414
        %4996 = vmatprep.subr.bf16.mxu0 %v4417
        %4997 = vmatpush1.bf16.msra.mxu0 %v4416
        %4998 = vmatprep.subr.bf16.mxu0 %v4419
        %4999 = vmatpush1.bf16.msra.mxu0 %v4418
        %5000 = vmatprep.subr.bf16.mxu0 %v4421
        %5001 = vmatpush1.bf16.msra.mxu0 %v4420
        %5002 = vmatprep.subr.bf16.mxu0 %v4423
        %5003 = vmatpush1.bf16.msra.mxu0 %v4422
        %5004 = vmatprep.subr.bf16.mxu0 %v4425
        %5005 = vmatpush1.bf16.msra.mxu0 %v4424
        %5006 = vmatprep.subr.bf16.mxu0 %v4427
        %5007 = vmatpush1.bf16.msra.mxu0 %v4426
        %5008 = vmatprep.subr.bf16.mxu0 %v4429
        %5009 = vmatpush1.bf16.msra.mxu0 %v4428
        %5010 = vmatprep.subr.bf16.mxu0 %v4431
        %5011 = vmatpush1.bf16.msra.mxu0 %v4430
        %5012 = vmatprep.subr.bf16.mxu0 %v4433
        %5013 = vmatpush1.bf16.msra.mxu0 %v4432
        %5014 = vmatprep.mubr.bf16.mxu0 %v4855
        %5015 = vmatmul.mubr.bf16.gmra.mrb[0].mxu0 %v4854
        %v5016 = vpop.f32.mrb[0].mxu0
        %v5017 = vadd.f32 0.0, %v5016
        %v5018 = vpop.f32.mrb[0].mxu0
        %v5019 = vadd.f32 0.0, %v5018
        %v5020 = vpop.f32.mrb[0].mxu0
        %v5021 = vadd.f32 0.0, %v5020
        %v5022 = vpop.f32.mrb[0].mxu0
        %v5023 = vadd.f32 0.0, %v5022
        %5024 = vmatprep.mubr.bf16.mxu0 %v4859
        %5025 = vmatmul.mubr.bf16.gmra.mrb[0].mxu0 %v4858
        %v5026 = vpop.f32.mrb[0].mxu0
        %v5027 = vadd.f32 0.0, %v5026
        %v5028 = vpop.f32.mrb[0].mxu0
        %v5029 = vadd.f32 0.0, %v5028
        %v5030 = vpop.f32.mrb[0].mxu0
        %v5031 = vadd.f32 0.0, %v5030
        %v5032 = vpop.f32.mrb[0].mxu0
        %v5033 = vadd.f32 0.0, %v5032
        %5034 = vmatprep.mubr.bf16.mxu0 %v4863
        %5035 = vmatmul.mubr.bf16.gmra.mrb[0].mxu0 %v4862
        %v5036 = vpop.f32.mrb[0].mxu0
        %v5037 = vadd.f32 0.0, %v5036
        %v5038 = vpop.f32.mrb[0].mxu0
        %v5039 = vadd.f32 0.0, %v5038
        %v5040 = vpop.f32.mrb[0].mxu0
        %v5041 = vadd.f32 0.0, %v5040
        %v5042 = vpop.f32.mrb[0].mxu0
        %v5043 = vadd.f32 0.0, %v5042
        %5044 = vmatprep.mubr.bf16.mxu0 %v4867
        %5045 = vmatmul.mubr.bf16.gmra.mrb[0].mxu0 %v4866
        %v5046 = vpop.f32.mrb[0].mxu0
        %v5047 = vadd.f32 0.0, %v5046
        %v5048 = vpop.f32.mrb[0].mxu0
        %v5049 = vadd.f32 0.0, %v5048
        %v5050 = vpop.f32.mrb[0].mxu0
        %v5051 = vadd.f32 0.0, %v5050
        %v5052 = vpop.f32.mrb[0].mxu0
        %v5053 = vadd.f32 0.0, %v5052
        %5054 = vmatprep.mubr.bf16.mxu0 %v4871
        %5055 = vmatmul.mubr.bf16.gmra.mrb[0].mxu0 %v4870
        %v5056 = vpop.f32.mrb[0].mxu0
        %v5057 = vadd.f32 0.0, %v5056
        %v5058 = vpop.f32.mrb[0].mxu0
        %v5059 = vadd.f32 0.0, %v5058
        %v5060 = vpop.f32.mrb[0].mxu0
        %v5061 = vadd.f32 0.0, %v5060
        %v5062 = vpop.f32.mrb[0].mxu0
        %v5063 = vadd.f32 0.0, %v5062
        %5064 = vmatprep.mubr.bf16.mxu0 %v4875
        %5065 = vmatmul.mubr.bf16.gmra.mrb[0].mxu0 %v4874
        %v5066 = vpop.f32.mrb[0].mxu0
        %v5067 = vadd.f32 0.0, %v5066
        %v5068 = vpop.f32.mrb[0].mxu0
        %v5069 = vadd.f32 0.0, %v5068
        %v5070 = vpop.f32.mrb[0].mxu0
        %v5071 = vadd.f32 0.0, %v5070
        %v5072 = vpop.f32.mrb[0].mxu0
        %v5073 = vadd.f32 0.0, %v5072
        %5074 = vmatprep.mubr.bf16.mxu0 %v4879
        %5075 = vmatmul.mubr.bf16.gmra.mrb[0].mxu0 %v4878
        %v5076 = vpop.f32.mrb[0].mxu0
        %v5077 = vadd.f32 0.0, %v5076
        %v5078 = vpop.f32.mrb[0].mxu0
        %v5079 = vadd.f32 0.0, %v5078
        %v5080 = vpop.f32.mrb[0].mxu0
        %v5081 = vadd.f32 0.0, %v5080
        %v5082 = vpop.f32.mrb[0].mxu0
        %v5083 = vadd.f32 0.0, %v5082
        %5084 = vmatprep.mubr.bf16.mxu0 %v4883
        %5085 = vmatmul.mubr.bf16.gmra.mrb[0].mxu0 %v4882
        %v5086 = vpop.f32.mrb[0].mxu0
        %v5087 = vadd.f32 0.0, %v5086
        %v5088 = vpop.f32.mrb[0].mxu0
        %v5089 = vadd.f32 0.0, %v5088
        %v5090 = vpop.f32.mrb[0].mxu0
        %v5091 = vadd.f32 0.0, %v5090
        %v5092 = vpop.f32.mrb[0].mxu0
        %v5093 = vadd.f32 0.0, %v5092
        %5094 = vmatprep.mubr.bf16.mxu0 %v4887
        %5095 = vmatmul.mubr.bf16.gmra.mrb[0].mxu0 %v4886
        %v5096 = vpop.f32.mrb[0].mxu0
        %v5097 = vadd.f32 0.0, %v5096
        %v5098 = vpop.f32.mrb[0].mxu0
        %v5099 = vadd.f32 0.0, %v5098
        %v5100 = vpop.f32.mrb[0].mxu0
        %v5101 = vadd.f32 0.0, %v5100
        %v5102 = vpop.f32.mrb[0].mxu0
        %v5103 = vadd.f32 0.0, %v5102
        %5104 = vmatprep.mubr.bf16.mxu0 %v4891
        %5105 = vmatmul.mubr.bf16.gmra.mrb[0].mxu0 %v4890
        %v5106 = vpop.f32.mrb[0].mxu0
        %v5107 = vadd.f32 0.0, %v5106
        %v5108 = vpop.f32.mrb[0].mxu0
        %v5109 = vadd.f32 0.0, %v5108
        %v5110 = vpop.f32.mrb[0].mxu0
        %v5111 = vadd.f32 0.0, %v5110
        %v5112 = vpop.f32.mrb[0].mxu0
        %v5113 = vadd.f32 0.0, %v5112
        %5114 = vmatprep.mubr.bf16.mxu0 %v4895
        %5115 = vmatmul.mubr.bf16.gmra.mrb[0].mxu0 %v4894
        %v5116 = vpop.f32.mrb[0].mxu0
        %v5117 = vadd.f32 0.0, %v5116
        %v5118 = vpop.f32.mrb[0].mxu0
        %v5119 = vadd.f32 0.0, %v5118
        %v5120 = vpop.f32.mrb[0].mxu0
        %v5121 = vadd.f32 0.0, %v5120
        %v5122 = vpop.f32.mrb[0].mxu0
        %v5123 = vadd.f32 0.0, %v5122
        %5124 = vmatprep.mubr.bf16.mxu0 %v4899
        %5125 = vmatmul.mubr.bf16.gmra.mrb[0].mxu0 %v4898
        %v5126 = vpop.f32.mrb[0].mxu0
        %v5127 = vadd.f32 0.0, %v5126
        %v5128 = vpop.f32.mrb[0].mxu0
        %v5129 = vadd.f32 0.0, %v5128
        %v5130 = vpop.f32.mrb[0].mxu0
        %v5131 = vadd.f32 0.0, %v5130
        %v5132 = vpop.f32.mrb[0].mxu0
        %v5133 = vadd.f32 0.0, %v5132
        %5134 = vmatprep.mubr.bf16.mxu0 %v4903
        %5135 = vmatmul.mubr.bf16.gmra.mrb[0].mxu0 %v4902
        %v5136 = vpop.f32.mrb[0].mxu0
        %v5137 = vadd.f32 0.0, %v5136
        %v5138 = vpop.f32.mrb[0].mxu0
        %v5139 = vadd.f32 0.0, %v5138
        %v5140 = vpop.f32.mrb[0].mxu0
        %v5141 = vadd.f32 0.0, %v5140
        %v5142 = vpop.f32.mrb[0].mxu0
        %v5143 = vadd.f32 0.0, %v5142
        %5144 = vmatprep.mubr.bf16.mxu0 %v4907
        %5145 = vmatmul.mubr.bf16.gmra.mrb[0].mxu0 %v4906
        %v5146 = vpop.f32.mrb[0].mxu0
        %v5147 = vadd.f32 0.0, %v5146
        %v5148 = vpop.f32.mrb[0].mxu0
        %v5149 = vadd.f32 0.0, %v5148
        %v5150 = vpop.f32.mrb[0].mxu0
        %v5151 = vadd.f32 0.0, %v5150
        %v5152 = vpop.f32.mrb[0].mxu0
        %v5153 = vadd.f32 0.0, %v5152
        %5154 = vmatprep.mubr.bf16.mxu0 %v4911
        %5155 = vmatmul.mubr.bf16.gmra.mrb[0].mxu0 %v4910
        %v5156 = vpop.f32.mrb[0].mxu0
        %v5157 = vadd.f32 0.0, %v5156
        %v5158 = vpop.f32.mrb[0].mxu0
        %v5159 = vadd.f32 0.0, %v5158
        %v5160 = vpop.f32.mrb[0].mxu0
        %v5161 = vadd.f32 0.0, %v5160
        %v5162 = vpop.f32.mrb[0].mxu0
        %v5163 = vadd.f32 0.0, %v5162
        %5164 = vmatprep.mubr.bf16.mxu0 %v4915
        %5165 = vmatmul.mubr.bf16.gmra.mrb[0].mxu0 %v4914
        %v5166 = vpop.f32.mrb[0].mxu0
        %v5167 = vadd.f32 0.0, %v5166
        %v5168 = vpop.f32.mrb[0].mxu0
        %v5169 = vadd.f32 0.0, %v5168
        %v5170 = vpop.f32.mrb[0].mxu0
        %v5171 = vadd.f32 0.0, %v5170
        %v5172 = vpop.f32.mrb[0].mxu0
        %v5173 = vadd.f32 0.0, %v5172
        %5174 = vdwg.mxu0
        %5175 = vmatprep.subr.bf16.mxu0 %v4435
        %5176 = vmatpush1.bf16.msra.mxu0 %v4434
        %5177 = vmatprep.subr.bf16.mxu0 %v4437
        %5178 = vmatpush1.bf16.msra.mxu0 %v4436
        %5179 = vmatprep.subr.bf16.mxu0 %v4439
        %5180 = vmatpush1.bf16.msra.mxu0 %v4438
        %5181 = vmatprep.subr.bf16.mxu0 %v4441
        %5182 = vmatpush1.bf16.msra.mxu0 %v4440
        %5183 = vmatprep.subr.bf16.mxu0 %v4443
        %5184 = vmatpush1.bf16.msra.mxu0 %v4442
        %5185 = vmatprep.subr.bf16.mxu0 %v4445
        %5186 = vmatpush1.bf16.msra.mxu0 %v4444
        %5187 = vmatprep.subr.bf16.mxu0 %v4447
        %5188 = vmatpush1.bf16.msra.mxu0 %v4446
        %5189 = vmatprep.subr.bf16.mxu0 %v4449
        %5190 = vmatpush1.bf16.msra.mxu0 %v4448
        %5191 = vmatprep.subr.bf16.mxu0 %v4451
        %5192 = vmatpush1.bf16.msra.mxu0 %v4450
        %5193 = vmatprep.subr.bf16.mxu0 %v4453
        %5194 = vmatpush1.bf16.msra.mxu0 %v4452
        %5195 = vmatprep.subr.bf16.mxu0 %v4455
        %5196 = vmatpush1.bf16.msra.mxu0 %v4454
        %5197 = vmatprep.subr.bf16.mxu0 %v4457
        %5198 = vmatpush1.bf16.msra.mxu0 %v4456
        %5199 = vmatprep.subr.bf16.mxu0 %v4459
        %5200 = vmatpush1.bf16.msra.mxu0 %v4458
        %5201 = vmatprep.subr.bf16.mxu0 %v4461
        %5202 = vmatpush1.bf16.msra.mxu0 %v4460
        %5203 = vmatprep.subr.bf16.mxu0 %v4463
        %5204 = vmatpush1.bf16.msra.mxu0 %v4462
        %5205 = vmatprep.subr.bf16.mxu0 %v4465
        %5206 = vmatpush1.bf16.msra.mxu0 %v4464
        %5207 = vmatprep.mubr.bf16.mxu0 %v4857
        %5208 = vmatmul.mubr.bf16.gmra.mrb[0].mxu0 %v4856
        %v5209 = vpop.f32.mrb[0].mxu0
        %v5210 = vadd.f32 %v5017, %v5209
        %v5211 = vpop.f32.mrb[0].mxu0
        %v5212 = vadd.f32 %v5019, %v5211
        %v5213 = vpop.f32.mrb[0].mxu0
        %v5214 = vadd.f32 %v5021, %v5213
        %v5215 = vpop.f32.mrb[0].mxu0
        %v5216 = vadd.f32 %v5023, %v5215
        %5217 = vmatprep.mubr.bf16.mxu0 %v4861
        %5218 = vmatmul.mubr.bf16.gmra.mrb[0].mxu0 %v4860
        %v5219 = vpop.f32.mrb[0].mxu0
        %v5220 = vadd.f32 %v5027, %v5219
        %v5221 = vpop.f32.mrb[0].mxu0
        %v5222 = vadd.f32 %v5029, %v5221
        %v5223 = vpop.f32.mrb[0].mxu0
        %v5224 = vadd.f32 %v5031, %v5223
        %v5225 = vpop.f32.mrb[0].mxu0
        %v5226 = vadd.f32 %v5033, %v5225
        %5227 = vmatprep.mubr.bf16.mxu0 %v4865
        %5228 = vmatmul.mubr.bf16.gmra.mrb[0].mxu0 %v4864
        %v5229 = vpop.f32.mrb[0].mxu0
        %v5230 = vadd.f32 %v5037, %v5229
        %v5231 = vpop.f32.mrb[0].mxu0
        %v5232 = vadd.f32 %v5039, %v5231
        %v5233 = vpop.f32.mrb[0].mxu0
        %v5234 = vadd.f32 %v5041, %v5233
        %v5235 = vpop.f32.mrb[0].mxu0
        %v5236 = vadd.f32 %v5043, %v5235
        %5237 = vmatprep.mubr.bf16.mxu0 %v4869
        %5238 = vmatmul.mubr.bf16.gmra.mrb[0].mxu0 %v4868
        %v5239 = vpop.f32.mrb[0].mxu0
        %v5240 = vadd.f32 %v5047, %v5239
        %v5241 = vpop.f32.mrb[0].mxu0
        %v5242 = vadd.f32 %v5049, %v5241
        %v5243 = vpop.f32.mrb[0].mxu0
        %v5244 = vadd.f32 %v5051, %v5243
        %v5245 = vpop.f32.mrb[0].mxu0
        %v5246 = vadd.f32 %v5053, %v5245
        %5247 = vmatprep.mubr.bf16.mxu0 %v4873
        %5248 = vmatmul.mubr.bf16.gmra.mrb[0].mxu0 %v4872
        %v5249 = vpop.f32.mrb[0].mxu0
        %v5250 = vadd.f32 %v5057, %v5249
        %v5251 = vpop.f32.mrb[0].mxu0
        %v5252 = vadd.f32 %v5059, %v5251
        %v5253 = vpop.f32.mrb[0].mxu0
        %v5254 = vadd.f32 %v5061, %v5253
        %v5255 = vpop.f32.mrb[0].mxu0
        %v5256 = vadd.f32 %v5063, %v5255
        %5257 = vmatprep.mubr.bf16.mxu0 %v4877
        %5258 = vmatmul.mubr.bf16.gmra.mrb[0].mxu0 %v4876
        %v5259 = vpop.f32.mrb[0].mxu0
        %v5260 = vadd.f32 %v5067, %v5259
        %v5261 = vpop.f32.mrb[0].mxu0
        %v5262 = vadd.f32 %v5069, %v5261
        %v5263 = vpop.f32.mrb[0].mxu0
        %v5264 = vadd.f32 %v5071, %v5263
        %v5265 = vpop.f32.mrb[0].mxu0
        %v5266 = vadd.f32 %v5073, %v5265
        %5267 = vmatprep.mubr.bf16.mxu0 %v4881
        %5268 = vmatmul.mubr.bf16.gmra.mrb[0].mxu0 %v4880
        %v5269 = vpop.f32.mrb[0].mxu0
        %v5270 = vadd.f32 %v5077, %v5269
        %v5271 = vpop.f32.mrb[0].mxu0
        %v5272 = vadd.f32 %v5079, %v5271
        %v5273 = vpop.f32.mrb[0].mxu0
        %v5274 = vadd.f32 %v5081, %v5273
        %v5275 = vpop.f32.mrb[0].mxu0
        %v5276 = vadd.f32 %v5083, %v5275
        %5277 = vmatprep.mubr.bf16.mxu0 %v4885
        %5278 = vmatmul.mubr.bf16.gmra.mrb[0].mxu0 %v4884
        %v5279 = vpop.f32.mrb[0].mxu0
        %v5280 = vadd.f32 %v5087, %v5279
        %v5281 = vpop.f32.mrb[0].mxu0
        %v5282 = vadd.f32 %v5089, %v5281
        %v5283 = vpop.f32.mrb[0].mxu0
        %v5284 = vadd.f32 %v5091, %v5283
        %v5285 = vpop.f32.mrb[0].mxu0
        %v5286 = vadd.f32 %v5093, %v5285
        %5287 = vmatprep.mubr.bf16.mxu0 %v4889
        %5288 = vmatmul.mubr.bf16.gmra.mrb[0].mxu0 %v4888
        %v5289 = vpop.f32.mrb[0].mxu0
        %v5290 = vadd.f32 %v5097, %v5289
        %v5291 = vpop.f32.mrb[0].mxu0
        %v5292 = vadd.f32 %v5099, %v5291
        %v5293 = vpop.f32.mrb[0].mxu0
        %v5294 = vadd.f32 %v5101, %v5293
        %v5295 = vpop.f32.mrb[0].mxu0
        %v5296 = vadd.f32 %v5103, %v5295
        %5297 = vmatprep.mubr.bf16.mxu0 %v4893
        %5298 = vmatmul.mubr.bf16.gmra.mrb[0].mxu0 %v4892
        %v5299 = vpop.f32.mrb[0].mxu0
        %v5300 = vadd.f32 %v5107, %v5299
        %v5301 = vpop.f32.mrb[0].mxu0
        %v5302 = vadd.f32 %v5109, %v5301
        %v5303 = vpop.f32.mrb[0].mxu0
        %v5304 = vadd.f32 %v5111, %v5303
        %v5305 = vpop.f32.mrb[0].mxu0
        %v5306 = vadd.f32 %v5113, %v5305
        %5307 = vmatprep.mubr.bf16.mxu0 %v4897
        %5308 = vmatmul.mubr.bf16.gmra.mrb[0].mxu0 %v4896
        %v5309 = vpop.f32.mrb[0].mxu0
        %v5310 = vadd.f32 %v5117, %v5309
        %v5311 = vpop.f32.mrb[0].mxu0
        %v5312 = vadd.f32 %v5119, %v5311
        %v5313 = vpop.f32.mrb[0].mxu0
        %v5314 = vadd.f32 %v5121, %v5313
        %v5315 = vpop.f32.mrb[0].mxu0
        %v5316 = vadd.f32 %v5123, %v5315
        %5317 = vmatprep.mubr.bf16.mxu0 %v4901
        %5318 = vmatmul.mubr.bf16.gmra.mrb[0].mxu0 %v4900
        %v5319 = vpop.f32.mrb[0].mxu0
        %v5320 = vadd.f32 %v5127, %v5319
        %v5321 = vpop.f32.mrb[0].mxu0
        %v5322 = vadd.f32 %v5129, %v5321
        %v5323 = vpop.f32.mrb[0].mxu0
        %v5324 = vadd.f32 %v5131, %v5323
        %v5325 = vpop.f32.mrb[0].mxu0
        %v5326 = vadd.f32 %v5133, %v5325
        %5327 = vmatprep.mubr.bf16.mxu0 %v4905
        %5328 = vmatmul.mubr.bf16.gmra.mrb[0].mxu0 %v4904
        %v5329 = vpop.f32.mrb[0].mxu0
        %v5330 = vadd.f32 %v5137, %v5329
        %v5331 = vpop.f32.mrb[0].mxu0
        %v5332 = vadd.f32 %v5139, %v5331
        %v5333 = vpop.f32.mrb[0].mxu0
        %v5334 = vadd.f32 %v5141, %v5333
        %v5335 = vpop.f32.mrb[0].mxu0
        %v5336 = vadd.f32 %v5143, %v5335
        %5337 = vmatprep.mubr.bf16.mxu0 %v4909
        %5338 = vmatmul.mubr.bf16.gmra.mrb[0].mxu0 %v4908
        %v5339 = vpop.f32.mrb[0].mxu0
        %v5340 = vadd.f32 %v5147, %v5339
        %v5341 = vpop.f32.mrb[0].mxu0
        %v5342 = vadd.f32 %v5149, %v5341
        %v5343 = vpop.f32.mrb[0].mxu0
        %v5344 = vadd.f32 %v5151, %v5343
        %v5345 = vpop.f32.mrb[0].mxu0
        %v5346 = vadd.f32 %v5153, %v5345
        %5347 = vmatprep.mubr.bf16.mxu0 %v4913
        %5348 = vmatmul.mubr.bf16.gmra.mrb[0].mxu0 %v4912
        %v5349 = vpop.f32.mrb[0].mxu0
        %v5350 = vadd.f32 %v5157, %v5349
        %v5351 = vpop.f32.mrb[0].mxu0
        %v5352 = vadd.f32 %v5159, %v5351
        %v5353 = vpop.f32.mrb[0].mxu0
        %v5354 = vadd.f32 %v5161, %v5353
        %v5355 = vpop.f32.mrb[0].mxu0
        %v5356 = vadd.f32 %v5163, %v5355
        %5357 = vmatprep.mubr.bf16.mxu0 %v4917
        %5358 = vmatmul.mubr.bf16.gmra.mrb[0].mxu0 %v4916
        %v5359 = vpop.f32.mrb[0].mxu0
        %v5360 = vadd.f32 %v5167, %v5359
        %v5361 = vpop.f32.mrb[0].mxu0
        %v5362 = vadd.f32 %v5169, %v5361
        %v5363 = vpop.f32.mrb[0].mxu0
        %v5364 = vadd.f32 %v5171, %v5363
        %v5365 = vpop.f32.mrb[0].mxu0
        %v5366 = vadd.f32 %v5173, %v5365
        %5367 = vdwg.mxu0
        %v5368 = vadd.f32 %v4534, %v5210
        %v5369 = vadd.f32 %v4535, %v5212
        %v5370 = vadd.f32 %v4536, %v5214
        %v5371 = vadd.f32 %v4537, %v5216
        %v5372 = vadd.f32 %v4538, %v5220
        %v5373 = vadd.f32 %v4539, %v5222
        %v5374 = vadd.f32 %v4540, %v5224
        %v5375 = vadd.f32 %v4541, %v5226
        %v5376 = vadd.f32 %v4542, %v5230
        %v5377 = vadd.f32 %v4543, %v5232
        %v5378 = vadd.f32 %v4544, %v5234
        %v5379 = vadd.f32 %v4545, %v5236
        %v5380 = vadd.f32 %v4546, %v5240
        %v5381 = vadd.f32 %v4547, %v5242
        %v5382 = vadd.f32 %v4548, %v5244
        %v5383 = vadd.f32 %v4549, %v5246
        %v5384 = vadd.f32 %v4550, %v5250
        %v5385 = vadd.f32 %v4551, %v5252
        %v5386 = vadd.f32 %v4552, %v5254
        %v5387 = vadd.f32 %v4553, %v5256
        %v5388 = vadd.f32 %v4554, %v5260
        %v5389 = vadd.f32 %v4555, %v5262
        %v5390 = vadd.f32 %v4556, %v5264
        %v5391 = vadd.f32 %v4557, %v5266
        %v5392 = vadd.f32 %v4558, %v5270
        %v5393 = vadd.f32 %v4559, %v5272
        %v5394 = vadd.f32 %v4560, %v5274
        %v5395 = vadd.f32 %v4561, %v5276
        %v5396 = vadd.f32 %v4562, %v5280
        %v5397 = vadd.f32 %v4563, %v5282
        %v5398 = vadd.f32 %v4564, %v5284
        %v5399 = vadd.f32 %v4565, %v5286
        %v5400 = vadd.f32 %v4566, %v5290
        %v5401 = vadd.f32 %v4567, %v5292
        %v5402 = vadd.f32 %v4568, %v5294
        %v5403 = vadd.f32 %v4569, %v5296
        %v5404 = vadd.f32 %v4570, %v5300
        %v5405 = vadd.f32 %v4571, %v5302
        %v5406 = vadd.f32 %v4572, %v5304
        %v5407 = vadd.f32 %v4573, %v5306
        %v5408 = vadd.f32 %v4574, %v5310
        %v5409 = vadd.f32 %v4575, %v5312
        %v5410 = vadd.f32 %v4576, %v5314
        %v5411 = vadd.f32 %v4577, %v5316
        %v5412 = vadd.f32 %v4578, %v5320
        %v5413 = vadd.f32 %v4579, %v5322
        %v5414 = vadd.f32 %v4580, %v5324
        %v5415 = vadd.f32 %v4581, %v5326
        %v5416 = vadd.f32 %v4582, %v5330
        %v5417 = vadd.f32 %v4583, %v5332
        %v5418 = vadd.f32 %v4584, %v5334
        %v5419 = vadd.f32 %v4585, %v5336
        %v5420 = vadd.f32 %v4586, %v5340
        %v5421 = vadd.f32 %v4587, %v5342
        %v5422 = vadd.f32 %v4588, %v5344
        %v5423 = vadd.f32 %v4589, %v5346
        %v5424 = vadd.f32 %v4590, %v5350
        %v5425 = vadd.f32 %v4591, %v5352
        %v5426 = vadd.f32 %v4592, %v5354
        %v5427 = vadd.f32 %v4593, %v5356
        %v5428 = vadd.f32 %v4594, %v5360
        %v5429 = vadd.f32 %v4595, %v5362
        %v5430 = vadd.f32 %v4596, %v5364
        %v5431 = vadd.f32 %v4597, %v5366
        %5432 = vst [vmem:[%s6] sm:$0xff] %v5368
        %5433 = vst [vmem:[%s6 + $0x8] sm:$0xff] %v5369
        %5434 = vst [vmem:[%s6 + $0x10] sm:$0xff] %v5370
        %5435 = vst [vmem:[%s6 + $0x18] sm:$0xff] %v5371
        %5436 = vst [vmem:[%s6 + $0x20] sm:$0xff] %v5372
        %5437 = vst [vmem:[%s6 + $0x28] sm:$0xff] %v5373
        %5438 = vst [vmem:[%s6 + $0x30] sm:$0xff] %v5374
        %5439 = vst [vmem:[%s6 + $0x38] sm:$0xff] %v5375
        %5440 = vst [vmem:[%s6 + $0x40] sm:$0xff] %v5376
        %5441 = vst [vmem:[%s6 + $0x48] sm:$0xff] %v5377
        %5442 = vst [vmem:[%s6 + $0x50] sm:$0xff] %v5378
        %5443 = vst [vmem:[%s6 + $0x58] sm:$0xff] %v5379
        %5444 = vst [vmem:[%s6 + $0x60] sm:$0xff] %v5380
        %5445 = vst [vmem:[%s6 + $0x68] sm:$0xff] %v5381
        %5446 = vst [vmem:[%s6 + $0x70] sm:$0xff] %v5382
        %5447 = vst [vmem:[%s6 + $0x78] sm:$0xff] %v5383
        %5448 = vst [vmem:[%s6 + $0x80] sm:$0xff] %v5384
        %5449 = vst [vmem:[%s6 + $0x88] sm:$0xff] %v5385
        %5450 = vst [vmem:[%s6 + $0x90] sm:$0xff] %v5386
        %5451 = vst [vmem:[%s6 + $0x98] sm:$0xff] %v5387
        %5452 = vst [vmem:[%s6 + $0xa0] sm:$0xff] %v5388
        %5453 = vst [vmem:[%s6 + $0xa8] sm:$0xff] %v5389
        %5454 = vst [vmem:[%s6 + $0xb0] sm:$0xff] %v5390
        %5455 = vst [vmem:[%s6 + $0xb8] sm:$0xff] %v5391
        %5456 = vst [vmem:[%s6 + $0xc0] sm:$0xff] %v5392
        %5457 = vst [vmem:[%s6 + $0xc8] sm:$0xff] %v5393
        %5458 = vst [vmem:[%s6 + $0xd0] sm:$0xff] %v5394
        %5459 = vst [vmem:[%s6 + $0xd8] sm:$0xff] %v5395
        %5460 = vst [vmem:[%s6 + $0xe0] sm:$0xff] %v5396
        %5461 = vst [vmem:[%s6 + $0xe8] sm:$0xff] %v5397
        %5462 = vst [vmem:[%s6 + $0xf0] sm:$0xff] %v5398
        %5463 = vst [vmem:[%s6 + $0xf8] sm:$0xff] %v5399
        %5464 = vst [vmem:[%s6 + $0x100] sm:$0xff] %v5400
        %5465 = vst [vmem:[%s6 + $0x108] sm:$0xff] %v5401
        %5466 = vst [vmem:[%s6 + $0x110] sm:$0xff] %v5402
        %5467 = vst [vmem:[%s6 + $0x118] sm:$0xff] %v5403
        %5468 = vst [vmem:[%s6 + $0x120] sm:$0xff] %v5404
        %5469 = vst [vmem:[%s6 + $0x128] sm:$0xff] %v5405
        %5470 = vst [vmem:[%s6 + $0x130] sm:$0xff] %v5406
        %5471 = vst [vmem:[%s6 + $0x138] sm:$0xff] %v5407
        %5472 = vst [vmem:[%s6 + $0x140] sm:$0xff] %v5408
        %5473 = vst [vmem:[%s6 + $0x148] sm:$0xff] %v5409
        %5474 = vst [vmem:[%s6 + $0x150] sm:$0xff] %v5410
        %5475 = vst [vmem:[%s6 + $0x158] sm:$0xff] %v5411
        %5476 = vst [vmem:[%s6 + $0x160] sm:$0xff] %v5412
        %5477 = vst [vmem:[%s6 + $0x168] sm:$0xff] %v5413
        %5478 = vst [vmem:[%s6 + $0x170] sm:$0xff] %v5414
        %5479 = vst [vmem:[%s6 + $0x178] sm:$0xff] %v5415
        %5480 = vst [vmem:[%s6 + $0x180] sm:$0xff] %v5416
        %5481 = vst [vmem:[%s6 + $0x188] sm:$0xff] %v5417
        %5482 = vst [vmem:[%s6 + $0x190] sm:$0xff] %v5418
        %5483 = vst [vmem:[%s6 + $0x198] sm:$0xff] %v5419
        %5484 = vst [vmem:[%s6 + $0x1a0] sm:$0xff] %v5420
        %5485 = vst [vmem:[%s6 + $0x1a8] sm:$0xff] %v5421
        %5486 = vst [vmem:[%s6 + $0x1b0] sm:$0xff] %v5422
        %5487 = vst [vmem:[%s6 + $0x1b8] sm:$0xff] %v5423
        %5488 = vst [vmem:[%s6 + $0x1c0] sm:$0xff] %v5424
        %5489 = vst [vmem:[%s6 + $0x1c8] sm:$0xff] %v5425
        %5490 = vst [vmem:[%s6 + $0x1d0] sm:$0xff] %v5426
        %5491 = vst [vmem:[%s6 + $0x1d8] sm:$0xff] %v5427
        %5492 = vst [vmem:[%s6 + $0x1e0] sm:$0xff] %v5428
        %5493 = vst [vmem:[%s6 + $0x1e8] sm:$0xff] %v5429
        %5494 = vst [vmem:[%s6 + $0x1f0] sm:$0xff] %v5430
        %5495 = vst [vmem:[%s6 + $0x1f8] sm:$0xff] %v5431
        %p5496 = scmp.eq.s32.totalorder %s17, 1
        // Predicated region
        $region72: #{forward.1} parent=62 // pred_check
          %p5497 = pneg %p5496
        $region73: #{forward.1} parent=62 // pred_check_branch
          %5499 = sbr.rel (%p5497) target = $region75
        $region74: #{forward.1} parent=62 // pred_region
          %v5500 = vld [vmem:[%s6] sm:$0xff]
          %v5501 = vld [vmem:[%s6 + $0x8] sm:$0xff]
          %v5502 = vld [vmem:[%s6 + $0x10] sm:$0xff]
          %v5503 = vld [vmem:[%s6 + $0x18] sm:$0xff]
          %v5504 = vld [vmem:[%s6 + $0x20] sm:$0xff]
          %v5505 = vld [vmem:[%s6 + $0x28] sm:$0xff]
          %v5506 = vld [vmem:[%s6 + $0x30] sm:$0xff]
          %v5507 = vld [vmem:[%s6 + $0x38] sm:$0xff]
          %v5508 = vld [vmem:[%s6 + $0x40] sm:$0xff]
          %v5509 = vld [vmem:[%s6 + $0x48] sm:$0xff]
          %v5510 = vld [vmem:[%s6 + $0x50] sm:$0xff]
          %v5511 = vld [vmem:[%s6 + $0x58] sm:$0xff]
          %v5512 = vld [vmem:[%s6 + $0x60] sm:$0xff]
          %v5513 = vld [vmem:[%s6 + $0x68] sm:$0xff]
          %v5514 = vld [vmem:[%s6 + $0x70] sm:$0xff]
          %v5515 = vld [vmem:[%s6 + $0x78] sm:$0xff]
          %v5516 = vld [vmem:[%s6 + $0x80] sm:$0xff]
          %v5517 = vld [vmem:[%s6 + $0x88] sm:$0xff]
          %v5518 = vld [vmem:[%s6 + $0x90] sm:$0xff]
          %v5519 = vld [vmem:[%s6 + $0x98] sm:$0xff]
          %v5520 = vld [vmem:[%s6 + $0xa0] sm:$0xff]
          %v5521 = vld [vmem:[%s6 + $0xa8] sm:$0xff]
          %v5522 = vld [vmem:[%s6 + $0xb0] sm:$0xff]
          %v5523 = vld [vmem:[%s6 + $0xb8] sm:$0xff]
          %v5524 = vld [vmem:[%s6 + $0xc0] sm:$0xff]
          %v5525 = vld [vmem:[%s6 + $0xc8] sm:$0xff]
          %v5526 = vld [vmem:[%s6 + $0xd0] sm:$0xff]
          %v5527 = vld [vmem:[%s6 + $0xd8] sm:$0xff]
          %v5528 = vld [vmem:[%s6 + $0xe0] sm:$0xff]
          %v5529 = vld [vmem:[%s6 + $0xe8] sm:$0xff]
          %v5530 = vld [vmem:[%s6 + $0xf0] sm:$0xff]
          %v5531 = vld [vmem:[%s6 + $0xf8] sm:$0xff]
          %v5532 = vld [vmem:[%s6 + $0x100] sm:$0xff]
          %v5533 = vld [vmem:[%s6 + $0x108] sm:$0xff]
          %v5534 = vld [vmem:[%s6 + $0x110] sm:$0xff]
          %v5535 = vld [vmem:[%s6 + $0x118] sm:$0xff]
          %v5536 = vld [vmem:[%s6 + $0x120] sm:$0xff]
          %v5537 = vld [vmem:[%s6 + $0x128] sm:$0xff]
          %v5538 = vld [vmem:[%s6 + $0x130] sm:$0xff]
          %v5539 = vld [vmem:[%s6 + $0x138] sm:$0xff]
          %v5540 = vld [vmem:[%s6 + $0x140] sm:$0xff]
          %v5541 = vld [vmem:[%s6 + $0x148] sm:$0xff]
          %v5542 = vld [vmem:[%s6 + $0x150] sm:$0xff]
          %v5543 = vld [vmem:[%s6 + $0x158] sm:$0xff]
          %v5544 = vld [vmem:[%s6 + $0x160] sm:$0xff]
          %v5545 = vld [vmem:[%s6 + $0x168] sm:$0xff]
          %v5546 = vld [vmem:[%s6 + $0x170] sm:$0xff]
          %v5547 = vld [vmem:[%s6 + $0x178] sm:$0xff]
          %v5548 = vld [vmem:[%s6 + $0x180] sm:$0xff]
          %v5549 = vld [vmem:[%s6 + $0x188] sm:$0xff]
          %v5550 = vld [vmem:[%s6 + $0x190] sm:$0xff]
          %v5551 = vld [vmem:[%s6 + $0x198] sm:$0xff]
          %v5552 = vld [vmem:[%s6 + $0x1a0] sm:$0xff]
          %v5553 = vld [vmem:[%s6 + $0x1a8] sm:$0xff]
          %v5554 = vld [vmem:[%s6 + $0x1b0] sm:$0xff]
          %v5555 = vld [vmem:[%s6 + $0x1b8] sm:$0xff]
          %v5556 = vld [vmem:[%s6 + $0x1c0] sm:$0xff]
          %v5557 = vld [vmem:[%s6 + $0x1c8] sm:$0xff]
          %v5558 = vld [vmem:[%s6 + $0x1d0] sm:$0xff]
          %v5559 = vld [vmem:[%s6 + $0x1d8] sm:$0xff]
          %v5560 = vld [vmem:[%s6 + $0x1e0] sm:$0xff]
          %v5561 = vld [vmem:[%s6 + $0x1e8] sm:$0xff]
          %v5562 = vld [vmem:[%s6 + $0x1f0] sm:$0xff]
          %v5563 = vld [vmem:[%s6 + $0x1f8] sm:$0xff]
          %v5564 = vld [vmem:[%s5] sm:$0xff]
          %v5565 = vld [vmem:[%s5 + $0x8] sm:$0xff]
          %v5566 = vld [vmem:[%s5 + $0x10] sm:$0xff]
          %v5567 = vld [vmem:[%s5 + $0x18] sm:$0xff]
          %v5568 = vld [vmem:[%s5 + $0x20] sm:$0xff]
          %v5569 = vld [vmem:[%s5 + $0x28] sm:$0xff]
          %v5570 = vld [vmem:[%s5 + $0x30] sm:$0xff]
          %v5571 = vld [vmem:[%s5 + $0x38] sm:$0xff]
          %v5572 = vld [vmem:[%s5 + $0x40] sm:$0xff]
          %v5573 = vld [vmem:[%s5 + $0x48] sm:$0xff]
          %v5574 = vld [vmem:[%s5 + $0x50] sm:$0xff]
          %v5575 = vld [vmem:[%s5 + $0x58] sm:$0xff]
          %v5576 = vld [vmem:[%s5 + $0x60] sm:$0xff]
          %v5577 = vld [vmem:[%s5 + $0x68] sm:$0xff]
          %v5578 = vld [vmem:[%s5 + $0x70] sm:$0xff]
          %v5579 = vld [vmem:[%s5 + $0x78] sm:$0xff]
          %v5580 = vld [vmem:[%s5 + $0x80] sm:$0xff]
          %v5581 = vld [vmem:[%s5 + $0x88] sm:$0xff]
          %v5582 = vld [vmem:[%s5 + $0x90] sm:$0xff]
          %v5583 = vld [vmem:[%s5 + $0x98] sm:$0xff]
          %v5584 = vld [vmem:[%s5 + $0xa0] sm:$0xff]
          %v5585 = vld [vmem:[%s5 + $0xa8] sm:$0xff]
          %v5586 = vld [vmem:[%s5 + $0xb0] sm:$0xff]
          %v5587 = vld [vmem:[%s5 + $0xb8] sm:$0xff]
          %v5588 = vld [vmem:[%s5 + $0xc0] sm:$0xff]
          %v5589 = vld [vmem:[%s5 + $0xc8] sm:$0xff]
          %v5590 = vld [vmem:[%s5 + $0xd0] sm:$0xff]
          %v5591 = vld [vmem:[%s5 + $0xd8] sm:$0xff]
          %v5592 = vld [vmem:[%s5 + $0xe0] sm:$0xff]
          %v5593 = vld [vmem:[%s5 + $0xe8] sm:$0xff]
          %v5594 = vld [vmem:[%s5 + $0xf0] sm:$0xff]
          %v5595 = vld [vmem:[%s5 + $0xf8] sm:$0xff]
          %v5596 = vadd.f32 %v5500, %v5501
          %5597 = vadd.xlane.f32.xlu0 %v5596
          %v5598 = vpop.xlane.xlu0 %5597
          %v5599 = vadd.f32 %v5502, %v5503
          %5600 = vadd.xlane.f32.xlu0 %v5599
          %v5601 = vpop.xlane.xlu0 %5600
          %v5602 = vadd.f32 %v5504, %v5505
          %5603 = vadd.xlane.f32.xlu0 %v5602
          %v5604 = vpop.xlane.xlu0 %5603
          %v5605 = vadd.f32 %v5506, %v5507
          %5606 = vadd.xlane.f32.xlu0 %v5605
          %v5607 = vpop.xlane.xlu0 %5606
          %v5608 = vadd.f32 %v5508, %v5509
          %5609 = vadd.xlane.f32.xlu0 %v5608
          %v5610 = vpop.xlane.xlu0 %5609
          %v5611 = vadd.f32 %v5510, %v5511
          %5612 = vadd.xlane.f32.xlu0 %v5611
          %v5613 = vpop.xlane.xlu0 %5612
          %v5614 = vadd.f32 %v5512, %v5513
          %5615 = vadd.xlane.f32.xlu0 %v5614
          %v5616 = vpop.xlane.xlu0 %5615
          %v5617 = vadd.f32 %v5514, %v5515
          %5618 = vadd.xlane.f32.xlu0 %v5617
          %v5619 = vpop.xlane.xlu0 %5618
          %v5620 = vadd.f32 %v5516, %v5517
          %5621 = vadd.xlane.f32.xlu0 %v5620
          %v5622 = vpop.xlane.xlu0 %5621
          %v5623 = vadd.f32 %v5518, %v5519
          %5624 = vadd.xlane.f32.xlu0 %v5623
          %v5625 = vpop.xlane.xlu0 %5624
          %v5626 = vadd.f32 %v5520, %v5521
          %5627 = vadd.xlane.f32.xlu0 %v5626
          %v5628 = vpop.xlane.xlu0 %5627
          %v5629 = vadd.f32 %v5522, %v5523
          %5630 = vadd.xlane.f32.xlu0 %v5629
          %v5631 = vpop.xlane.xlu0 %5630
          %v5632 = vadd.f32 %v5524, %v5525
          %5633 = vadd.xlane.f32.xlu0 %v5632
          %v5634 = vpop.xlane.xlu0 %5633
          %v5635 = vadd.f32 %v5526, %v5527
          %5636 = vadd.xlane.f32.xlu0 %v5635
          %v5637 = vpop.xlane.xlu0 %5636
          %v5638 = vadd.f32 %v5528, %v5529
          %5639 = vadd.xlane.f32.xlu0 %v5638
          %v5640 = vpop.xlane.xlu0 %5639
          %v5641 = vadd.f32 %v5530, %v5531
          %5642 = vadd.xlane.f32.xlu0 %v5641
          %v5643 = vpop.xlane.xlu0 %5642
          %v5644 = vadd.f32 %v5532, %v5533
          %5645 = vadd.xlane.f32.xlu0 %v5644
          %v5646 = vpop.xlane.xlu0 %5645
          %v5647 = vadd.f32 %v5534, %v5535
          %5648 = vadd.xlane.f32.xlu0 %v5647
          %v5649 = vpop.xlane.xlu0 %5648
          %v5650 = vadd.f32 %v5536, %v5537
          %5651 = vadd.xlane.f32.xlu0 %v5650
          %v5652 = vpop.xlane.xlu0 %5651
          %v5653 = vadd.f32 %v5538, %v5539
          %5654 = vadd.xlane.f32.xlu0 %v5653
          %v5655 = vpop.xlane.xlu0 %5654
          %v5656 = vadd.f32 %v5540, %v5541
          %5657 = vadd.xlane.f32.xlu0 %v5656
          %v5658 = vpop.xlane.xlu0 %5657
          %v5659 = vadd.f32 %v5542, %v5543
          %5660 = vadd.xlane.f32.xlu0 %v5659
          %v5661 = vpop.xlane.xlu0 %5660
          %v5662 = vadd.f32 %v5544, %v5545
          %5663 = vadd.xlane.f32.xlu0 %v5662
          %v5664 = vpop.xlane.xlu0 %5663
          %v5665 = vadd.f32 %v5546, %v5547
          %5666 = vadd.xlane.f32.xlu0 %v5665
          %v5667 = vpop.xlane.xlu0 %5666
          %v5668 = vadd.f32 %v5548, %v5549
          %5669 = vadd.xlane.f32.xlu0 %v5668
          %v5670 = vpop.xlane.xlu0 %5669
          %v5671 = vadd.f32 %v5550, %v5551
          %5672 = vadd.xlane.f32.xlu0 %v5671
          %v5673 = vpop.xlane.xlu0 %5672
          %v5674 = vadd.f32 %v5552, %v5553
          %5675 = vadd.xlane.f32.xlu0 %v5674
          %v5676 = vpop.xlane.xlu0 %5675
          %v5677 = vadd.f32 %v5554, %v5555
          %5678 = vadd.xlane.f32.xlu0 %v5677
          %v5679 = vpop.xlane.xlu0 %5678
          %v5680 = vadd.f32 %v5556, %v5557
          %5681 = vadd.xlane.f32.xlu0 %v5680
          %v5682 = vpop.xlane.xlu0 %5681
          %v5683 = vadd.f32 %v5558, %v5559
          %5684 = vadd.xlane.f32.xlu0 %v5683
          %v5685 = vpop.xlane.xlu0 %5684
          %v5686 = vadd.f32 %v5560, %v5561
          %5687 = vadd.xlane.f32.xlu0 %v5686
          %v5688 = vpop.xlane.xlu0 %5687
          %v5689 = vadd.f32 %v5562, %v5563
          %5690 = vadd.xlane.f32.xlu0 %v5689
          %v5691 = vpop.xlane.xlu0 %5690
          %v5692 = vmul.f32 %v5598, 0.0051020407
          %v5693 = vmul.f32 %v5601, 0.0051020407
          %v5694 = vmul.f32 %v5604, 0.0051020407
          %v5695 = vmul.f32 %v5607, 0.0051020407
          %v5696 = vmul.f32 %v5610, 0.0051020407
          %v5697 = vmul.f32 %v5613, 0.0051020407
          %v5698 = vmul.f32 %v5616, 0.0051020407
          %v5699 = vmul.f32 %v5619, 0.0051020407
          %v5700 = vmul.f32 %v5622, 0.0051020407
          %v5701 = vmul.f32 %v5625, 0.0051020407
          %v5702 = vmul.f32 %v5628, 0.0051020407
          %v5703 = vmul.f32 %v5631, 0.0051020407
          %v5704 = vmul.f32 %v5634, 0.0051020407
          %v5705 = vmul.f32 %v5637, 0.0051020407
          %v5706 = vmul.f32 %v5640, 0.0051020407
          %v5707 = vmul.f32 %v5643, 0.0051020407
          %v5708 = vmul.f32 %v5646, 0.0051020407
          %v5709 = vmul.f32 %v5649, 0.0051020407
          %v5710 = vmul.f32 %v5652, 0.0051020407
          %v5711 = vmul.f32 %v5655, 0.0051020407
          %v5712 = vmul.f32 %v5658, 0.0051020407
          %v5713 = vmul.f32 %v5661, 0.0051020407
          %v5714 = vmul.f32 %v5664, 0.0051020407
          %v5715 = vmul.f32 %v5667, 0.0051020407
          %v5716 = vmul.f32 %v5670, 0.0051020407
          %v5717 = vmul.f32 %v5673, 0.0051020407
          %v5718 = vmul.f32 %v5676, 0.0051020407
          %v5719 = vmul.f32 %v5679, 0.0051020407
          %v5720 = vmul.f32 %v5682, 0.0051020407
          %v5721 = vmul.f32 %v5685, 0.0051020407
          %v5722 = vmul.f32 %v5688, 0.0051020407
          %v5723 = vmul.f32 %v5691, 0.0051020407
          %v5724 = vsub.f32 %v5500, %v5692
          %v5725 = vsub.f32 %v5501, %v5692
          %v5726 = vsub.f32 %v5502, %v5693
          %v5727 = vsub.f32 %v5503, %v5693
          %v5728 = vsub.f32 %v5504, %v5694
          %v5729 = vsub.f32 %v5505, %v5694
          %v5730 = vsub.f32 %v5506, %v5695
          %v5731 = vsub.f32 %v5507, %v5695
          %v5732 = vsub.f32 %v5508, %v5696
          %v5733 = vsub.f32 %v5509, %v5696
          %v5734 = vsub.f32 %v5510, %v5697
          %v5735 = vsub.f32 %v5511, %v5697
          %v5736 = vsub.f32 %v5512, %v5698
          %v5737 = vsub.f32 %v5513, %v5698
          %v5738 = vsub.f32 %v5514, %v5699
          %v5739 = vsub.f32 %v5515, %v5699
          %v5740 = vsub.f32 %v5516, %v5700
          %v5741 = vsub.f32 %v5517, %v5700
          %v5742 = vsub.f32 %v5518, %v5701
          %v5743 = vsub.f32 %v5519, %v5701
          %v5744 = vsub.f32 %v5520, %v5702
          %v5745 = vsub.f32 %v5521, %v5702
          %v5746 = vsub.f32 %v5522, %v5703
          %v5747 = vsub.f32 %v5523, %v5703
          %v5748 = vsub.f32 %v5524, %v5704
          %v5749 = vsub.f32 %v5525, %v5704
          %v5750 = vsub.f32 %v5526, %v5705
          %v5751 = vsub.f32 %v5527, %v5705
          %v5752 = vsub.f32 %v5528, %v5706
          %v5753 = vsub.f32 %v5529, %v5706
          %v5754 = vsub.f32 %v5530, %v5707
          %v5755 = vsub.f32 %v5531, %v5707
          %v5756 = vsub.f32 %v5532, %v5708
          %v5757 = vsub.f32 %v5533, %v5708
          %v5758 = vsub.f32 %v5534, %v5709
          %v5759 = vsub.f32 %v5535, %v5709
          %v5760 = vsub.f32 %v5536, %v5710
          %v5761 = vsub.f32 %v5537, %v5710
          %v5762 = vsub.f32 %v5538, %v5711
          %v5763 = vsub.f32 %v5539, %v5711
          %v5764 = vsub.f32 %v5540, %v5712
          %v5765 = vsub.f32 %v5541, %v5712
          %v5766 = vsub.f32 %v5542, %v5713
          %v5767 = vsub.f32 %v5543, %v5713
          %v5768 = vsub.f32 %v5544, %v5714
          %v5769 = vsub.f32 %v5545, %v5714
          %v5770 = vsub.f32 %v5546, %v5715
          %v5771 = vsub.f32 %v5547, %v5715
          %v5772 = vsub.f32 %v5548, %v5716
          %v5773 = vsub.f32 %v5549, %v5716
          %v5774 = vsub.f32 %v5550, %v5717
          %v5775 = vsub.f32 %v5551, %v5717
          %v5776 = vsub.f32 %v5552, %v5718
          %v5777 = vsub.f32 %v5553, %v5718
          %v5778 = vsub.f32 %v5554, %v5719
          %v5779 = vsub.f32 %v5555, %v5719
          %v5780 = vsub.f32 %v5556, %v5720
          %v5781 = vsub.f32 %v5557, %v5720
          %v5782 = vsub.f32 %v5558, %v5721
          %v5783 = vsub.f32 %v5559, %v5721
          %v5784 = vsub.f32 %v5560, %v5722
          %v5785 = vsub.f32 %v5561, %v5722
          %v5786 = vsub.f32 %v5562, %v5723
          %v5787 = vsub.f32 %v5563, %v5723
          %v5788 = vsel %vm1840, %v5724, 0.0
          %v5789 = vsel %vm1841, %v5725, 0.0
          %v5790 = vsel %vm1840, %v5726, 0.0
          %v5791 = vsel %vm1841, %v5727, 0.0
          %v5792 = vsel %vm1840, %v5728, 0.0
          %v5793 = vsel %vm1841, %v5729, 0.0
          %v5794 = vsel %vm1840, %v5730, 0.0
          %v5795 = vsel %vm1841, %v5731, 0.0
          %v5796 = vsel %vm1840, %v5732, 0.0
          %v5797 = vsel %vm1841, %v5733, 0.0
          %v5798 = vsel %vm1840, %v5734, 0.0
          %v5799 = vsel %vm1841, %v5735, 0.0
          %v5800 = vsel %vm1840, %v5736, 0.0
          %v5801 = vsel %vm1841, %v5737, 0.0
          %v5802 = vsel %vm1840, %v5738, 0.0
          %v5803 = vsel %vm1841, %v5739, 0.0
          %v5804 = vsel %vm1840, %v5740, 0.0
          %v5805 = vsel %vm1841, %v5741, 0.0
          %v5806 = vsel %vm1840, %v5742, 0.0
          %v5807 = vsel %vm1841, %v5743, 0.0
          %v5808 = vsel %vm1840, %v5744, 0.0
          %v5809 = vsel %vm1841, %v5745, 0.0
          %v5810 = vsel %vm1840, %v5746, 0.0
          %v5811 = vsel %vm1841, %v5747, 0.0
          %v5812 = vsel %vm1840, %v5748, 0.0
          %v5813 = vsel %vm1841, %v5749, 0.0
          %v5814 = vsel %vm1840, %v5750, 0.0
          %v5815 = vsel %vm1841, %v5751, 0.0
          %v5816 = vsel %vm1840, %v5752, 0.0
          %v5817 = vsel %vm1841, %v5753, 0.0
          %v5818 = vsel %vm1840, %v5754, 0.0
          %v5819 = vsel %vm1841, %v5755, 0.0
          %v5820 = vsel %vm1840, %v5756, 0.0
          %v5821 = vsel %vm1841, %v5757, 0.0
          %v5822 = vsel %vm1840, %v5758, 0.0
          %v5823 = vsel %vm1841, %v5759, 0.0
          %v5824 = vsel %vm1840, %v5760, 0.0
          %v5825 = vsel %vm1841, %v5761, 0.0
          %v5826 = vsel %vm1840, %v5762, 0.0
          %v5827 = vsel %vm1841, %v5763, 0.0
          %v5828 = vsel %vm1840, %v5764, 0.0
          %v5829 = vsel %vm1841, %v5765, 0.0
          %v5830 = vsel %vm1840, %v5766, 0.0
          %v5831 = vsel %vm1841, %v5767, 0.0
          %v5832 = vsel %vm1840, %v5768, 0.0
          %v5833 = vsel %vm1841, %v5769, 0.0
          %v5834 = vsel %vm1840, %v5770, 0.0
          %v5835 = vsel %vm1841, %v5771, 0.0
          %v5836 = vsel %vm1840, %v5772, 0.0
          %v5837 = vsel %vm1841, %v5773, 0.0
          %v5838 = vsel %vm1840, %v5774, 0.0
          %v5839 = vsel %vm1841, %v5775, 0.0
          %v5840 = vsel %vm1840, %v5776, 0.0
          %v5841 = vsel %vm1841, %v5777, 0.0
          %v5842 = vsel %vm1840, %v5778, 0.0
          %v5843 = vsel %vm1841, %v5779, 0.0
          %v5844 = vsel %vm1840, %v5780, 0.0
          %v5845 = vsel %vm1841, %v5781, 0.0
          %v5846 = vsel %vm1840, %v5782, 0.0
          %v5847 = vsel %vm1841, %v5783, 0.0
          %v5848 = vsel %vm1840, %v5784, 0.0
          %v5849 = vsel %vm1841, %v5785, 0.0
          %v5850 = vsel %vm1840, %v5786, 0.0
          %v5851 = vsel %vm1841, %v5787, 0.0
          %v5852 = vmul.f32 %v5788, %v5788
          %v5853 = vmul.f32 %v5789, %v5789
          %v5854 = vmul.f32 %v5790, %v5790
          %v5855 = vmul.f32 %v5791, %v5791
          %v5856 = vmul.f32 %v5792, %v5792
          %v5857 = vmul.f32 %v5793, %v5793
          %v5858 = vmul.f32 %v5794, %v5794
          %v5859 = vmul.f32 %v5795, %v5795
          %v5860 = vmul.f32 %v5796, %v5796
          %v5861 = vmul.f32 %v5797, %v5797
          %v5862 = vmul.f32 %v5798, %v5798
          %v5863 = vmul.f32 %v5799, %v5799
          %v5864 = vmul.f32 %v5800, %v5800
          %v5865 = vmul.f32 %v5801, %v5801
          %v5866 = vmul.f32 %v5802, %v5802
          %v5867 = vmul.f32 %v5803, %v5803
          %v5868 = vmul.f32 %v5804, %v5804
          %v5869 = vmul.f32 %v5805, %v5805
          %v5870 = vmul.f32 %v5806, %v5806
          %v5871 = vmul.f32 %v5807, %v5807
          %v5872 = vmul.f32 %v5808, %v5808
          %v5873 = vmul.f32 %v5809, %v5809
          %v5874 = vmul.f32 %v5810, %v5810
          %v5875 = vmul.f32 %v5811, %v5811
          %v5876 = vmul.f32 %v5812, %v5812
          %v5877 = vmul.f32 %v5813, %v5813
          %v5878 = vmul.f32 %v5814, %v5814
          %v5879 = vmul.f32 %v5815, %v5815
          %v5880 = vmul.f32 %v5816, %v5816
          %v5881 = vmul.f32 %v5817, %v5817
          %v5882 = vmul.f32 %v5818, %v5818
          %v5883 = vmul.f32 %v5819, %v5819
          %v5884 = vmul.f32 %v5820, %v5820
          %v5885 = vmul.f32 %v5821, %v5821
          %v5886 = vmul.f32 %v5822, %v5822
          %v5887 = vmul.f32 %v5823, %v5823
          %v5888 = vmul.f32 %v5824, %v5824
          %v5889 = vmul.f32 %v5825, %v5825
          %v5890 = vmul.f32 %v5826, %v5826
          %v5891 = vmul.f32 %v5827, %v5827
          %v5892 = vmul.f32 %v5828, %v5828
          %v5893 = vmul.f32 %v5829, %v5829
          %v5894 = vmul.f32 %v5830, %v5830
          %v5895 = vmul.f32 %v5831, %v5831
          %v5896 = vmul.f32 %v5832, %v5832
          %v5897 = vmul.f32 %v5833, %v5833
          %v5898 = vmul.f32 %v5834, %v5834
          %v5899 = vmul.f32 %v5835, %v5835
          %v5900 = vmul.f32 %v5836, %v5836
          %v5901 = vmul.f32 %v5837, %v5837
          %v5902 = vmul.f32 %v5838, %v5838
          %v5903 = vmul.f32 %v5839, %v5839
          %v5904 = vmul.f32 %v5840, %v5840
          %v5905 = vmul.f32 %v5841, %v5841
          %v5906 = vmul.f32 %v5842, %v5842
          %v5907 = vmul.f32 %v5843, %v5843
          %v5908 = vmul.f32 %v5844, %v5844
          %v5909 = vmul.f32 %v5845, %v5845
          %v5910 = vmul.f32 %v5846, %v5846
          %v5911 = vmul.f32 %v5847, %v5847
          %v5912 = vmul.f32 %v5848, %v5848
          %v5913 = vmul.f32 %v5849, %v5849
          %v5914 = vmul.f32 %v5850, %v5850
          %v5915 = vmul.f32 %v5851, %v5851
          %v5916 = vadd.f32 %v5852, %v5853
          %5917 = vadd.xlane.f32.xlu0 %v5916
          %v5918 = vpop.xlane.xlu0 %5917
          %v5919 = vadd.f32 %v5854, %v5855
          %5920 = vadd.xlane.f32.xlu0 %v5919
          %v5921 = vpop.xlane.xlu0 %5920
          %v5922 = vadd.f32 %v5856, %v5857
          %5923 = vadd.xlane.f32.xlu0 %v5922
          %v5924 = vpop.xlane.xlu0 %5923
          %v5925 = vadd.f32 %v5858, %v5859
          %5926 = vadd.xlane.f32.xlu0 %v5925
          %v5927 = vpop.xlane.xlu0 %5926
          %v5928 = vadd.f32 %v5860, %v5861
          %5929 = vadd.xlane.f32.xlu0 %v5928
          %v5930 = vpop.xlane.xlu0 %5929
          %v5931 = vadd.f32 %v5862, %v5863
          %5932 = vadd.xlane.f32.xlu0 %v5931
          %v5933 = vpop.xlane.xlu0 %5932
          %v5934 = vadd.f32 %v5864, %v5865
          %5935 = vadd.xlane.f32.xlu0 %v5934
          %v5936 = vpop.xlane.xlu0 %5935
          %v5937 = vadd.f32 %v5866, %v5867
          %5938 = vadd.xlane.f32.xlu0 %v5937
          %v5939 = vpop.xlane.xlu0 %5938
          %v5940 = vadd.f32 %v5868, %v5869
          %5941 = vadd.xlane.f32.xlu0 %v5940
          %v5942 = vpop.xlane.xlu0 %5941
          %v5943 = vadd.f32 %v5870, %v5871
          %5944 = vadd.xlane.f32.xlu0 %v5943
          %v5945 = vpop.xlane.xlu0 %5944
          %v5946 = vadd.f32 %v5872, %v5873
          %5947 = vadd.xlane.f32.xlu0 %v5946
          %v5948 = vpop.xlane.xlu0 %5947
          %v5949 = vadd.f32 %v5874, %v5875
          %5950 = vadd.xlane.f32.xlu0 %v5949
          %v5951 = vpop.xlane.xlu0 %5950
          %v5952 = vadd.f32 %v5876, %v5877
          %5953 = vadd.xlane.f32.xlu0 %v5952
          %v5954 = vpop.xlane.xlu0 %5953
          %v5955 = vadd.f32 %v5878, %v5879
          %5956 = vadd.xlane.f32.xlu0 %v5955
          %v5957 = vpop.xlane.xlu0 %5956
          %v5958 = vadd.f32 %v5880, %v5881
          %5959 = vadd.xlane.f32.xlu0 %v5958
          %v5960 = vpop.xlane.xlu0 %5959
          %v5961 = vadd.f32 %v5882, %v5883
          %5962 = vadd.xlane.f32.xlu0 %v5961
          %v5963 = vpop.xlane.xlu0 %5962
          %v5964 = vadd.f32 %v5884, %v5885
          %5965 = vadd.xlane.f32.xlu0 %v5964
          %v5966 = vpop.xlane.xlu0 %5965
          %v5967 = vadd.f32 %v5886, %v5887
          %5968 = vadd.xlane.f32.xlu0 %v5967
          %v5969 = vpop.xlane.xlu0 %5968
          %v5970 = vadd.f32 %v5888, %v5889
          %5971 = vadd.xlane.f32.xlu0 %v5970
          %v5972 = vpop.xlane.xlu0 %5971
          %v5973 = vadd.f32 %v5890, %v5891
          %5974 = vadd.xlane.f32.xlu0 %v5973
          %v5975 = vpop.xlane.xlu0 %5974
          %v5976 = vadd.f32 %v5892, %v5893
          %5977 = vadd.xlane.f32.xlu0 %v5976
          %v5978 = vpop.xlane.xlu0 %5977
          %v5979 = vadd.f32 %v5894, %v5895
          %5980 = vadd.xlane.f32.xlu0 %v5979
          %v5981 = vpop.xlane.xlu0 %5980
          %v5982 = vadd.f32 %v5896, %v5897
          %5983 = vadd.xlane.f32.xlu0 %v5982
          %v5984 = vpop.xlane.xlu0 %5983
          %v5985 = vadd.f32 %v5898, %v5899
          %5986 = vadd.xlane.f32.xlu0 %v5985
          %v5987 = vpop.xlane.xlu0 %5986
          %v5988 = vadd.f32 %v5900, %v5901
          %5989 = vadd.xlane.f32.xlu0 %v5988
          %v5990 = vpop.xlane.xlu0 %5989
          %v5991 = vadd.f32 %v5902, %v5903
          %5992 = vadd.xlane.f32.xlu0 %v5991
          %v5993 = vpop.xlane.xlu0 %5992
          %v5994 = vadd.f32 %v5904, %v5905
          %5995 = vadd.xlane.f32.xlu0 %v5994
          %v5996 = vpop.xlane.xlu0 %5995
          %v5997 = vadd.f32 %v5906, %v5907
          %5998 = vadd.xlane.f32.xlu0 %v5997
          %v5999 = vpop.xlane.xlu0 %5998
          %v6000 = vadd.f32 %v5908, %v5909
          %6001 = vadd.xlane.f32.xlu0 %v6000
          %v6002 = vpop.xlane.xlu0 %6001
          %v6003 = vadd.f32 %v5910, %v5911
          %6004 = vadd.xlane.f32.xlu0 %v6003
          %v6005 = vpop.xlane.xlu0 %6004
          %v6006 = vadd.f32 %v5912, %v5913
          %6007 = vadd.xlane.f32.xlu0 %v6006
          %v6008 = vpop.xlane.xlu0 %6007
          %v6009 = vadd.f32 %v5914, %v5915
          %6010 = vadd.xlane.f32.xlu0 %v6009
          %v6011 = vpop.xlane.xlu0 %6010
          %v6012 = vmul.f32 %v5918, 0.0051020407
          %v6013 = vmul.f32 %v5921, 0.0051020407
          %v6014 = vmul.f32 %v5924, 0.0051020407
          %v6015 = vmul.f32 %v5927, 0.0051020407
          %v6016 = vmul.f32 %v5930, 0.0051020407
          %v6017 = vmul.f32 %v5933, 0.0051020407
          %v6018 = vmul.f32 %v5936, 0.0051020407
          %v6019 = vmul.f32 %v5939, 0.0051020407
          %v6020 = vmul.f32 %v5942, 0.0051020407
          %v6021 = vmul.f32 %v5945, 0.0051020407
          %v6022 = vmul.f32 %v5948, 0.0051020407
          %v6023 = vmul.f32 %v5951, 0.0051020407
          %v6024 = vmul.f32 %v5954, 0.0051020407
          %v6025 = vmul.f32 %v5957, 0.0051020407
          %v6026 = vmul.f32 %v5960, 0.0051020407
          %v6027 = vmul.f32 %v5963, 0.0051020407
          %v6028 = vmul.f32 %v5966, 0.0051020407
          %v6029 = vmul.f32 %v5969, 0.0051020407
          %v6030 = vmul.f32 %v5972, 0.0051020407
          %v6031 = vmul.f32 %v5975, 0.0051020407
          %v6032 = vmul.f32 %v5978, 0.0051020407
          %v6033 = vmul.f32 %v5981, 0.0051020407
          %v6034 = vmul.f32 %v5984, 0.0051020407
          %v6035 = vmul.f32 %v5987, 0.0051020407
          %v6036 = vmul.f32 %v5990, 0.0051020407
          %v6037 = vmul.f32 %v5993, 0.0051020407
          %v6038 = vmul.f32 %v5996, 0.0051020407
          %v6039 = vmul.f32 %v5999, 0.0051020407
          %v6040 = vmul.f32 %v6002, 0.0051020407
          %v6041 = vmul.f32 %v6005, 0.0051020407
          %v6042 = vmul.f32 %v6008, 0.0051020407
          %v6043 = vmul.f32 %v6011, 0.0051020407
          %v6044 = vadd.f32 %v6012, 1e-05
          %v6045 = vadd.f32 %v6013, 1e-05
          %v6046 = vadd.f32 %v6014, 1e-05
          %v6047 = vadd.f32 %v6015, 1e-05
          %v6048 = vadd.f32 %v6016, 1e-05
          %v6049 = vadd.f32 %v6017, 1e-05
          %v6050 = vadd.f32 %v6018, 1e-05
          %v6051 = vadd.f32 %v6019, 1e-05
          %v6052 = vadd.f32 %v6020, 1e-05
          %v6053 = vadd.f32 %v6021, 1e-05
          %v6054 = vadd.f32 %v6022, 1e-05
          %v6055 = vadd.f32 %v6023, 1e-05
          %v6056 = vadd.f32 %v6024, 1e-05
          %v6057 = vadd.f32 %v6025, 1e-05
          %v6058 = vadd.f32 %v6026, 1e-05
          %v6059 = vadd.f32 %v6027, 1e-05
          %v6060 = vadd.f32 %v6028, 1e-05
          %v6061 = vadd.f32 %v6029, 1e-05
          %v6062 = vadd.f32 %v6030, 1e-05
          %v6063 = vadd.f32 %v6031, 1e-05
          %v6064 = vadd.f32 %v6032, 1e-05
          %v6065 = vadd.f32 %v6033, 1e-05
          %v6066 = vadd.f32 %v6034, 1e-05
          %v6067 = vadd.f32 %v6035, 1e-05
          %v6068 = vadd.f32 %v6036, 1e-05
          %v6069 = vadd.f32 %v6037, 1e-05
          %v6070 = vadd.f32 %v6038, 1e-05
          %v6071 = vadd.f32 %v6039, 1e-05
          %v6072 = vadd.f32 %v6040, 1e-05
          %v6073 = vadd.f32 %v6041, 1e-05
          %v6074 = vadd.f32 %v6042, 1e-05
          %v6075 = vadd.f32 %v6043, 1e-05
          %v6076 = vrsqrt.pop %v6044
          %v6077 = vrsqrt.pop %v6045
          %v6078 = vrsqrt.pop %v6046
          %v6079 = vrsqrt.pop %v6047
          %v6080 = vrsqrt.pop %v6048
          %v6081 = vrsqrt.pop %v6049
          %v6082 = vrsqrt.pop %v6050
          %v6083 = vrsqrt.pop %v6051
          %v6084 = vrsqrt.pop %v6052
          %v6085 = vrsqrt.pop %v6053
          %v6086 = vrsqrt.pop %v6054
          %v6087 = vrsqrt.pop %v6055
          %v6088 = vrsqrt.pop %v6056
          %v6089 = vrsqrt.pop %v6057
          %v6090 = vrsqrt.pop %v6058
          %v6091 = vrsqrt.pop %v6059
          %v6092 = vrsqrt.pop %v6060
          %v6093 = vrsqrt.pop %v6061
          %v6094 = vrsqrt.pop %v6062
          %v6095 = vrsqrt.pop %v6063
          %v6096 = vrsqrt.pop %v6064
          %v6097 = vrsqrt.pop %v6065
          %v6098 = vrsqrt.pop %v6066
          %v6099 = vrsqrt.pop %v6067
          %v6100 = vrsqrt.pop %v6068
          %v6101 = vrsqrt.pop %v6069
          %v6102 = vrsqrt.pop %v6070
          %v6103 = vrsqrt.pop %v6071
          %v6104 = vrsqrt.pop %v6072
          %v6105 = vrsqrt.pop %v6073
          %v6106 = vrsqrt.pop %v6074
          %v6107 = vrsqrt.pop %v6075
          %v6108 = vmul.f32 %v6076, %v5564
          %v6109 = vmul.f32 %v6077, %v5565
          %v6110 = vmul.f32 %v6078, %v5566
          %v6111 = vmul.f32 %v6079, %v5567
          %v6112 = vmul.f32 %v6080, %v5568
          %v6113 = vmul.f32 %v6081, %v5569
          %v6114 = vmul.f32 %v6082, %v5570
          %v6115 = vmul.f32 %v6083, %v5571
          %v6116 = vmul.f32 %v6084, %v5572
          %v6117 = vmul.f32 %v6085, %v5573
          %v6118 = vmul.f32 %v6086, %v5574
          %v6119 = vmul.f32 %v6087, %v5575
          %v6120 = vmul.f32 %v6088, %v5576
          %v6121 = vmul.f32 %v6089, %v5577
          %v6122 = vmul.f32 %v6090, %v5578
          %v6123 = vmul.f32 %v6091, %v5579
          %v6124 = vmul.f32 %v6092, %v5580
          %v6125 = vmul.f32 %v6093, %v5581
          %v6126 = vmul.f32 %v6094, %v5582
          %v6127 = vmul.f32 %v6095, %v5583
          %v6128 = vmul.f32 %v6096, %v5584
          %v6129 = vmul.f32 %v6097, %v5585
          %v6130 = vmul.f32 %v6098, %v5586
          %v6131 = vmul.f32 %v6099, %v5587
          %v6132 = vmul.f32 %v6100, %v5588
          %v6133 = vmul.f32 %v6101, %v5589
          %v6134 = vmul.f32 %v6102, %v5590
          %v6135 = vmul.f32 %v6103, %v5591
          %v6136 = vmul.f32 %v6104, %v5592
          %v6137 = vmul.f32 %v6105, %v5593
          %v6138 = vmul.f32 %v6106, %v5594
          %v6139 = vmul.f32 %v6107, %v5595
          %v6140 = vmul.f32 %v5692, %v6108
          %v6141 = vmul.f32 %v5693, %v6109
          %v6142 = vmul.f32 %v5694, %v6110
          %v6143 = vmul.f32 %v5695, %v6111
          %v6144 = vmul.f32 %v5696, %v6112
          %v6145 = vmul.f32 %v5697, %v6113
          %v6146 = vmul.f32 %v5698, %v6114
          %v6147 = vmul.f32 %v5699, %v6115
          %v6148 = vmul.f32 %v5700, %v6116
          %v6149 = vmul.f32 %v5701, %v6117
          %v6150 = vmul.f32 %v5702, %v6118
          %v6151 = vmul.f32 %v5703, %v6119
          %v6152 = vmul.f32 %v5704, %v6120
          %v6153 = vmul.f32 %v5705, %v6121
          %v6154 = vmul.f32 %v5706, %v6122
          %v6155 = vmul.f32 %v5707, %v6123
          %v6156 = vmul.f32 %v5708, %v6124
          %v6157 = vmul.f32 %v5709, %v6125
          %v6158 = vmul.f32 %v5710, %v6126
          %v6159 = vmul.f32 %v5711, %v6127
          %v6160 = vmul.f32 %v5712, %v6128
          %v6161 = vmul.f32 %v5713, %v6129
          %v6162 = vmul.f32 %v5714, %v6130
          %v6163 = vmul.f32 %v5715, %v6131
          %v6164 = vmul.f32 %v5716, %v6132
          %v6165 = vmul.f32 %v5717, %v6133
          %v6166 = vmul.f32 %v5718, %v6134
          %v6167 = vmul.f32 %v5719, %v6135
          %v6168 = vmul.f32 %v5720, %v6136
          %v6169 = vmul.f32 %v5721, %v6137
          %v6170 = vmul.f32 %v5722, %v6138
          %v6171 = vmul.f32 %v5723, %v6139
          %6204 = vrot.lane.b32.xlu0 %v6140, 1
          %v6205 = vpop.permute.xlu0 %6204
          %6206 = vrot.lane.b32.xlu0 %v6141, 1
          %v6207 = vpop.permute.xlu0 %6206
          %6208 = vrot.lane.b32.xlu0 %v6142, 1
          %v6209 = vpop.permute.xlu0 %6208
          %6210 = vrot.lane.b32.xlu0 %v6143, 1
          %v6211 = vpop.permute.xlu0 %6210
          %6212 = vrot.lane.b32.xlu0 %v6144, 1
          %v6213 = vpop.permute.xlu0 %6212
          %6214 = vrot.lane.b32.xlu0 %v6145, 1
          %v6215 = vpop.permute.xlu0 %6214
          %6216 = vrot.lane.b32.xlu0 %v6146, 1
          %v6217 = vpop.permute.xlu0 %6216
          %6218 = vrot.lane.b32.xlu0 %v6147, 1
          %v6219 = vpop.permute.xlu0 %6218
          %6220 = vrot.lane.b32.xlu0 %v6148, 1
          %v6221 = vpop.permute.xlu0 %6220
          %6222 = vrot.lane.b32.xlu0 %v6149, 1
          %v6223 = vpop.permute.xlu0 %6222
          %6224 = vrot.lane.b32.xlu0 %v6150, 1
          %v6225 = vpop.permute.xlu0 %6224
          %6226 = vrot.lane.b32.xlu0 %v6151, 1
          %v6227 = vpop.permute.xlu0 %6226
          %6228 = vrot.lane.b32.xlu0 %v6152, 1
          %v6229 = vpop.permute.xlu0 %6228
          %6230 = vrot.lane.b32.xlu0 %v6153, 1
          %v6231 = vpop.permute.xlu0 %6230
          %6232 = vrot.lane.b32.xlu0 %v6154, 1
          %v6233 = vpop.permute.xlu0 %6232
          %6234 = vrot.lane.b32.xlu0 %v6155, 1
          %v6235 = vpop.permute.xlu0 %6234
          %6236 = vrot.lane.b32.xlu0 %v6156, 1
          %v6237 = vpop.permute.xlu0 %6236
          %6238 = vrot.lane.b32.xlu0 %v6157, 1
          %v6239 = vpop.permute.xlu0 %6238
          %6240 = vrot.lane.b32.xlu0 %v6158, 1
          %v6241 = vpop.permute.xlu0 %6240
          %6242 = vrot.lane.b32.xlu0 %v6159, 1
          %v6243 = vpop.permute.xlu0 %6242
          %6244 = vrot.lane.b32.xlu0 %v6160, 1
          %v6245 = vpop.permute.xlu0 %6244
          %6246 = vrot.lane.b32.xlu0 %v6161, 1
          %v6247 = vpop.permute.xlu0 %6246
          %6248 = vrot.lane.b32.xlu0 %v6162, 1
          %v6249 = vpop.permute.xlu0 %6248
          %6250 = vrot.lane.b32.xlu0 %v6163, 1
          %v6251 = vpop.permute.xlu0 %6250
          %6252 = vrot.lane.b32.xlu0 %v6164, 1
          %v6253 = vpop.permute.xlu0 %6252
          %6254 = vrot.lane.b32.xlu0 %v6165, 1
          %v6255 = vpop.permute.xlu0 %6254
          %6256 = vrot.lane.b32.xlu0 %v6166, 1
          %v6257 = vpop.permute.xlu0 %6256
          %6258 = vrot.lane.b32.xlu0 %v6167, 1
          %v6259 = vpop.permute.xlu0 %6258
          %6260 = vrot.lane.b32.xlu0 %v6168, 1
          %v6261 = vpop.permute.xlu0 %6260
          %6262 = vrot.lane.b32.xlu0 %v6169, 1
          %v6263 = vpop.permute.xlu0 %6262
          %6264 = vrot.lane.b32.xlu0 %v6170, 1
          %v6265 = vpop.permute.xlu0 %6264
          %6266 = vrot.lane.b32.xlu0 %v6171, 1
          %v6267 = vpop.permute.xlu0 %6266
          %v6300 = vsub.f32 %v5564, %v6205
          %v6301 = vsub.f32 %v5565, %v6207
          %v6302 = vsub.f32 %v5566, %v6209
          %v6303 = vsub.f32 %v5567, %v6211
          %v6304 = vsub.f32 %v5568, %v6213
          %v6305 = vsub.f32 %v5569, %v6215
          %v6306 = vsub.f32 %v5570, %v6217
          %v6307 = vsub.f32 %v5571, %v6219
          %v6308 = vsub.f32 %v5572, %v6221
          %v6309 = vsub.f32 %v5573, %v6223
          %v6310 = vsub.f32 %v5574, %v6225
          %v6311 = vsub.f32 %v5575, %v6227
          %v6312 = vsub.f32 %v5576, %v6229
          %v6313 = vsub.f32 %v5577, %v6231
          %v6314 = vsub.f32 %v5578, %v6233
          %v6315 = vsub.f32 %v5579, %v6235
          %v6316 = vsub.f32 %v5580, %v6237
          %v6317 = vsub.f32 %v5581, %v6239
          %v6318 = vsub.f32 %v5582, %v6241
          %v6319 = vsub.f32 %v5583, %v6243
          %v6320 = vsub.f32 %v5584, %v6245
          %v6321 = vsub.f32 %v5585, %v6247
          %v6322 = vsub.f32 %v5586, %v6249
          %v6323 = vsub.f32 %v5587, %v6251
          %v6324 = vsub.f32 %v5588, %v6253
          %v6325 = vsub.f32 %v5589, %v6255
          %v6326 = vsub.f32 %v5590, %v6257
          %v6327 = vsub.f32 %v5591, %v6259
          %v6328 = vsub.f32 %v5592, %v6261
          %v6329 = vsub.f32 %v5593, %v6263
          %v6330 = vsub.f32 %v5594, %v6265
          %v6331 = vsub.f32 %v5595, %v6267
          %6333 = vset.pattern.permute.xlu0 0
          %6334 = vperm.xlu0 %6333, %v6108
          %v6335 = vpop.permute.xlu0 %6334
          %6338 = vset.pattern.permute.xlu0 0
          %6339 = vperm.xlu0 %6338, %v6109
          %v6340 = vpop.permute.xlu0 %6339
          %6343 = vset.pattern.permute.xlu0 0
          %6344 = vperm.xlu0 %6343, %v6110
          %v6345 = vpop.permute.xlu0 %6344
          %6348 = vset.pattern.permute.xlu0 0
          %6349 = vperm.xlu0 %6348, %v6111
          %v6350 = vpop.permute.xlu0 %6349
          %6353 = vset.pattern.permute.xlu0 0
          %6354 = vperm.xlu0 %6353, %v6112
          %v6355 = vpop.permute.xlu0 %6354
          %6358 = vset.pattern.permute.xlu0 0
          %6359 = vperm.xlu0 %6358, %v6113
          %v6360 = vpop.permute.xlu0 %6359
          %6363 = vset.pattern.permute.xlu0 0
          %6364 = vperm.xlu0 %6363, %v6114
          %v6365 = vpop.permute.xlu0 %6364
          %6368 = vset.pattern.permute.xlu0 0
          %6369 = vperm.xlu0 %6368, %v6115
          %v6370 = vpop.permute.xlu0 %6369
          %6373 = vset.pattern.permute.xlu0 0
          %6374 = vperm.xlu0 %6373, %v6116
          %v6375 = vpop.permute.xlu0 %6374
          %6378 = vset.pattern.permute.xlu0 0
          %6379 = vperm.xlu0 %6378, %v6117
          %v6380 = vpop.permute.xlu0 %6379
          %6383 = vset.pattern.permute.xlu0 0
          %6384 = vperm.xlu0 %6383, %v6118
          %v6385 = vpop.permute.xlu0 %6384
          %6388 = vset.pattern.permute.xlu0 0
          %6389 = vperm.xlu0 %6388, %v6119
          %v6390 = vpop.permute.xlu0 %6389
          %6393 = vset.pattern.permute.xlu0 0
          %6394 = vperm.xlu0 %6393, %v6120
          %v6395 = vpop.permute.xlu0 %6394
          %6398 = vset.pattern.permute.xlu0 0
          %6399 = vperm.xlu0 %6398, %v6121
          %v6400 = vpop.permute.xlu0 %6399
          %6403 = vset.pattern.permute.xlu0 0
          %6404 = vperm.xlu0 %6403, %v6122
          %v6405 = vpop.permute.xlu0 %6404
          %6408 = vset.pattern.permute.xlu0 0
          %6409 = vperm.xlu0 %6408, %v6123
          %v6410 = vpop.permute.xlu0 %6409
          %6413 = vset.pattern.permute.xlu0 0
          %6414 = vperm.xlu0 %6413, %v6124
          %v6415 = vpop.permute.xlu0 %6414
          %6418 = vset.pattern.permute.xlu0 0
          %6419 = vperm.xlu0 %6418, %v6125
          %v6420 = vpop.permute.xlu0 %6419
          %6423 = vset.pattern.permute.xlu0 0
          %6424 = vperm.xlu0 %6423, %v6126
          %v6425 = vpop.permute.xlu0 %6424
          %6428 = vset.pattern.permute.xlu0 0
          %6429 = vperm.xlu0 %6428, %v6127
          %v6430 = vpop.permute.xlu0 %6429
          %6433 = vset.pattern.permute.xlu0 0
          %6434 = vperm.xlu0 %6433, %v6128
          %v6435 = vpop.permute.xlu0 %6434
          %6438 = vset.pattern.permute.xlu0 0
          %6439 = vperm.xlu0 %6438, %v6129
          %v6440 = vpop.permute.xlu0 %6439
          %6443 = vset.pattern.permute.xlu0 0
          %6444 = vperm.xlu0 %6443, %v6130
          %v6445 = vpop.permute.xlu0 %6444
          %6448 = vset.pattern.permute.xlu0 0
          %6449 = vperm.xlu0 %6448, %v6131
          %v6450 = vpop.permute.xlu0 %6449
          %6453 = vset.pattern.permute.xlu0 0
          %6454 = vperm.xlu0 %6453, %v6132
          %v6455 = vpop.permute.xlu0 %6454
          %6458 = vset.pattern.permute.xlu0 0
          %6459 = vperm.xlu0 %6458, %v6133
          %v6460 = vpop.permute.xlu0 %6459
          %6463 = vset.pattern.permute.xlu0 0
          %6464 = vperm.xlu0 %6463, %v6134
          %v6465 = vpop.permute.xlu0 %6464
          %6468 = vset.pattern.permute.xlu0 0
          %6469 = vperm.xlu0 %6468, %v6135
          %v6470 = vpop.permute.xlu0 %6469
          %6473 = vset.pattern.permute.xlu0 0
          %6474 = vperm.xlu0 %6473, %v6136
          %v6475 = vpop.permute.xlu0 %6474
          %6478 = vset.pattern.permute.xlu0 0
          %6479 = vperm.xlu0 %6478, %v6137
          %v6480 = vpop.permute.xlu0 %6479
          %6483 = vset.pattern.permute.xlu0 0
          %6484 = vperm.xlu0 %6483, %v6138
          %v6485 = vpop.permute.xlu0 %6484
          %6488 = vset.pattern.permute.xlu0 0
          %6489 = vperm.xlu0 %6488, %v6139
          %v6490 = vpop.permute.xlu0 %6489
          %v6492 = vmul.f32 %v5500, %v6335
          %v6493 = vmul.f32 %v5501, %v6335
          %v6494 = vmul.f32 %v5502, %v6340
          %v6495 = vmul.f32 %v5503, %v6340
          %v6496 = vmul.f32 %v5504, %v6345
          %v6497 = vmul.f32 %v5505, %v6345
          %v6498 = vmul.f32 %v5506, %v6350
          %v6499 = vmul.f32 %v5507, %v6350
          %v6500 = vmul.f32 %v5508, %v6355
          %v6501 = vmul.f32 %v5509, %v6355
          %v6502 = vmul.f32 %v5510, %v6360
          %v6503 = vmul.f32 %v5511, %v6360
          %v6504 = vmul.f32 %v5512, %v6365
          %v6505 = vmul.f32 %v5513, %v6365
          %v6506 = vmul.f32 %v5514, %v6370
          %v6507 = vmul.f32 %v5515, %v6370
          %v6508 = vmul.f32 %v5516, %v6375
          %v6509 = vmul.f32 %v5517, %v6375
          %v6510 = vmul.f32 %v5518, %v6380
          %v6511 = vmul.f32 %v5519, %v6380
          %v6512 = vmul.f32 %v5520, %v6385
          %v6513 = vmul.f32 %v5521, %v6385
          %v6514 = vmul.f32 %v5522, %v6390
          %v6515 = vmul.f32 %v5523, %v6390
          %v6516 = vmul.f32 %v5524, %v6395
          %v6517 = vmul.f32 %v5525, %v6395
          %v6518 = vmul.f32 %v5526, %v6400
          %v6519 = vmul.f32 %v5527, %v6400
          %v6520 = vmul.f32 %v5528, %v6405
          %v6521 = vmul.f32 %v5529, %v6405
          %v6522 = vmul.f32 %v5530, %v6410
          %v6523 = vmul.f32 %v5531, %v6410
          %v6524 = vmul.f32 %v5532, %v6415
          %v6525 = vmul.f32 %v5533, %v6415
          %v6526 = vmul.f32 %v5534, %v6420
          %v6527 = vmul.f32 %v5535, %v6420
          %v6528 = vmul.f32 %v5536, %v6425
          %v6529 = vmul.f32 %v5537, %v6425
          %v6530 = vmul.f32 %v5538, %v6430
          %v6531 = vmul.f32 %v5539, %v6430
          %v6532 = vmul.f32 %v5540, %v6435
          %v6533 = vmul.f32 %v5541, %v6435
          %v6534 = vmul.f32 %v5542, %v6440
          %v6535 = vmul.f32 %v5543, %v6440
          %v6536 = vmul.f32 %v5544, %v6445
          %v6537 = vmul.f32 %v5545, %v6445
          %v6538 = vmul.f32 %v5546, %v6450
          %v6539 = vmul.f32 %v5547, %v6450
          %v6540 = vmul.f32 %v5548, %v6455
          %v6541 = vmul.f32 %v5549, %v6455
          %v6542 = vmul.f32 %v5550, %v6460
          %v6543 = vmul.f32 %v5551, %v6460
          %v6544 = vmul.f32 %v5552, %v6465
          %v6545 = vmul.f32 %v5553, %v6465
          %v6546 = vmul.f32 %v5554, %v6470
          %v6547 = vmul.f32 %v5555, %v6470
          %v6548 = vmul.f32 %v5556, %v6475
          %v6549 = vmul.f32 %v5557, %v6475
          %v6550 = vmul.f32 %v5558, %v6480
          %v6551 = vmul.f32 %v5559, %v6480
          %v6552 = vmul.f32 %v5560, %v6485
          %v6553 = vmul.f32 %v5561, %v6485
          %v6554 = vmul.f32 %v5562, %v6490
          %v6555 = vmul.f32 %v5563, %v6490
          %6557 = vset.pattern.permute.xlu0 1
          %6558 = vperm.xlu0 %6557, %v6300
          %v6559 = vpop.permute.xlu0 %6558
          %6562 = vset.pattern.permute.xlu0 1
          %6563 = vperm.xlu0 %6562, %v6301
          %v6564 = vpop.permute.xlu0 %6563
          %6567 = vset.pattern.permute.xlu0 1
          %6568 = vperm.xlu0 %6567, %v6302
          %v6569 = vpop.permute.xlu0 %6568
          %6572 = vset.pattern.permute.xlu0 1
          %6573 = vperm.xlu0 %6572, %v6303
          %v6574 = vpop.permute.xlu0 %6573
          %6577 = vset.pattern.permute.xlu0 1
          %6578 = vperm.xlu0 %6577, %v6304
          %v6579 = vpop.permute.xlu0 %6578
          %6582 = vset.pattern.permute.xlu0 1
          %6583 = vperm.xlu0 %6582, %v6305
          %v6584 = vpop.permute.xlu0 %6583
          %6587 = vset.pattern.permute.xlu0 1
          %6588 = vperm.xlu0 %6587, %v6306
          %v6589 = vpop.permute.xlu0 %6588
          %6592 = vset.pattern.permute.xlu0 1
          %6593 = vperm.xlu0 %6592, %v6307
          %v6594 = vpop.permute.xlu0 %6593
          %6597 = vset.pattern.permute.xlu0 1
          %6598 = vperm.xlu0 %6597, %v6308
          %v6599 = vpop.permute.xlu0 %6598
          %6602 = vset.pattern.permute.xlu0 1
          %6603 = vperm.xlu0 %6602, %v6309
          %v6604 = vpop.permute.xlu0 %6603
          %6607 = vset.pattern.permute.xlu0 1
          %6608 = vperm.xlu0 %6607, %v6310
          %v6609 = vpop.permute.xlu0 %6608
          %6612 = vset.pattern.permute.xlu0 1
          %6613 = vperm.xlu0 %6612, %v6311
          %v6614 = vpop.permute.xlu0 %6613
          %6617 = vset.pattern.permute.xlu0 1
          %6618 = vperm.xlu0 %6617, %v6312
          %v6619 = vpop.permute.xlu0 %6618
          %6622 = vset.pattern.permute.xlu0 1
          %6623 = vperm.xlu0 %6622, %v6313
          %v6624 = vpop.permute.xlu0 %6623
          %6627 = vset.pattern.permute.xlu0 1
          %6628 = vperm.xlu0 %6627, %v6314
          %v6629 = vpop.permute.xlu0 %6628
          %6632 = vset.pattern.permute.xlu0 1
          %6633 = vperm.xlu0 %6632, %v6315
          %v6634 = vpop.permute.xlu0 %6633
          %6637 = vset.pattern.permute.xlu0 1
          %6638 = vperm.xlu0 %6637, %v6316
          %v6639 = vpop.permute.xlu0 %6638
          %6642 = vset.pattern.permute.xlu0 1
          %6643 = vperm.xlu0 %6642, %v6317
          %v6644 = vpop.permute.xlu0 %6643
          %6647 = vset.pattern.permute.xlu0 1
          %6648 = vperm.xlu0 %6647, %v6318
          %v6649 = vpop.permute.xlu0 %6648
          %6652 = vset.pattern.permute.xlu0 1
          %6653 = vperm.xlu0 %6652, %v6319
          %v6654 = vpop.permute.xlu0 %6653
          %6657 = vset.pattern.permute.xlu0 1
          %6658 = vperm.xlu0 %6657, %v6320
          %v6659 = vpop.permute.xlu0 %6658
          %6662 = vset.pattern.permute.xlu0 1
          %6663 = vperm.xlu0 %6662, %v6321
          %v6664 = vpop.permute.xlu0 %6663
          %6667 = vset.pattern.permute.xlu0 1
          %6668 = vperm.xlu0 %6667, %v6322
          %v6669 = vpop.permute.xlu0 %6668
          %6672 = vset.pattern.permute.xlu0 1
          %6673 = vperm.xlu0 %6672, %v6323
          %v6674 = vpop.permute.xlu0 %6673
          %6677 = vset.pattern.permute.xlu0 1
          %6678 = vperm.xlu0 %6677, %v6324
          %v6679 = vpop.permute.xlu0 %6678
          %6682 = vset.pattern.permute.xlu0 1
          %6683 = vperm.xlu0 %6682, %v6325
          %v6684 = vpop.permute.xlu0 %6683
          %6687 = vset.pattern.permute.xlu0 1
          %6688 = vperm.xlu0 %6687, %v6326
          %v6689 = vpop.permute.xlu0 %6688
          %6692 = vset.pattern.permute.xlu0 1
          %6693 = vperm.xlu0 %6692, %v6327
          %v6694 = vpop.permute.xlu0 %6693
          %6697 = vset.pattern.permute.xlu0 1
          %6698 = vperm.xlu0 %6697, %v6328
          %v6699 = vpop.permute.xlu0 %6698
          %6702 = vset.pattern.permute.xlu0 1
          %6703 = vperm.xlu0 %6702, %v6329
          %v6704 = vpop.permute.xlu0 %6703
          %6707 = vset.pattern.permute.xlu0 1
          %6708 = vperm.xlu0 %6707, %v6330
          %v6709 = vpop.permute.xlu0 %6708
          %6712 = vset.pattern.permute.xlu0 1
          %6713 = vperm.xlu0 %6712, %v6331
          %v6714 = vpop.permute.xlu0 %6713
          %v6716 = vadd.f32 %v6492, %v6559
          %v6717 = vadd.f32 %v6493, %v6559
          %v6718 = vadd.f32 %v6494, %v6564
          %v6719 = vadd.f32 %v6495, %v6564
          %v6720 = vadd.f32 %v6496, %v6569
          %v6721 = vadd.f32 %v6497, %v6569
          %v6722 = vadd.f32 %v6498, %v6574
          %v6723 = vadd.f32 %v6499, %v6574
          %v6724 = vadd.f32 %v6500, %v6579
          %v6725 = vadd.f32 %v6501, %v6579
          %v6726 = vadd.f32 %v6502, %v6584
          %v6727 = vadd.f32 %v6503, %v6584
          %v6728 = vadd.f32 %v6504, %v6589
          %v6729 = vadd.f32 %v6505, %v6589
          %v6730 = vadd.f32 %v6506, %v6594
          %v6731 = vadd.f32 %v6507, %v6594
          %v6732 = vadd.f32 %v6508, %v6599
          %v6733 = vadd.f32 %v6509, %v6599
          %v6734 = vadd.f32 %v6510, %v6604
          %v6735 = vadd.f32 %v6511, %v6604
          %v6736 = vadd.f32 %v6512, %v6609
          %v6737 = vadd.f32 %v6513, %v6609
          %v6738 = vadd.f32 %v6514, %v6614
          %v6739 = vadd.f32 %v6515, %v6614
          %v6740 = vadd.f32 %v6516, %v6619
          %v6741 = vadd.f32 %v6517, %v6619
          %v6742 = vadd.f32 %v6518, %v6624
          %v6743 = vadd.f32 %v6519, %v6624
          %v6744 = vadd.f32 %v6520, %v6629
          %v6745 = vadd.f32 %v6521, %v6629
          %v6746 = vadd.f32 %v6522, %v6634
          %v6747 = vadd.f32 %v6523, %v6634
          %v6748 = vadd.f32 %v6524, %v6639
          %v6749 = vadd.f32 %v6525, %v6639
          %v6750 = vadd.f32 %v6526, %v6644
          %v6751 = vadd.f32 %v6527, %v6644
          %v6752 = vadd.f32 %v6528, %v6649
          %v6753 = vadd.f32 %v6529, %v6649
          %v6754 = vadd.f32 %v6530, %v6654
          %v6755 = vadd.f32 %v6531, %v6654
          %v6756 = vadd.f32 %v6532, %v6659
          %v6757 = vadd.f32 %v6533, %v6659
          %v6758 = vadd.f32 %v6534, %v6664
          %v6759 = vadd.f32 %v6535, %v6664
          %v6760 = vadd.f32 %v6536, %v6669
          %v6761 = vadd.f32 %v6537, %v6669
          %v6762 = vadd.f32 %v6538, %v6674
          %v6763 = vadd.f32 %v6539, %v6674
          %v6764 = vadd.f32 %v6540, %v6679
          %v6765 = vadd.f32 %v6541, %v6679
          %v6766 = vadd.f32 %v6542, %v6684
          %v6767 = vadd.f32 %v6543, %v6684
          %v6768 = vadd.f32 %v6544, %v6689
          %v6769 = vadd.f32 %v6545, %v6689
          %v6770 = vadd.f32 %v6546, %v6694
          %v6771 = vadd.f32 %v6547, %v6694
          %v6772 = vadd.f32 %v6548, %v6699
          %v6773 = vadd.f32 %v6549, %v6699
          %v6774 = vadd.f32 %v6550, %v6704
          %v6775 = vadd.f32 %v6551, %v6704
          %v6776 = vadd.f32 %v6552, %v6709
          %v6777 = vadd.f32 %v6553, %v6709
          %v6778 = vadd.f32 %v6554, %v6714
          %v6779 = vadd.f32 %v6555, %v6714
          %6780 = vst [vmem:[%s6] sm:$0xff] %v6716
          %6781 = vst [vmem:[%s6 + $0x8] sm:$0xff] %v6717
          %6782 = vst [vmem:[%s6 + $0x10] sm:$0xff] %v6718
          %6783 = vst [vmem:[%s6 + $0x18] sm:$0xff] %v6719
          %6784 = vst [vmem:[%s6 + $0x20] sm:$0xff] %v6720
          %6785 = vst [vmem:[%s6 + $0x28] sm:$0xff] %v6721
          %6786 = vst [vmem:[%s6 + $0x30] sm:$0xff] %v6722
          %6787 = vst [vmem:[%s6 + $0x38] sm:$0xff] %v6723
          %6788 = vst [vmem:[%s6 + $0x40] sm:$0xff] %v6724
          %6789 = vst [vmem:[%s6 + $0x48] sm:$0xff] %v6725
          %6790 = vst [vmem:[%s6 + $0x50] sm:$0xff] %v6726
          %6791 = vst [vmem:[%s6 + $0x58] sm:$0xff] %v6727
          %6792 = vst [vmem:[%s6 + $0x60] sm:$0xff] %v6728
          %6793 = vst [vmem:[%s6 + $0x68] sm:$0xff] %v6729
          %6794 = vst [vmem:[%s6 + $0x70] sm:$0xff] %v6730
          %6795 = vst [vmem:[%s6 + $0x78] sm:$0xff] %v6731
          %6796 = vst [vmem:[%s6 + $0x80] sm:$0xff] %v6732
          %6797 = vst [vmem:[%s6 + $0x88] sm:$0xff] %v6733
          %6798 = vst [vmem:[%s6 + $0x90] sm:$0xff] %v6734
          %6799 = vst [vmem:[%s6 + $0x98] sm:$0xff] %v6735
          %6800 = vst [vmem:[%s6 + $0xa0] sm:$0xff] %v6736
          %6801 = vst [vmem:[%s6 + $0xa8] sm:$0xff] %v6737
          %6802 = vst [vmem:[%s6 + $0xb0] sm:$0xff] %v6738
          %6803 = vst [vmem:[%s6 + $0xb8] sm:$0xff] %v6739
          %6804 = vst [vmem:[%s6 + $0xc0] sm:$0xff] %v6740
          %6805 = vst [vmem:[%s6 + $0xc8] sm:$0xff] %v6741
          %6806 = vst [vmem:[%s6 + $0xd0] sm:$0xff] %v6742
          %6807 = vst [vmem:[%s6 + $0xd8] sm:$0xff] %v6743
          %6808 = vst [vmem:[%s6 + $0xe0] sm:$0xff] %v6744
          %6809 = vst [vmem:[%s6 + $0xe8] sm:$0xff] %v6745
          %6810 = vst [vmem:[%s6 + $0xf0] sm:$0xff] %v6746
          %6811 = vst [vmem:[%s6 + $0xf8] sm:$0xff] %v6747
          %6812 = vst [vmem:[%s6 + $0x100] sm:$0xff] %v6748
          %6813 = vst [vmem:[%s6 + $0x108] sm:$0xff] %v6749
          %6814 = vst [vmem:[%s6 + $0x110] sm:$0xff] %v6750
          %6815 = vst [vmem:[%s6 + $0x118] sm:$0xff] %v6751
          %6816 = vst [vmem:[%s6 + $0x120] sm:$0xff] %v6752
          %6817 = vst [vmem:[%s6 + $0x128] sm:$0xff] %v6753
          %6818 = vst [vmem:[%s6 + $0x130] sm:$0xff] %v6754
          %6819 = vst [vmem:[%s6 + $0x138] sm:$0xff] %v6755
          %6820 = vst [vmem:[%s6 + $0x140] sm:$0xff] %v6756
          %6821 = vst [vmem:[%s6 + $0x148] sm:$0xff] %v6757
          %6822 = vst [vmem:[%s6 + $0x150] sm:$0xff] %v6758
          %6823 = vst [vmem:[%s6 + $0x158] sm:$0xff] %v6759
          %6824 = vst [vmem:[%s6 + $0x160] sm:$0xff] %v6760
          %6825 = vst [vmem:[%s6 + $0x168] sm:$0xff] %v6761
          %6826 = vst [vmem:[%s6 + $0x170] sm:$0xff] %v6762
          %6827 = vst [vmem:[%s6 + $0x178] sm:$0xff] %v6763
          %6828 = vst [vmem:[%s6 + $0x180] sm:$0xff] %v6764
          %6829 = vst [vmem:[%s6 + $0x188] sm:$0xff] %v6765
          %6830 = vst [vmem:[%s6 + $0x190] sm:$0xff] %v6766
          %6831 = vst [vmem:[%s6 + $0x198] sm:$0xff] %v6767
          %6832 = vst [vmem:[%s6 + $0x1a0] sm:$0xff] %v6768
          %6833 = vst [vmem:[%s6 + $0x1a8] sm:$0xff] %v6769
          %6834 = vst [vmem:[%s6 + $0x1b0] sm:$0xff] %v6770
          %6835 = vst [vmem:[%s6 + $0x1b8] sm:$0xff] %v6771
          %6836 = vst [vmem:[%s6 + $0x1c0] sm:$0xff] %v6772
          %6837 = vst [vmem:[%s6 + $0x1c8] sm:$0xff] %v6773
          %6838 = vst [vmem:[%s6 + $0x1d0] sm:$0xff] %v6774
          %6839 = vst [vmem:[%s6 + $0x1d8] sm:$0xff] %v6775
          %6840 = vst [vmem:[%s6 + $0x1e0] sm:$0xff] %v6776
          %6841 = vst [vmem:[%s6 + $0x1e8] sm:$0xff] %v6777
          %6842 = vst [vmem:[%s6 + $0x1f0] sm:$0xff] %v6778
          %6843 = vst [vmem:[%s6 + $0x1f8] sm:$0xff] %v6779
        $region75: #{forward.1} parent=62 // pred_fallthru
          _
        // Predicated region
        $region76: #{forward.1} parent=62 // pred_check
          %p6844 = pneg %p176
        $region77: #{forward.1} parent=62 // pred_check_branch
          %6846 = sbr.rel (%p6844) target = $region79
        $region78: #{forward.1} parent=62 // pred_region
          _
        $region79: #{forward.1} parent=62 // pred_fallthru
          _
        // Predicated region
        $region80: #{forward.1} parent=62 // pred_check
          %p6847 = pneg %p176
        $region81: #{forward.1} parent=62 // pred_check_branch
          %6849 = sbr.rel (%p6847) target = $region83
        $region82: #{forward.1} parent=62 // pred_region
          _
        $region83: #{forward.1} parent=62 // pred_fallthru
          _
      $region63: #{forward.1} parent=5 // pred_fallthru
        _
      %p6850 = scmp.le.s32.totalorder 2, %s12
      // Predicated region
      $region84: #{forward.1} parent=5 // pred_check
        %p6851 = pneg %p6850
      $region85: #{forward.1} parent=5 // pred_check_branch
        %6853 = sbr.rel (%p6851) target = $region87
      $region86: #{forward.1} parent=5 // pred_region
        %s6854 = ssub.s32 %s12, 2
      $region87: #{forward.1} parent=5 // pred_fallthru
        _
    $region6: #{forward.1} parent=1 // loop_footer
      %s16 = sadd.s32 1, %s12
    $region7: #{forward.1} parent=1 // loop_footer_branch
      %11 = sbr.rel target = $region3
    $region8: #{forward.1} parent=1 // loop_exit
      _

</llo_original>
